<compile_context>
chip_gen: v7x
topology: tpu7x:2x2x1
jax: 0.10.0
libtpu: 0.0.40
codegen_flags: <defaults>
</compile_context>

<pallas_src>
import math
import functools

import jax
import jax.numpy as jnp
from jax import lax
from jax.experimental import pallas as pl
from jax.experimental.pallas import tpu as pltpu


# ----------------------------------------------------------------------------
# Fused forward kernel (one grid step == one batch element)
# ----------------------------------------------------------------------------
def ihc_fwd_kernel(tok_ref, emb_ref, pos_ref, wqkv_ref, bqkv_ref, wo_ref,
                   bo_ref, wu_ref, o_ref, *, n_head, n_layers):
    """
    tok_ref  : (1, T, 1)  int32   token ids for this batch element
    emb_ref  : (vocab, C)         embedding table
    pos_ref  : (T, C)             learnable positional embedding (sliced to T)
    wqkv_ref : (L, C, 3C)         fused, pre-transposed Q|K|V weights (in,out)
    bqkv_ref : (L, 1, 3C)         fused Q|K|V biases
    wo_ref   : (L, C, C)          pre-transposed output-projection weights
    bo_ref   : (L, 1, C)          output-projection biases
    wu_ref   : (C, V)             pre-transposed unembed weight (no bias)
    o_ref    : (1, T, V)          logits
    """
    tok = tok_ref[0]                               # (T, 1) int32
    T = tok.shape[0]
    vocab, C = emb_ref.shape
    H = n_head
    D = C // H
    scale = 1.0 / math.sqrt(D)

    # --- embedding gather as an exact one-hot MXU matmul + positional add ---
    vocab_ids = lax.broadcasted_iota(jnp.int32, (T, vocab), 1)
    onehot = jnp.where(vocab_ids == tok, jnp.float32(1.0), jnp.float32(0.0))
    x = jnp.dot(onehot, emb_ref[...],
                preferred_element_type=jnp.float32) + pos_ref[...]   # (T, C)

    # Additive causal mask, finite sentinel (safer than -inf), built once.
    row = lax.broadcasted_iota(jnp.int32, (T, T), 0)
    col = lax.broadcasted_iota(jnp.int32, (T, T), 1)
    mask_bias = jnp.where(col <= row, jnp.float32(0.0), jnp.float32(-1e30))

    for l in range(n_layers):                      # static unroll (L small)
        w_qkv = wqkv_ref[l]                        # (C, 3C)
        b_qkv = bqkv_ref[l]                        # (1, 3C)
        w_o = wo_ref[l]                            # (C, C)

        # Fused QKV projection: one wide MXU pass.
        qkv = jnp.dot(x, w_qkv, preferred_element_type=jnp.float32) + b_qkv
        q = qkv[:, 0:C] * scale                    # fold 1/sqrt(D) into q
        k = qkv[:, C:2 * C]
        v = qkv[:, 2 * C:3 * C]

        # Per-head attention; accumulate through W_O row slices (no concat).
        y = None
        for h in range(H):                         # static unroll (H small)
            qh = q[:, h * D:(h + 1) * D]           # (T, D)
            kh = k[:, h * D:(h + 1) * D]
            vh = v[:, h * D:(h + 1) * D]

            s = lax.dot_general(qh, kh, (((1,), (1,)), ((), ())),
                                preferred_element_type=jnp.float32)  # (T, T)
            s = s + mask_bias
            m = jnp.max(s, axis=-1, keepdims=True)
            p = jnp.exp(s - m)                                       # unnormalized
            denom = jnp.sum(p, axis=-1, keepdims=True)               # (T, 1)

            o_un = jnp.dot(p, vh, preferred_element_type=jnp.float32)  # (T, D)
            # Normalize the small (T,D) output instead of the (T,T) probs.
            o_h = o_un * pl.reciprocal(denom, approx=True)

            # Project this head straight through its W_O rows (sublane-aligned).
            contrib = jnp.dot(o_h, w_o[h * D:(h + 1) * D, :],
                              preferred_element_type=jnp.float32)      # (T, C)
            y = contrib if y is None else y + contrib

        # residual + output bias
        x = x + y + bo_ref[l]

    # Unembed (no bias), fused into the same kernel.
    logits = jnp.dot(x, wu_ref[...], preferred_element_type=jnp.float32)
    o_ref[0] = logits.astype(o_ref.dtype)


# ----------------------------------------------------------------------------
# Wrapper: whole forward is one pallas_call
# ----------------------------------------------------------------------------
def ihc_forward(tokens, params, n_head):
    B, T = tokens.shape
    embed = params["embed"]                                     # (vocab, C)
    pos = params["pos_embed"][0, :T, :]                         # (T, C)
    w_qkv = params["w_qkv_t"]                                   # (L, C, 3C)
    b_qkv = params["b_qkv"]                                     # (L, 1, 3C)
    w_o = params["wo_t"]                                        # (L, C, C)
    b_o = params["bo"]                                          # (L, 1, C)
    w_u = params["unembed_t"]                                   # (C, V)

    vocab, C = embed.shape
    L = w_o.shape[0]
    V = w_u.shape[1]
    tok3 = tokens.astype(jnp.int32).reshape(B, T, 1)

    kern = functools.partial(ihc_fwd_kernel, n_head=n_head, n_layers=L)
    logits = pl.pallas_call(
        kern,
        out_shape=jax.ShapeDtypeStruct((B, T, V), jnp.float32),
        grid=(B,),
        in_specs=[
            pl.BlockSpec((1, T, 1), lambda b: (b, 0, 0)),       # tokens
            pl.BlockSpec((vocab, C), lambda b: (0, 0)),         # embed table
            pl.BlockSpec((T, C), lambda b: (0, 0)),             # pos embed
            pl.BlockSpec((L, C, 3 * C), lambda b: (0, 0, 0)),
            pl.BlockSpec((L, 1, 3 * C), lambda b: (0, 0, 0)),
            pl.BlockSpec((L, C, C), lambda b: (0, 0, 0)),
            pl.BlockSpec((L, 1, C), lambda b: (0, 0, 0)),
            pl.BlockSpec((C, V), lambda b: (0, 0)),
        ],
        out_specs=pl.BlockSpec((1, T, V), lambda b: (b, 0, 0)),
        compiler_params=pltpu.CompilerParams(
            dimension_semantics=("parallel",),     # feeds both v7x TCs
            vmem_limit_bytes=32 * 1024 * 1024,
        ),
    )(tok3, embed, pos, w_qkv, b_qkv, w_o, b_o, w_u)

    loss = jnp.float32(0.0)  # target is None in this synthetic run
    return logits, loss


# ----------------------------------------------------------------------------
# Pure-JAX reference (mirrors the PyTorch module) for validation
# ----------------------------------------------------------------------------
def ihc_forward_ref(tokens, params, n_head):
    B, T = tokens.shape
    x = jnp.take(params["embed"], tokens, axis=0) + params["pos_embed"][:, :T, :]
    L, C, _ = params["wo_t"].shape
    D = C // n_head
    mask = jnp.arange(T)[None, :] <= jnp.arange(T)[:, None]      # (T, T) causal

    for l in range(L):
        qkv = x @ params["w_qkv_t"][l] + params["b_qkv"][l]      # (B, T, 3C)
        q, k, v = qkv[..., :C], qkv[..., C:2 * C], qkv[..., 2 * C:]
        q = q.reshape(B, T, n_head, D).transpose(0, 2, 1, 3)
        k = k.reshape(B, T, n_head, D).transpose(0, 2, 1, 3)
        v = v.reshape(B, T, n_head, D).transpose(0, 2, 1, 3)
        s = jnp.einsum("bhqd,bhkd->bhqk", q, k) / math.sqrt(D)
        s = jnp.where(mask[None, None], s, -jnp.inf)
        a = jax.nn.softmax(s, axis=-1)
        o = jnp.einsum("bhqk,bhkd->bhqd", a, v).transpose(0, 2, 1, 3).reshape(B, T, C)
        x = x + o @ params["wo_t"][l] + params["bo"][l]

    return x @ params["unembed_t"]


# ----------------------------------------------------------------------------
# Deterministic parameter init (mirrors _init_weights: N(0, 0.02) weights,
# zero biases; pos_embed stays ones as in the module).
# ----------------------------------------------------------------------------
def init_params(key, vocab_size, embed_dim, n_layers, block_size):
    std = 0.02
    C = embed_dim
    keys = jax.random.split(key, 2 + 4 * n_layers)

    embed = std * jax.random.normal(keys[0], (vocab_size, C), jnp.float32)
    unembed_t = (std * jax.random.normal(keys[1], (vocab_size, C), jnp.float32)).T

    w_qkv_list, b_qkv_list, wo_list, bo_list = [], [], [], []
    kidx = 2
    for _ in range(n_layers):
        wq = std * jax.random.normal(keys[kidx + 0], (C, C), jnp.float32)
        wk = std * jax.random.normal(keys[kidx + 1], (C, C), jnp.float32)
        wv = std * jax.random.normal(keys[kidx + 2], (C, C), jnp.float32)
        wo = std * jax.random.normal(keys[kidx + 3], (C, C), jnp.float32)
        kidx += 4
        # nn.Linear: y = x @ W.T + b  ->  pre-transpose to (in, out) and fuse QKV.
        w_qkv_list.append(jnp.concatenate([wq.T, wk.T, wv.T], axis=1))  # (C, 3C)
        b_qkv_list.append(jnp.zeros((1, 3 * C), jnp.float32))
        wo_list.append(wo.T)
        bo_list.append(jnp.zeros((1, C), jnp.float32))

    return {
        "embed": embed,
        "pos_embed": jnp.ones((1, block_size, C), jnp.float32),
        "unembed_t": unembed_t,                     # (C, V)
        "w_qkv_t": jnp.stack(w_qkv_list),           # (L, C, 3C)
        "b_qkv": jnp.stack(b_qkv_list),             # (L, 1, 3C)
        "wo_t": jnp.stack(wo_list),                 # (L, C, C)
        "bo": jnp.stack(bo_list),                   # (L, 1, C)
    }


# ----------------------------------------------------------------------------
if __name__ == "__main__":
    B, T = 2, 8
    embed_dim, n_head = 32, 4
    vocab_size, n_layers, block_size = 16, 2, 16

    key = jax.random.PRNGKey(0)
    k_tok, k_par = jax.random.split(key)
    tokens = jax.random.randint(k_tok, (B, T), 0, vocab_size, dtype=jnp.int32)
    params = init_params(k_par, vocab_size, embed_dim, n_layers, block_size)

    logits, loss = ihc_forward(tokens, params, n_head)
    logits = jax.block_until_ready(logits)

    assert logits.shape == (B, T, vocab_size)
    assert bool(jnp.all(jnp.isfinite(logits)))

    # Validate against the plain-JAX reference (high-precision matmuls).
    with jax.default_matmul_precision("highest"):
        ref = jax.block_until_ready(ihc_forward_ref(tokens, params, n_head))
    max_err = float(jnp.max(jnp.abs(logits - ref)))
    assert max_err < 1e-2, f"max abs error vs reference: {max_err}"

    print("KERNEL_OK")
</pallas_src>

<mosaic_0001>
module attributes {stable_mosaic.version = 11 : i64} {
  func.func @ihc_fwd_kernel(%arg0: i32, %arg1: memref<1x8x1xi32, #tpu.memory_space<vmem>>, %arg2: memref<16x32xf32, #tpu.memory_space<vmem>>, %arg3: memref<8x32xf32, #tpu.memory_space<vmem>>, %arg4: memref<2x32x96xf32, #tpu.memory_space<vmem>>, %arg5: memref<2x1x96xf32, #tpu.memory_space<vmem>>, %arg6: memref<2x32x32xf32, #tpu.memory_space<vmem>>, %arg7: memref<2x1x32xf32, #tpu.memory_space<vmem>>, %arg8: memref<32x16xf32, #tpu.memory_space<vmem>>, %arg9: memref<1x8x16xf32, #tpu.memory_space<vmem>>) attributes {dimension_semantics = [#tpu.dimension_semantics<parallel>], iteration_bounds = array<i64: 2>, scalar_prefetch = 0 : i64, scratch_operands = 0 : i64, tpu.core_type = #tpu.core_type<tc>, window_params = [{transform_indices = @transform_0, window_bounds = array<i64: 1, 8, 1>}, {pipeline_mode = #tpu.pipeline_mode<synchronous>, transform_indices = @transform_1, window_bounds = array<i64: 16, 32>}, {pipeline_mode = #tpu.pipeline_mode<synchronous>, transform_indices = @transform_2, window_bounds = array<i64: 8, 32>}, {pipeline_mode = #tpu.pipeline_mode<synchronous>, transform_indices = @transform_3, window_bounds = array<i64: 2, 32, 96>}, {pipeline_mode = #tpu.pipeline_mode<synchronous>, transform_indices = @transform_4, window_bounds = array<i64: 2, 1, 96>}, {pipeline_mode = #tpu.pipeline_mode<synchronous>, transform_indices = @transform_5, window_bounds = array<i64: 2, 32, 32>}, {pipeline_mode = #tpu.pipeline_mode<synchronous>, transform_indices = @transform_6, window_bounds = array<i64: 2, 1, 32>}, {pipeline_mode = #tpu.pipeline_mode<synchronous>, transform_indices = @transform_7, window_bounds = array<i64: 32, 16>}, {transform_indices = @transform_8, window_bounds = array<i64: 1, 8, 16>}]} {
    %c0 = arith.constant 0 : index
    %c0_0 = arith.constant 0 : index
    %c0_1 = arith.constant 0 : index
    %0 = vector.load %arg1[%c0, %c0_0, %c0_1] : memref<1x8x1xi32, #tpu.memory_space<vmem>>, vector<1x8x1xi32>
    %1 = vector.shape_cast %0 : vector<1x8x1xi32> to vector<8x1xi32>
    %2 = tpu.iota {dimensions = array<i32: 1>} : vector<8x16xi32>
    %3 = vector.broadcast %1 : vector<8x1xi32> to vector<8x16xi32>
    %4 = arith.cmpi eq, %2, %3 : vector<8x16xi32>
    %cst = arith.constant 1.000000e+00 : f32
    %cst_2 = arith.constant 0.000000e+00 : f32
    %5 = vector.broadcast %cst : f32 to vector<8x16xf32>
    %6 = vector.broadcast %cst_2 : f32 to vector<8x16xf32>
    %7 = arith.select %4, %5, %6 : vector<8x16xi1>, vector<8x16xf32>
    %c0_3 = arith.constant 0 : index
    %c0_4 = arith.constant 0 : index
    %8 = vector.load %arg2[%c0_3, %c0_4] : memref<16x32xf32, #tpu.memory_space<vmem>>, vector<16x32xf32>
    %cst_5 = arith.constant dense<0.000000e+00> : vector<8x32xf32>
    %9 = tpu.matmul %7, %8, %cst_5 {dimension_numbers = #tpu.dot_dimension_numbers<[1], [0], [0], [1], [0, 0, 1, 1], [], []>} : vector<8x16xf32>, vector<16x32xf32>, vector<8x32xf32> -> vector<8x32xf32>
    %c0_6 = arith.constant 0 : index
    %c0_7 = arith.constant 0 : index
    %10 = vector.load %arg3[%c0_6, %c0_7] : memref<8x32xf32, #tpu.memory_space<vmem>>, vector<8x32xf32>
    %11 = arith.addf %9, %10 : vector<8x32xf32>
    %12 = tpu.iota {dimensions = array<i32: 0>} : vector<8x8xi32>
    %13 = tpu.iota {dimensions = array<i32: 1>} : vector<8x8xi32>
    %14 = arith.cmpi sle, %13, %12 : vector<8x8xi32>
    %cst_8 = arith.constant 0.000000e+00 : f32
    %cst_9 = arith.constant -1.000000e+30 : f32
    %15 = vector.broadcast %cst_8 : f32 to vector<8x8xf32>
    %16 = vector.broadcast %cst_9 : f32 to vector<8x8xf32>
    %17 = arith.select %14, %15, %16 : vector<8x8xi1>, vector<8x8xf32>
    %c0_10 = arith.constant 0 : index
    %c0_11 = arith.constant 0 : index
    %c0_12 = arith.constant 0 : index
    %18 = vector.load %arg4[%c0_10, %c0_11, %c0_12] : memref<2x32x96xf32, #tpu.memory_space<vmem>>, vector<1x32x96xf32>
    %19 = vector.shape_cast %18 : vector<1x32x96xf32> to vector<32x96xf32>
    %c0_13 = arith.constant 0 : index
    %c0_14 = arith.constant 0 : index
    %c0_15 = arith.constant 0 : index
    %20 = vector.load %arg5[%c0_13, %c0_14, %c0_15] : memref<2x1x96xf32, #tpu.memory_space<vmem>>, vector<1x1x96xf32>
    %21 = vector.shape_cast %20 : vector<1x1x96xf32> to vector<1x96xf32>
    %c0_16 = arith.constant 0 : index
    %c0_17 = arith.constant 0 : index
    %c0_18 = arith.constant 0 : index
    %22 = vector.load %arg6[%c0_16, %c0_17, %c0_18] : memref<2x32x32xf32, #tpu.memory_space<vmem>>, vector<1x32x32xf32>
    %23 = vector.shape_cast %22 : vector<1x32x32xf32> to vector<32x32xf32>
    %cst_19 = arith.constant dense<0.000000e+00> : vector<8x96xf32>
    %24 = tpu.matmul %11, %19, %cst_19 {dimension_numbers = #tpu.dot_dimension_numbers<[1], [0], [0], [1], [0, 0, 1, 1], [], []>} : vector<8x32xf32>, vector<32x96xf32>, vector<8x96xf32> -> vector<8x96xf32>
    %25 = vector.broadcast %21 : vector<1x96xf32> to vector<8x96xf32>
    %26 = arith.addf %24, %25 : vector<8x96xf32>
    %27 = vector.extract_strided_slice %26 {offsets = [0, 0], sizes = [8, 32], strides = [1, 1]} : vector<8x96xf32> to vector<8x32xf32>
    %cst_20 = arith.constant 0.353553385 : f32
    %28 = vector.broadcast %cst_20 : f32 to vector<8x32xf32>
    %29 = arith.mulf %27, %28 : vector<8x32xf32>
    %30 = vector.extract_strided_slice %26 {offsets = [0, 32], sizes = [8, 32], strides = [1, 1]} : vector<8x96xf32> to vector<8x32xf32>
    %31 = vector.extract_strided_slice %26 {offsets = [0, 64], sizes = [8, 32], strides = [1, 1]} : vector<8x96xf32> to vector<8x32xf32>
    %32 = vector.extract_strided_slice %29 {offsets = [0, 0], sizes = [8, 8], strides = [1, 1]} : vector<8x32xf32> to vector<8x8xf32>
    %33 = vector.extract_strided_slice %30 {offsets = [0, 0], sizes = [8, 8], strides = [1, 1]} : vector<8x32xf32> to vector<8x8xf32>
    %34 = vector.extract_strided_slice %31 {offsets = [0, 0], sizes = [8, 8], strides = [1, 1]} : vector<8x32xf32> to vector<8x8xf32>
    %cst_21 = arith.constant dense<0.000000e+00> : vector<8x8xf32>
    %35 = tpu.matmul %32, %33, %cst_21 {dimension_numbers = #tpu.dot_dimension_numbers<[1], [1], [0], [0], [0, 0, 1, 0], [], []>} : vector<8x8xf32>, vector<8x8xf32>, vector<8x8xf32> -> vector<8x8xf32>
    %36 = arith.addf %35, %17 : vector<8x8xf32>
    %cst_22 = arith.constant dense<0xFF800000> : vector<8xf32>
    %37 = vector.multi_reduction <maximumf>, %36, %cst_22 [1] : vector<8x8xf32> to vector<8xf32>
    %38 = vector.shape_cast %37 : vector<8xf32> to vector<8x1xf32>
    %39 = vector.broadcast %38 : vector<8x1xf32> to vector<8x8xf32>
    %40 = arith.subf %36, %39 : vector<8x8xf32>
    %41 = math.exp %40 : vector<8x8xf32>
    %cst_23 = arith.constant dense<0.000000e+00> : vector<8xf32>
    %42 = vector.multi_reduction <add>, %41, %cst_23 [1] : vector<8x8xf32> to vector<8xf32>
    %43 = vector.shape_cast %42 : vector<8xf32> to vector<8x1xf32>
    %cst_24 = arith.constant dense<0.000000e+00> : vector<8x8xf32>
    %44 = tpu.matmul %41, %34, %cst_24 {dimension_numbers = #tpu.dot_dimension_numbers<[1], [0], [0], [1], [0, 0, 1, 1], [], []>} : vector<8x8xf32>, vector<8x8xf32>, vector<8x8xf32> -> vector<8x8xf32>
    %45 = tpu.reciprocal %43 {approx = true} : vector<8x1xf32> -> vector<8x1xf32>
    %46 = vector.broadcast %45 : vector<8x1xf32> to vector<8x8xf32>
    %47 = arith.mulf %44, %46 : vector<8x8xf32>
    %48 = vector.extract_strided_slice %23 {offsets = [0, 0], sizes = [8, 32], strides = [1, 1]} : vector<32x32xf32> to vector<8x32xf32>
    %cst_25 = arith.constant dense<0.000000e+00> : vector<8x32xf32>
    %49 = tpu.matmul %47, %48, %cst_25 {dimension_numbers = #tpu.dot_dimension_numbers<[1], [0], [0], [1], [0, 0, 1, 1], [], []>} : vector<8x8xf32>, vector<8x32xf32>, vector<8x32xf32> -> vector<8x32xf32>
    %50 = vector.extract_strided_slice %29 {offsets = [0, 8], sizes = [8, 8], strides = [1, 1]} : vector<8x32xf32> to vector<8x8xf32>
    %51 = vector.extract_strided_slice %30 {offsets = [0, 8], sizes = [8, 8], strides = [1, 1]} : vector<8x32xf32> to vector<8x8xf32>
    %52 = vector.extract_strided_slice %31 {offsets = [0, 8], sizes = [8, 8], strides = [1, 1]} : vector<8x32xf32> to vector<8x8xf32>
    %cst_26 = arith.constant dense<0.000000e+00> : vector<8x8xf32>
    %53 = tpu.matmul %50, %51, %cst_26 {dimension_numbers = #tpu.dot_dimension_numbers<[1], [1], [0], [0], [0, 0, 1, 0], [], []>} : vector<8x8xf32>, vector<8x8xf32>, vector<8x8xf32> -> vector<8x8xf32>
    %54 = arith.addf %53, %17 : vector<8x8xf32>
    %cst_27 = arith.constant dense<0xFF800000> : vector<8xf32>
    %55 = vector.multi_reduction <maximumf>, %54, %cst_27 [1] : vector<8x8xf32> to vector<8xf32>
    %56 = vector.shape_cast %55 : vector<8xf32> to vector<8x1xf32>
    %57 = vector.broadcast %56 : vector<8x1xf32> to vector<8x8xf32>
    %58 = arith.subf %54, %57 : vector<8x8xf32>
    %59 = math.exp %58 : vector<8x8xf32>
    %cst_28 = arith.constant dense<0.000000e+00> : vector<8xf32>
    %60 = vector.multi_reduction <add>, %59, %cst_28 [1] : vector<8x8xf32> to vector<8xf32>
    %61 = vector.shape_cast %60 : vector<8xf32> to vector<8x1xf32>
    %cst_29 = arith.constant dense<0.000000e+00> : vector<8x8xf32>
    %62 = tpu.matmul %59, %52, %cst_29 {dimension_numbers = #tpu.dot_dimension_numbers<[1], [0], [0], [1], [0, 0, 1, 1], [], []>} : vector<8x8xf32>, vector<8x8xf32>, vector<8x8xf32> -> vector<8x8xf32>
    %63 = tpu.reciprocal %61 {approx = true} : vector<8x1xf32> -> vector<8x1xf32>
    %64 = vector.broadcast %63 : vector<8x1xf32> to vector<8x8xf32>
    %65 = arith.mulf %62, %64 : vector<8x8xf32>
    %66 = vector.extract_strided_slice %23 {offsets = [8, 0], sizes = [8, 32], strides = [1, 1]} : vector<32x32xf32> to vector<8x32xf32>
    %cst_30 = arith.constant dense<0.000000e+00> : vector<8x32xf32>
    %67 = tpu.matmul %65, %66, %cst_30 {dimension_numbers = #tpu.dot_dimension_numbers<[1], [0], [0], [1], [0, 0, 1, 1], [], []>} : vector<8x8xf32>, vector<8x32xf32>, vector<8x32xf32> -> vector<8x32xf32>
    %68 = arith.addf %49, %67 : vector<8x32xf32>
    %69 = vector.extract_strided_slice %29 {offsets = [0, 16], sizes = [8, 8], strides = [1, 1]} : vector<8x32xf32> to vector<8x8xf32>
    %70 = vector.extract_strided_slice %30 {offsets = [0, 16], sizes = [8, 8], strides = [1, 1]} : vector<8x32xf32> to vector<8x8xf32>
    %71 = vector.extract_strided_slice %31 {offsets = [0, 16], sizes = [8, 8], strides = [1, 1]} : vector<8x32xf32> to vector<8x8xf32>
    %cst_31 = arith.constant dense<0.000000e+00> : vector<8x8xf32>
    %72 = tpu.matmul %69, %70, %cst_31 {dimension_numbers = #tpu.dot_dimension_numbers<[1], [1], [0], [0], [0, 0, 1, 0], [], []>} : vector<8x8xf32>, vector<8x8xf32>, vector<8x8xf32> -> vector<8x8xf32>
    %73 = arith.addf %72, %17 : vector<8x8xf32>
    %cst_32 = arith.constant dense<0xFF800000> : vector<8xf32>
    %74 = vector.multi_reduction <maximumf>, %73, %cst_32 [1] : vector<8x8xf32> to vector<8xf32>
    %75 = vector.shape_cast %74 : vector<8xf32> to vector<8x1xf32>
    %76 = vector.broadcast %75 : vector<8x1xf32> to vector<8x8xf32>
    %77 = arith.subf %73, %76 : vector<8x8xf32>
    %78 = math.exp %77 : vector<8x8xf32>
    %cst_33 = arith.constant dense<0.000000e+00> : vector<8xf32>
    %79 = vector.multi_reduction <add>, %78, %cst_33 [1] : vector<8x8xf32> to vector<8xf32>
    %80 = vector.shape_cast %79 : vector<8xf32> to vector<8x1xf32>
    %cst_34 = arith.constant dense<0.000000e+00> : vector<8x8xf32>
    %81 = tpu.matmul %78, %71, %cst_34 {dimension_numbers = #tpu.dot_dimension_numbers<[1], [0], [0], [1], [0, 0, 1, 1], [], []>} : vector<8x8xf32>, vector<8x8xf32>, vector<8x8xf32> -> vector<8x8xf32>
    %82 = tpu.reciprocal %80 {approx = true} : vector<8x1xf32> -> vector<8x1xf32>
    %83 = vector.broadcast %82 : vector<8x1xf32> to vector<8x8xf32>
    %84 = arith.mulf %81, %83 : vector<8x8xf32>
    %85 = vector.extract_strided_slice %23 {offsets = [16, 0], sizes = [8, 32], strides = [1, 1]} : vector<32x32xf32> to vector<8x32xf32>
    %cst_35 = arith.constant dense<0.000000e+00> : vector<8x32xf32>
    %86 = tpu.matmul %84, %85, %cst_35 {dimension_numbers = #tpu.dot_dimension_numbers<[1], [0], [0], [1], [0, 0, 1, 1], [], []>} : vector<8x8xf32>, vector<8x32xf32>, vector<8x32xf32> -> vector<8x32xf32>
    %87 = arith.addf %68, %86 : vector<8x32xf32>
    %88 = vector.extract_strided_slice %29 {offsets = [0, 24], sizes = [8, 8], strides = [1, 1]} : vector<8x32xf32> to vector<8x8xf32>
    %89 = vector.extract_strided_slice %30 {offsets = [0, 24], sizes = [8, 8], strides = [1, 1]} : vector<8x32xf32> to vector<8x8xf32>
    %90 = vector.extract_strided_slice %31 {offsets = [0, 24], sizes = [8, 8], strides = [1, 1]} : vector<8x32xf32> to vector<8x8xf32>
    %cst_36 = arith.constant dense<0.000000e+00> : vector<8x8xf32>
    %91 = tpu.matmul %88, %89, %cst_36 {dimension_numbers = #tpu.dot_dimension_numbers<[1], [1], [0], [0], [0, 0, 1, 0], [], []>} : vector<8x8xf32>, vector<8x8xf32>, vector<8x8xf32> -> vector<8x8xf32>
    %92 = arith.addf %91, %17 : vector<8x8xf32>
    %cst_37 = arith.constant dense<0xFF800000> : vector<8xf32>
    %93 = vector.multi_reduction <maximumf>, %92, %cst_37 [1] : vector<8x8xf32> to vector<8xf32>
    %94 = vector.shape_cast %93 : vector<8xf32> to vector<8x1xf32>
    %95 = vector.broadcast %94 : vector<8x1xf32> to vector<8x8xf32>
    %96 = arith.subf %92, %95 : vector<8x8xf32>
    %97 = math.exp %96 : vector<8x8xf32>
    %cst_38 = arith.constant dense<0.000000e+00> : vector<8xf32>
    %98 = vector.multi_reduction <add>, %97, %cst_38 [1] : vector<8x8xf32> to vector<8xf32>
    %99 = vector.shape_cast %98 : vector<8xf32> to vector<8x1xf32>
    %cst_39 = arith.constant dense<0.000000e+00> : vector<8x8xf32>
    %100 = tpu.matmul %97, %90, %cst_39 {dimension_numbers = #tpu.dot_dimension_numbers<[1], [0], [0], [1], [0, 0, 1, 1], [], []>} : vector<8x8xf32>, vector<8x8xf32>, vector<8x8xf32> -> vector<8x8xf32>
    %101 = tpu.reciprocal %99 {approx = true} : vector<8x1xf32> -> vector<8x1xf32>
    %102 = vector.broadcast %101 : vector<8x1xf32> to vector<8x8xf32>
    %103 = arith.mulf %100, %102 : vector<8x8xf32>
    %104 = vector.extract_strided_slice %23 {offsets = [24, 0], sizes = [8, 32], strides = [1, 1]} : vector<32x32xf32> to vector<8x32xf32>
    %cst_40 = arith.constant dense<0.000000e+00> : vector<8x32xf32>
    %105 = tpu.matmul %103, %104, %cst_40 {dimension_numbers = #tpu.dot_dimension_numbers<[1], [0], [0], [1], [0, 0, 1, 1], [], []>} : vector<8x8xf32>, vector<8x32xf32>, vector<8x32xf32> -> vector<8x32xf32>
    %106 = arith.addf %87, %105 : vector<8x32xf32>
    %107 = arith.addf %11, %106 : vector<8x32xf32>
    %c0_41 = arith.constant 0 : index
    %c0_42 = arith.constant 0 : index
    %c0_43 = arith.constant 0 : index
    %108 = vector.load %arg7[%c0_41, %c0_42, %c0_43] : memref<2x1x32xf32, #tpu.memory_space<vmem>>, vector<1x1x32xf32>
    %109 = vector.shape_cast %108 : vector<1x1x32xf32> to vector<1x32xf32>
    %110 = vector.broadcast %109 : vector<1x32xf32> to vector<8x32xf32>
    %111 = arith.addf %107, %110 : vector<8x32xf32>
    %c1 = arith.constant 1 : index
    %c0_44 = arith.constant 0 : index
    %c0_45 = arith.constant 0 : index
    %112 = vector.load %arg4[%c1, %c0_44, %c0_45] : memref<2x32x96xf32, #tpu.memory_space<vmem>>, vector<1x32x96xf32>
    %113 = vector.shape_cast %112 : vector<1x32x96xf32> to vector<32x96xf32>
    %c1_46 = arith.constant 1 : index
    %c0_47 = arith.constant 0 : index
    %c0_48 = arith.constant 0 : index
    %114 = vector.load %arg5[%c1_46, %c0_47, %c0_48] : memref<2x1x96xf32, #tpu.memory_space<vmem>>, vector<1x1x96xf32>
    %115 = vector.shape_cast %114 : vector<1x1x96xf32> to vector<1x96xf32>
    %c1_49 = arith.constant 1 : index
    %c0_50 = arith.constant 0 : index
    %c0_51 = arith.constant 0 : index
    %116 = vector.load %arg6[%c1_49, %c0_50, %c0_51] : memref<2x32x32xf32, #tpu.memory_space<vmem>>, vector<1x32x32xf32>
    %117 = vector.shape_cast %116 : vector<1x32x32xf32> to vector<32x32xf32>
    %cst_52 = arith.constant dense<0.000000e+00> : vector<8x96xf32>
    %118 = tpu.matmul %111, %113, %cst_52 {dimension_numbers = #tpu.dot_dimension_numbers<[1], [0], [0], [1], [0, 0, 1, 1], [], []>} : vector<8x32xf32>, vector<32x96xf32>, vector<8x96xf32> -> vector<8x96xf32>
    %119 = vector.broadcast %115 : vector<1x96xf32> to vector<8x96xf32>
    %120 = arith.addf %118, %119 : vector<8x96xf32>
    %121 = vector.extract_strided_slice %120 {offsets = [0, 0], sizes = [8, 32], strides = [1, 1]} : vector<8x96xf32> to vector<8x32xf32>
    %cst_53 = arith.constant 0.353553385 : f32
    %122 = vector.broadcast %cst_53 : f32 to vector<8x32xf32>
    %123 = arith.mulf %121, %122 : vector<8x32xf32>
    %124 = vector.extract_strided_slice %120 {offsets = [0, 32], sizes = [8, 32], strides = [1, 1]} : vector<8x96xf32> to vector<8x32xf32>
    %125 = vector.extract_strided_slice %120 {offsets = [0, 64], sizes = [8, 32], strides = [1, 1]} : vector<8x96xf32> to vector<8x32xf32>
    %126 = vector.extract_strided_slice %123 {offsets = [0, 0], sizes = [8, 8], strides = [1, 1]} : vector<8x32xf32> to vector<8x8xf32>
    %127 = vector.extract_strided_slice %124 {offsets = [0, 0], sizes = [8, 8], strides = [1, 1]} : vector<8x32xf32> to vector<8x8xf32>
    %128 = vector.extract_strided_slice %125 {offsets = [0, 0], sizes = [8, 8], strides = [1, 1]} : vector<8x32xf32> to vector<8x8xf32>
    %cst_54 = arith.constant dense<0.000000e+00> : vector<8x8xf32>
    %129 = tpu.matmul %126, %127, %cst_54 {dimension_numbers = #tpu.dot_dimension_numbers<[1], [1], [0], [0], [0, 0, 1, 0], [], []>} : vector<8x8xf32>, vector<8x8xf32>, vector<8x8xf32> -> vector<8x8xf32>
    %130 = arith.addf %129, %17 : vector<8x8xf32>
    %cst_55 = arith.constant dense<0xFF800000> : vector<8xf32>
    %131 = vector.multi_reduction <maximumf>, %130, %cst_55 [1] : vector<8x8xf32> to vector<8xf32>
    %132 = vector.shape_cast %131 : vector<8xf32> to vector<8x1xf32>
    %133 = vector.broadcast %132 : vector<8x1xf32> to vector<8x8xf32>
    %134 = arith.subf %130, %133 : vector<8x8xf32>
    %135 = math.exp %134 : vector<8x8xf32>
    %cst_56 = arith.constant dense<0.000000e+00> : vector<8xf32>
    %136 = vector.multi_reduction <add>, %135, %cst_56 [1] : vector<8x8xf32> to vector<8xf32>
    %137 = vector.shape_cast %136 : vector<8xf32> to vector<8x1xf32>
    %cst_57 = arith.constant dense<0.000000e+00> : vector<8x8xf32>
    %138 = tpu.matmul %135, %128, %cst_57 {dimension_numbers = #tpu.dot_dimension_numbers<[1], [0], [0], [1], [0, 0, 1, 1], [], []>} : vector<8x8xf32>, vector<8x8xf32>, vector<8x8xf32> -> vector<8x8xf32>
    %139 = tpu.reciprocal %137 {approx = true} : vector<8x1xf32> -> vector<8x1xf32>
    %140 = vector.broadcast %139 : vector<8x1xf32> to vector<8x8xf32>
    %141 = arith.mulf %138, %140 : vector<8x8xf32>
    %142 = vector.extract_strided_slice %117 {offsets = [0, 0], sizes = [8, 32], strides = [1, 1]} : vector<32x32xf32> to vector<8x32xf32>
    %cst_58 = arith.constant dense<0.000000e+00> : vector<8x32xf32>
    %143 = tpu.matmul %141, %142, %cst_58 {dimension_numbers = #tpu.dot_dimension_numbers<[1], [0], [0], [1], [0, 0, 1, 1], [], []>} : vector<8x8xf32>, vector<8x32xf32>, vector<8x32xf32> -> vector<8x32xf32>
    %144 = vector.extract_strided_slice %123 {offsets = [0, 8], sizes = [8, 8], strides = [1, 1]} : vector<8x32xf32> to vector<8x8xf32>
    %145 = vector.extract_strided_slice %124 {offsets = [0, 8], sizes = [8, 8], strides = [1, 1]} : vector<8x32xf32> to vector<8x8xf32>
    %146 = vector.extract_strided_slice %125 {offsets = [0, 8], sizes = [8, 8], strides = [1, 1]} : vector<8x32xf32> to vector<8x8xf32>
    %cst_59 = arith.constant dense<0.000000e+00> : vector<8x8xf32>
    %147 = tpu.matmul %144, %145, %cst_59 {dimension_numbers = #tpu.dot_dimension_numbers<[1], [1], [0], [0], [0, 0, 1, 0], [], []>} : vector<8x8xf32>, vector<8x8xf32>, vector<8x8xf32> -> vector<8x8xf32>
    %148 = arith.addf %147, %17 : vector<8x8xf32>
    %cst_60 = arith.constant dense<0xFF800000> : vector<8xf32>
    %149 = vector.multi_reduction <maximumf>, %148, %cst_60 [1] : vector<8x8xf32> to vector<8xf32>
    %150 = vector.shape_cast %149 : vector<8xf32> to vector<8x1xf32>
    %151 = vector.broadcast %150 : vector<8x1xf32> to vector<8x8xf32>
    %152 = arith.subf %148, %151 : vector<8x8xf32>
    %153 = math.exp %152 : vector<8x8xf32>
    %cst_61 = arith.constant dense<0.000000e+00> : vector<8xf32>
    %154 = vector.multi_reduction <add>, %153, %cst_61 [1] : vector<8x8xf32> to vector<8xf32>
    %155 = vector.shape_cast %154 : vector<8xf32> to vector<8x1xf32>
    %cst_62 = arith.constant dense<0.000000e+00> : vector<8x8xf32>
    %156 = tpu.matmul %153, %146, %cst_62 {dimension_numbers = #tpu.dot_dimension_numbers<[1], [0], [0], [1], [0, 0, 1, 1], [], []>} : vector<8x8xf32>, vector<8x8xf32>, vector<8x8xf32> -> vector<8x8xf32>
    %157 = tpu.reciprocal %155 {approx = true} : vector<8x1xf32> -> vector<8x1xf32>
    %158 = vector.broadcast %157 : vector<8x1xf32> to vector<8x8xf32>
    %159 = arith.mulf %156, %158 : vector<8x8xf32>
    %160 = vector.extract_strided_slice %117 {offsets = [8, 0], sizes = [8, 32], strides = [1, 1]} : vector<32x32xf32> to vector<8x32xf32>
    %cst_63 = arith.constant dense<0.000000e+00> : vector<8x32xf32>
    %161 = tpu.matmul %159, %160, %cst_63 {dimension_numbers = #tpu.dot_dimension_numbers<[1], [0], [0], [1], [0, 0, 1, 1], [], []>} : vector<8x8xf32>, vector<8x32xf32>, vector<8x32xf32> -> vector<8x32xf32>
    %162 = arith.addf %143, %161 : vector<8x32xf32>
    %163 = vector.extract_strided_slice %123 {offsets = [0, 16], sizes = [8, 8], strides = [1, 1]} : vector<8x32xf32> to vector<8x8xf32>
    %164 = vector.extract_strided_slice %124 {offsets = [0, 16], sizes = [8, 8], strides = [1, 1]} : vector<8x32xf32> to vector<8x8xf32>
    %165 = vector.extract_strided_slice %125 {offsets = [0, 16], sizes = [8, 8], strides = [1, 1]} : vector<8x32xf32> to vector<8x8xf32>
    %cst_64 = arith.constant dense<0.000000e+00> : vector<8x8xf32>
    %166 = tpu.matmul %163, %164, %cst_64 {dimension_numbers = #tpu.dot_dimension_numbers<[1], [1], [0], [0], [0, 0, 1, 0], [], []>} : vector<8x8xf32>, vector<8x8xf32>, vector<8x8xf32> -> vector<8x8xf32>
    %167 = arith.addf %166, %17 : vector<8x8xf32>
    %cst_65 = arith.constant dense<0xFF800000> : vector<8xf32>
    %168 = vector.multi_reduction <maximumf>, %167, %cst_65 [1] : vector<8x8xf32> to vector<8xf32>
    %169 = vector.shape_cast %168 : vector<8xf32> to vector<8x1xf32>
    %170 = vector.broadcast %169 : vector<8x1xf32> to vector<8x8xf32>
    %171 = arith.subf %167, %170 : vector<8x8xf32>
    %172 = math.exp %171 : vector<8x8xf32>
    %cst_66 = arith.constant dense<0.000000e+00> : vector<8xf32>
    %173 = vector.multi_reduction <add>, %172, %cst_66 [1] : vector<8x8xf32> to vector<8xf32>
    %174 = vector.shape_cast %173 : vector<8xf32> to vector<8x1xf32>
    %cst_67 = arith.constant dense<0.000000e+00> : vector<8x8xf32>
    %175 = tpu.matmul %172, %165, %cst_67 {dimension_numbers = #tpu.dot_dimension_numbers<[1], [0], [0], [1], [0, 0, 1, 1], [], []>} : vector<8x8xf32>, vector<8x8xf32>, vector<8x8xf32> -> vector<8x8xf32>
    %176 = tpu.reciprocal %174 {approx = true} : vector<8x1xf32> -> vector<8x1xf32>
    %177 = vector.broadcast %176 : vector<8x1xf32> to vector<8x8xf32>
    %178 = arith.mulf %175, %177 : vector<8x8xf32>
    %179 = vector.extract_strided_slice %117 {offsets = [16, 0], sizes = [8, 32], strides = [1, 1]} : vector<32x32xf32> to vector<8x32xf32>
    %cst_68 = arith.constant dense<0.000000e+00> : vector<8x32xf32>
    %180 = tpu.matmul %178, %179, %cst_68 {dimension_numbers = #tpu.dot_dimension_numbers<[1], [0], [0], [1], [0, 0, 1, 1], [], []>} : vector<8x8xf32>, vector<8x32xf32>, vector<8x32xf32> -> vector<8x32xf32>
    %181 = arith.addf %162, %180 : vector<8x32xf32>
    %182 = vector.extract_strided_slice %123 {offsets = [0, 24], sizes = [8, 8], strides = [1, 1]} : vector<8x32xf32> to vector<8x8xf32>
    %183 = vector.extract_strided_slice %124 {offsets = [0, 24], sizes = [8, 8], strides = [1, 1]} : vector<8x32xf32> to vector<8x8xf32>
    %184 = vector.extract_strided_slice %125 {offsets = [0, 24], sizes = [8, 8], strides = [1, 1]} : vector<8x32xf32> to vector<8x8xf32>
    %cst_69 = arith.constant dense<0.000000e+00> : vector<8x8xf32>
    %185 = tpu.matmul %182, %183, %cst_69 {dimension_numbers = #tpu.dot_dimension_numbers<[1], [1], [0], [0], [0, 0, 1, 0], [], []>} : vector<8x8xf32>, vector<8x8xf32>, vector<8x8xf32> -> vector<8x8xf32>
    %186 = arith.addf %185, %17 : vector<8x8xf32>
    %cst_70 = arith.constant dense<0xFF800000> : vector<8xf32>
    %187 = vector.multi_reduction <maximumf>, %186, %cst_70 [1] : vector<8x8xf32> to vector<8xf32>
    %188 = vector.shape_cast %187 : vector<8xf32> to vector<8x1xf32>
    %189 = vector.broadcast %188 : vector<8x1xf32> to vector<8x8xf32>
    %190 = arith.subf %186, %189 : vector<8x8xf32>
    %191 = math.exp %190 : vector<8x8xf32>
    %cst_71 = arith.constant dense<0.000000e+00> : vector<8xf32>
    %192 = vector.multi_reduction <add>, %191, %cst_71 [1] : vector<8x8xf32> to vector<8xf32>
    %193 = vector.shape_cast %192 : vector<8xf32> to vector<8x1xf32>
    %cst_72 = arith.constant dense<0.000000e+00> : vector<8x8xf32>
    %194 = tpu.matmul %191, %184, %cst_72 {dimension_numbers = #tpu.dot_dimension_numbers<[1], [0], [0], [1], [0, 0, 1, 1], [], []>} : vector<8x8xf32>, vector<8x8xf32>, vector<8x8xf32> -> vector<8x8xf32>
    %195 = tpu.reciprocal %193 {approx = true} : vector<8x1xf32> -> vector<8x1xf32>
    %196 = vector.broadcast %195 : vector<8x1xf32> to vector<8x8xf32>
    %197 = arith.mulf %194, %196 : vector<8x8xf32>
    %198 = vector.extract_strided_slice %117 {offsets = [24, 0], sizes = [8, 32], strides = [1, 1]} : vector<32x32xf32> to vector<8x32xf32>
    %cst_73 = arith.constant dense<0.000000e+00> : vector<8x32xf32>
    %199 = tpu.matmul %197, %198, %cst_73 {dimension_numbers = #tpu.dot_dimension_numbers<[1], [0], [0], [1], [0, 0, 1, 1], [], []>} : vector<8x8xf32>, vector<8x32xf32>, vector<8x32xf32> -> vector<8x32xf32>
    %200 = arith.addf %181, %199 : vector<8x32xf32>
    %201 = arith.addf %111, %200 : vector<8x32xf32>
    %c1_74 = arith.constant 1 : index
    %c0_75 = arith.constant 0 : index
    %c0_76 = arith.constant 0 : index
    %202 = vector.load %arg7[%c1_74, %c0_75, %c0_76] : memref<2x1x32xf32, #tpu.memory_space<vmem>>, vector<1x1x32xf32>
    %203 = vector.shape_cast %202 : vector<1x1x32xf32> to vector<1x32xf32>
    %204 = vector.broadcast %203 : vector<1x32xf32> to vector<8x32xf32>
    %205 = arith.addf %201, %204 : vector<8x32xf32>
    %c0_77 = arith.constant 0 : index
    %c0_78 = arith.constant 0 : index
    %206 = vector.load %arg8[%c0_77, %c0_78] : memref<32x16xf32, #tpu.memory_space<vmem>>, vector<32x16xf32>
    %cst_79 = arith.constant dense<0.000000e+00> : vector<8x16xf32>
    %207 = tpu.matmul %205, %206, %cst_79 {dimension_numbers = #tpu.dot_dimension_numbers<[1], [0], [0], [1], [0, 0, 1, 1], [], []>} : vector<8x32xf32>, vector<32x16xf32>, vector<8x16xf32> -> vector<8x16xf32>
    %c0_80 = arith.constant 0 : index
    %c0_81 = arith.constant 0 : index
    %c0_82 = arith.constant 0 : index
    %208 = vector.load %arg9[%c0_80, %c0_81, %c0_82] : memref<1x8x16xf32, #tpu.memory_space<vmem>>, vector<1x8x16xf32>
    %209 = vector.shape_cast %208 : vector<1x8x16xf32> to vector<8x16xf32>
    %210 = vector.shape_cast %207 : vector<8x16xf32> to vector<1x8x16xf32>
    tpu.vector_store %arg9[%c0_80, %c0_81, %c0_82], %210 {strides = array<i32>} : memref<1x8x16xf32, #tpu.memory_space<vmem>>, vector<1x8x16xf32>,
    return
  }
  func.func @transform_0(%arg0: i32) -> (i32, i32, i32) {
    %c0_i32 = arith.constant 0 : i32
    %c0_i32_0 = arith.constant 0 : i32
    %c0_i32_1 = arith.constant 0 : i32
    return %arg0, %c0_i32, %c0_i32_0 : i32, i32, i32
  }
  func.func @transform_1(%arg0: i32) -> (i32, i32) {
    %c0_i32 = arith.constant 0 : i32
    %c0_i32_0 = arith.constant 0 : i32
    %c0_i32_1 = arith.constant 0 : i32
    return %c0_i32, %c0_i32_0 : i32, i32
  }
  func.func @transform_2(%arg0: i32) -> (i32, i32) {
    %c0_i32 = arith.constant 0 : i32
    %c0_i32_0 = arith.constant 0 : i32
    %c0_i32_1 = arith.constant 0 : i32
    return %c0_i32, %c0_i32_0 : i32, i32
  }
  func.func @transform_3(%arg0: i32) -> (i32, i32, i32) {
    %c0_i32 = arith.constant 0 : i32
    %c0_i32_0 = arith.constant 0 : i32
    %c0_i32_1 = arith.constant 0 : i32
    %c0_i32_2 = arith.constant 0 : i32
    return %c0_i32, %c0_i32_0, %c0_i32_1 : i32, i32, i32
  }
  func.func @transform_4(%arg0: i32) -> (i32, i32, i32) {
    %c0_i32 = arith.constant 0 : i32
    %c0_i32_0 = arith.constant 0 : i32
    %c0_i32_1 = arith.constant 0 : i32
    %c0_i32_2 = arith.constant 0 : i32
    return %c0_i32, %c0_i32_0, %c0_i32_1 : i32, i32, i32
  }
  func.func @transform_5(%arg0: i32) -> (i32, i32, i32) {
    %c0_i32 = arith.constant 0 : i32
    %c0_i32_0 = arith.constant 0 : i32
    %c0_i32_1 = arith.constant 0 : i32
    %c0_i32_2 = arith.constant 0 : i32
    return %c0_i32, %c0_i32_0, %c0_i32_1 : i32, i32, i32
  }
  func.func @transform_6(%arg0: i32) -> (i32, i32, i32) {
    %c0_i32 = arith.constant 0 : i32
    %c0_i32_0 = arith.constant 0 : i32
    %c0_i32_1 = arith.constant 0 : i32
    %c0_i32_2 = arith.constant 0 : i32
    return %c0_i32, %c0_i32_0, %c0_i32_1 : i32, i32, i32
  }
  func.func @transform_7(%arg0: i32) -> (i32, i32) {
    %c0_i32 = arith.constant 0 : i32
    %c0_i32_0 = arith.constant 0 : i32
    %c0_i32_1 = arith.constant 0 : i32
    return %c0_i32, %c0_i32_0 : i32, i32
  }
  func.func @transform_8(%arg0: i32) -> (i32, i32, i32) {
    %c0_i32 = arith.constant 0 : i32
    %c0_i32_0 = arith.constant 0 : i32
    %c0_i32_1 = arith.constant 0 : i32
    return %arg0, %c0_i32, %c0_i32_0 : i32, i32, i32
  }
}

</mosaic_0001>

<llo_original>
// kernel: tpu_custom_call.1
$region0: #{tpu_custom_call.1}
  #allocation0 [shape = 'u32[]', space=smem, size = 0x4, offset = 0x4, fixed_abs, tag = 'smem constant byte address 0x4 - core index']
  #allocation1 [shape = 'u32[144,128]{1,0:T(1,128)}', space=vmem, size = 0x12000, scoped, tag = 'internal scratch']
  %s0 = inlined_call_operand.vmem [shape: s32[2,8,1], index: 0, kind: input, shape index: {}]
  %s1 = inlined_call_operand.hbm [shape: f32[16,32], index: 1, kind: input, shape index: {}]
  %s2 = inlined_call_operand.hbm [shape: f32[8,32], index: 2, kind: input, shape index: {}]
  %s3 = inlined_call_operand.vmem [shape: f32[2,32,96], index: 3, kind: input, shape index: {}]
  %s4 = inlined_call_operand.hbm [shape: f32[2,1,96], index: 4, kind: input, shape index: {}]
  %s5 = inlined_call_operand.hbm [shape: f32[2,32,32], index: 5, kind: input, shape index: {}]
  %s6 = inlined_call_operand.vmem [shape: f32[2,1,32], index: 6, kind: input, shape index: {}]
  %s7 = inlined_call_operand.vmem [shape: f32[32,16], index: 7, kind: input, shape index: {}]
  %s8 = inlined_call_operand.hbm [shape: f32[2,8,16], index: 8, kind: output, shape index: {}]
  %s9 = sld [smem:[#allocation0]]
  $region81: #{tpu_custom_call.1} parent=0
    _
  %s11 = ssub.s32 1, %s9
  %s12 = scalar_select 0, %s11, %s9
  $region1: #{tpu_custom_call.1} parent=0
    #allocation2 [shape = 'u8[8192]{0}', space=vmem, size = 0x2000, scoped, tag = 'input window, operand 1, single buffered']
    #allocation3 [shape = 's32[2]{0}', space=sflag, size = 0x8, scoped, tag = 'scoped memory for tpu_custom_call.1']
    #allocation4 [shape = 's32[2]{0}', space=sflag, size = 0x8, scoped, tag = 'scoped memory for tpu_custom_call.1']
    #allocation5 [shape = 'u8[4096]{0}', space=vmem, size = 0x1000, scoped, tag = 'input window, operand 2, single buffered']
    #allocation6 [shape = 's32[1]{0}', space=sflag, size = 0x4, scoped, tag = 'scoped memory for tpu_custom_call.1']
    #allocation7 [shape = 'u8[1024]{0}', space=vmem, size = 0x400, scoped, tag = 'input window, operand 4, single buffered']
    #allocation8 [shape = 'u8[32768]{0}', space=vmem, size = 0x8000, scoped, tag = 'input window, operand 5, single buffered']
    #allocation9 [shape = 's32[1]{0}', space=sflag, size = 0x4, scoped, tag = 'scoped memory for tpu_custom_call.1']
    #allocation10 [shape = 'u8[8192]{0}', space=vmem, size = 0x2000, scoped, tag = 'output window, operand 0']
    %13 = vsyncpa [#allocation3], 0
    %14 = vsyncpa [#allocation6], 0
    %15 = vsyncpa [#allocation9], 0
    %16 = vsyncpa [#allocation4], 0
    %s17 = scalar_lea.sflag [#allocation4], 1
    %18 = vsyncpa %s17, 0
    loop: start=0, step=1, limit=4
    $region2: #{tpu_custom_call.1} parent=1 // loop_pre_header
      _
    $region3: #{tpu_custom_call.1} parent=1 // loop_header
      %s20 = sphi 0, %s24
      %p21 = scmp.ge.s32.totalorder %s20, 4
      %s30 = sphi 0, %s32
      %s33 = sphi 0, %s30
      %s34 = sphi 0, %s33
      %s50 = sphi 0, %s34
      %s54 = sphi 0, %s54
      %s56 = sphi 0, %s54
      %s57 = sphi 0, %s56
      %s71 = sphi 0, %s57
      %s75 = sphi 0, %s75
      %s77 = sphi 0, %s75
      %s78 = sphi 0, %s77
      %s92 = sphi 0, %s78
      %s96 = sphi 0, %s96
      %s98 = sphi 0, %s96
      %s99 = sphi 0, %s98
      %s113 = sphi 0, %s99
      %s117 = sphi 0, %s117
      %s119 = sphi 0, %s117
      %s120 = sphi 0, %s119
      %s134 = sphi 0, %s120
      %s138 = sphi 0, %s138
      %s140 = sphi 0, %s138
      %s141 = sphi 0, %s140
      %s155 = sphi 0, %s141
      %s159 = sphi 0, %s159
      %s161 = sphi 0, %s159
      %s162 = sphi 0, %s161
      %s176 = sphi 0, %s162
      %s180 = sphi 0, %s180
      %s182 = sphi 0, %s180
      %s183 = sphi 0, %s182
      %s197 = sphi 0, %s183
      %s203 = sphi 0, %s205
      %s206 = sphi 0, %s203
      %s207 = sphi 0, %s206
      %s223 = sphi 0, %s207
    $region4: #{tpu_custom_call.1} parent=1 // loop_header_branch
      %23 = sbr.rel (%p21) target = $region8
    $region5: #{tpu_custom_call.1} parent=1 // loop_body
      %s25 = ssub.s32 %s20, 1
      %s26 = ssub.s32 %s20, 2
      %s27 = sadd.s32 %s20, 1
      %s28 = ssub.s32 %s20, %s27
      %p29 = scmp.eq.s32.totalorder %s28, 0
      %s31 = sadd.s32 %s30, 1
      %s32 = scalar_select %p29, %s30, %s31
      %p35 = pneg %p29
      %p36 = scmp.eq.s32.totalorder %s20, 1
      %p37 = por %p35, %p36
      %p38 = scmp.ne.s32.totalorder %s30, %s33
      %p39 = scmp.eq.s32.totalorder %s20, 0
      %p40 = por %p38, %p39
      %p41 = scmp.ne.s32.totalorder %s30, %s33
      %p42 = scmp.eq.s32.totalorder %s25, 1
      %p43 = por %p41, %p42
      %p44 = scmp.ne.s32.totalorder %s33, %s34
      %p45 = scmp.eq.s32.totalorder %s25, 0
      %p46 = por %p44, %p45
      %p47 = scmp.ne.s32.totalorder %s33, %s34
      %p48 = scmp.eq.s32.totalorder %s26, 1
      %p49 = por %p47, %p48
      %p51 = scmp.ne.s32.totalorder %s34, %s50
      %p52 = scmp.eq.s32.totalorder %s26, 0
      %p53 = por %p51, %p52
      %s55 = sadd.s32 %s54, 1
      %p58 = scmp.eq.s32.totalorder %s20, 1
      %p59 = scmp.ne.s32.totalorder %s54, %s56
      %p60 = scmp.eq.s32.totalorder %s20, 0
      %p61 = por %p59, %p60
      %p62 = scmp.ne.s32.totalorder %s54, %s56
      %p63 = scmp.eq.s32.totalorder %s25, 1
      %p64 = por %p62, %p63
      %p65 = scmp.ne.s32.totalorder %s56, %s57
      %p66 = scmp.eq.s32.totalorder %s25, 0
      %p67 = por %p65, %p66
      %p68 = scmp.ne.s32.totalorder %s56, %s57
      %p69 = scmp.eq.s32.totalorder %s26, 1
      %p70 = por %p68, %p69
      %p72 = scmp.ne.s32.totalorder %s57, %s71
      %p73 = scmp.eq.s32.totalorder %s26, 0
      %p74 = por %p72, %p73
      %s76 = sadd.s32 %s75, 1
      %p79 = scmp.eq.s32.totalorder %s20, 1
      %p80 = scmp.ne.s32.totalorder %s75, %s77
      %p81 = scmp.eq.s32.totalorder %s20, 0
      %p82 = por %p80, %p81
      %p83 = scmp.ne.s32.totalorder %s75, %s77
      %p84 = scmp.eq.s32.totalorder %s25, 1
      %p85 = por %p83, %p84
      %p86 = scmp.ne.s32.totalorder %s77, %s78
      %p87 = scmp.eq.s32.totalorder %s25, 0
      %p88 = por %p86, %p87
      %p89 = scmp.ne.s32.totalorder %s77, %s78
      %p90 = scmp.eq.s32.totalorder %s26, 1
      %p91 = por %p89, %p90
      %p93 = scmp.ne.s32.totalorder %s78, %s92
      %p94 = scmp.eq.s32.totalorder %s26, 0
      %p95 = por %p93, %p94
      %s97 = sadd.s32 %s96, 1
      %p100 = scmp.eq.s32.totalorder %s20, 1
      %p101 = scmp.ne.s32.totalorder %s96, %s98
      %p102 = scmp.eq.s32.totalorder %s20, 0
      %p103 = por %p101, %p102
      %p104 = scmp.ne.s32.totalorder %s96, %s98
      %p105 = scmp.eq.s32.totalorder %s25, 1
      %p106 = por %p104, %p105
      %p107 = scmp.ne.s32.totalorder %s98, %s99
      %p108 = scmp.eq.s32.totalorder %s25, 0
      %p109 = por %p107, %p108
      %p110 = scmp.ne.s32.totalorder %s98, %s99
      %p111 = scmp.eq.s32.totalorder %s26, 1
      %p112 = por %p110, %p111
      %p114 = scmp.ne.s32.totalorder %s99, %s113
      %p115 = scmp.eq.s32.totalorder %s26, 0
      %p116 = por %p114, %p115
      %s118 = sadd.s32 %s117, 1
      %p121 = scmp.eq.s32.totalorder %s20, 1
      %p122 = scmp.ne.s32.totalorder %s117, %s119
      %p123 = scmp.eq.s32.totalorder %s20, 0
      %p124 = por %p122, %p123
      %p125 = scmp.ne.s32.totalorder %s117, %s119
      %p126 = scmp.eq.s32.totalorder %s25, 1
      %p127 = por %p125, %p126
      %p128 = scmp.ne.s32.totalorder %s119, %s120
      %p129 = scmp.eq.s32.totalorder %s25, 0
      %p130 = por %p128, %p129
      %p131 = scmp.ne.s32.totalorder %s119, %s120
      %p132 = scmp.eq.s32.totalorder %s26, 1
      %p133 = por %p131, %p132
      %p135 = scmp.ne.s32.totalorder %s120, %s134
      %p136 = scmp.eq.s32.totalorder %s26, 0
      %p137 = por %p135, %p136
      %s139 = sadd.s32 %s138, 1
      %p142 = scmp.eq.s32.totalorder %s20, 1
      %p143 = scmp.ne.s32.totalorder %s138, %s140
      %p144 = scmp.eq.s32.totalorder %s20, 0
      %p145 = por %p143, %p144
      %p146 = scmp.ne.s32.totalorder %s138, %s140
      %p147 = scmp.eq.s32.totalorder %s25, 1
      %p148 = por %p146, %p147
      %p149 = scmp.ne.s32.totalorder %s140, %s141
      %p150 = scmp.eq.s32.totalorder %s25, 0
      %p151 = por %p149, %p150
      %p152 = scmp.ne.s32.totalorder %s140, %s141
      %p153 = scmp.eq.s32.totalorder %s26, 1
      %p154 = por %p152, %p153
      %p156 = scmp.ne.s32.totalorder %s141, %s155
      %p157 = scmp.eq.s32.totalorder %s26, 0
      %p158 = por %p156, %p157
      %s160 = sadd.s32 %s159, 1
      %p163 = scmp.eq.s32.totalorder %s20, 1
      %p164 = scmp.ne.s32.totalorder %s159, %s161
      %p165 = scmp.eq.s32.totalorder %s20, 0
      %p166 = por %p164, %p165
      %p167 = scmp.ne.s32.totalorder %s159, %s161
      %p168 = scmp.eq.s32.totalorder %s25, 1
      %p169 = por %p167, %p168
      %p170 = scmp.ne.s32.totalorder %s161, %s162
      %p171 = scmp.eq.s32.totalorder %s25, 0
      %p172 = por %p170, %p171
      %p173 = scmp.ne.s32.totalorder %s161, %s162
      %p174 = scmp.eq.s32.totalorder %s26, 1
      %p175 = por %p173, %p174
      %p177 = scmp.ne.s32.totalorder %s162, %s176
      %p178 = scmp.eq.s32.totalorder %s26, 0
      %p179 = por %p177, %p178
      %s181 = sadd.s32 %s180, 1
      %p184 = scmp.eq.s32.totalorder %s20, 1
      %p185 = scmp.ne.s32.totalorder %s180, %s182
      %p186 = scmp.eq.s32.totalorder %s20, 0
      %p187 = por %p185, %p186
      %p188 = scmp.ne.s32.totalorder %s180, %s182
      %p189 = scmp.eq.s32.totalorder %s25, 1
      %p190 = por %p188, %p189
      %p191 = scmp.ne.s32.totalorder %s182, %s183
      %p192 = scmp.eq.s32.totalorder %s25, 0
      %p193 = por %p191, %p192
      %p194 = scmp.ne.s32.totalorder %s182, %s183
      %p195 = scmp.eq.s32.totalorder %s26, 1
      %p196 = por %p194, %p195
      %p198 = scmp.ne.s32.totalorder %s183, %s197
      %p199 = scmp.eq.s32.totalorder %s26, 0
      %p200 = por %p198, %p199
      %s201 = ssub.s32 %s20, %s27
      %p202 = scmp.eq.s32.totalorder %s201, 0
      %s204 = sadd.s32 %s203, 1
      %s205 = scalar_select %p202, %s203, %s204
      %p208 = pneg %p202
      %p209 = scmp.eq.s32.totalorder %s20, 1
      %p210 = por %p208, %p209
      %p211 = scmp.ne.s32.totalorder %s203, %s206
      %p212 = scmp.eq.s32.totalorder %s20, 0
      %p213 = por %p211, %p212
      %p214 = scmp.ne.s32.totalorder %s203, %s206
      %p215 = scmp.eq.s32.totalorder %s25, 1
      %p216 = por %p214, %p215
      %p217 = scmp.ne.s32.totalorder %s206, %s207
      %p218 = scmp.eq.s32.totalorder %s25, 0
      %p219 = por %p217, %p218
      %p220 = scmp.ne.s32.totalorder %s206, %s207
      %p221 = scmp.eq.s32.totalorder %s26, 1
      %p222 = por %p220, %p221
      %p224 = scmp.ne.s32.totalorder %s207, %s223
      %p225 = scmp.eq.s32.totalorder %s26, 0
      %p226 = por %p224, %p225
      %p227 = scmp.le.s32.totalorder 1, %s20
      %p228 = scmp.lt.s32.totalorder %s20, 3
      %p229 = pnand %p227, %p228
      %p230 = pneg %p229
      // Predicated region
      $region9: #{tpu_custom_call.1} parent=5 // pred_check
        _
      $region10: #{tpu_custom_call.1} parent=5 // pred_check_branch
        %232 = sbr.rel (%p229) target = $region12
      $region11: #{tpu_custom_call.1} parent=5 // pred_region
        %s233 = ssub.s32 %s20, 1
        // Predicated region
        $region13: #{tpu_custom_call.1} parent=11 // pred_check
          %p234 = pneg %p67
        $region14: #{tpu_custom_call.1} parent=11 // pred_check_branch
          %236 = sbr.rel (%p234) target = $region16
        $region15: #{tpu_custom_call.1} parent=11 // pred_region
          %s238 = ssub.s32 256, 256
          %239 = vsyncadd [#allocation3], %s238
          %s240 = sshll.u32 [#allocation2], 4
          %s241 = int_to_ptr.vmem [resolvable:$true] %s240
          %246 = dma.hbm_to_vmem [thread:$0]  %s1, 256, %s241, [#allocation3], 128, 128, 8
        $region16: #{tpu_custom_call.1} parent=11 // pred_fallthru
          _
        // Predicated region
        $region17: #{tpu_custom_call.1} parent=11 // pred_check
          %p247 = pneg %p88
        $region18: #{tpu_custom_call.1} parent=11 // pred_check_branch
          %249 = sbr.rel (%p247) target = $region20
        $region19: #{tpu_custom_call.1} parent=11 // pred_region
          %s251 = ssub.s32 128, 128
          %252 = vsyncadd [#allocation6], %s251
          %s254 = sshll.u32 [#allocation5], 4
          %s255 = int_to_ptr.vmem [resolvable:$true] %s254
          %257 = dma.hbm_to_vmem [thread:$0]  %s2, 128, %s255, [#allocation6]
        $region20: #{tpu_custom_call.1} parent=11 // pred_fallthru
          _
        // Predicated region
        $region21: #{tpu_custom_call.1} parent=11 // pred_check
          %p258 = pneg %p109
        $region22: #{tpu_custom_call.1} parent=11 // pred_check_branch
          %260 = sbr.rel (%p258) target = $region24
        $region23: #{tpu_custom_call.1} parent=11 // pred_region
          _
        $region24: #{tpu_custom_call.1} parent=11 // pred_fallthru
          _
        // Predicated region
        $region25: #{tpu_custom_call.1} parent=11 // pred_check
          %p261 = pneg %p130
        $region26: #{tpu_custom_call.1} parent=11 // pred_check_branch
          %263 = sbr.rel (%p261) target = $region28
        $region27: #{tpu_custom_call.1} parent=11 // pred_region
          %s265 = ssub.s32 32, 32
          %266 = vsyncadd [#allocation6], %s265
          %s267 = sshll.u32 [#allocation7], 4
          %s268 = int_to_ptr.vmem [resolvable:$true] %s267
          %273 = dma.hbm_to_vmem [thread:$0]  %s4, 32, %s268, [#allocation6], 16, 16, 1
        $region28: #{tpu_custom_call.1} parent=11 // pred_fallthru
          _
        // Predicated region
        $region29: #{tpu_custom_call.1} parent=11 // pred_check
          %p274 = pneg %p151
        $region30: #{tpu_custom_call.1} parent=11 // pred_check_branch
          %276 = sbr.rel (%p274) target = $region32
        $region31: #{tpu_custom_call.1} parent=11 // pred_region
          %s278 = ssub.s32 1024, 1024
          %279 = vsyncadd [#allocation9], %s278
          %s280 = sshll.u32 [#allocation8], 4
          %s281 = int_to_ptr.vmem [resolvable:$true] %s280
          %286 = dma.hbm_to_vmem [thread:$0]  %s5, 1024, %s281, [#allocation9], 128, 128, 8
        $region32: #{tpu_custom_call.1} parent=11 // pred_fallthru
          _
        // Predicated region
        $region33: #{tpu_custom_call.1} parent=11 // pred_check
          %p287 = pneg %p172
        $region34: #{tpu_custom_call.1} parent=11 // pred_check_branch
          %289 = sbr.rel (%p287) target = $region36
        $region35: #{tpu_custom_call.1} parent=11 // pred_region
          _
        $region36: #{tpu_custom_call.1} parent=11 // pred_fallthru
          _
        // Predicated region
        $region37: #{tpu_custom_call.1} parent=11 // pred_check
          %p290 = pneg %p193
        $region38: #{tpu_custom_call.1} parent=11 // pred_check_branch
          %292 = sbr.rel (%p290) target = $region40
        $region39: #{tpu_custom_call.1} parent=11 // pred_region
          _
        $region40: #{tpu_custom_call.1} parent=11 // pred_fallthru
          _
      $region12: #{tpu_custom_call.1} parent=5 // pred_fallthru
        _
      %p293 = scmp.lt.s32.totalorder %s20, 2
      // Predicated region
      $region41: #{tpu_custom_call.1} parent=5 // pred_check
        %p294 = pneg %p293
      $region42: #{tpu_custom_call.1} parent=5 // pred_check_branch
        %296 = sbr.rel (%p294) target = $region44
      $region43: #{tpu_custom_call.1} parent=5 // pred_region
        // Predicated region
        $region45: #{tpu_custom_call.1} parent=43 // pred_check
          %p297 = pneg %p40
        $region46: #{tpu_custom_call.1} parent=43 // pred_check_branch
          %299 = sbr.rel (%p297) target = $region48
        $region47: #{tpu_custom_call.1} parent=43 // pred_region
          %p300 = scmp.lt.s32.totalorder %s20, 1
          %s301 = scalar_select %p300, %s20, 1
          %s302 = smul.addr %s301, 8
          %s303 = scalar_lea.vmem %s0, %s302
        $region48: #{tpu_custom_call.1} parent=43 // pred_fallthru
          _
      $region44: #{tpu_custom_call.1} parent=5 // pred_fallthru
        _
      %p304 = scmp.le.s32.totalorder 1, %s20
      %p305 = scmp.lt.s32.totalorder %s20, 3
      %p306 = pnand %p304, %p305
      %p307 = pneg %p306
      // Predicated region
      $region49: #{tpu_custom_call.1} parent=5 // pred_check
        _
      $region50: #{tpu_custom_call.1} parent=5 // pred_check_branch
        %309 = sbr.rel (%p306) target = $region52
      $region51: #{tpu_custom_call.1} parent=5 // pred_region
        %s310 = ssub.s32 %s20, 1
        // Predicated region
        $region53: #{tpu_custom_call.1} parent=51 // pred_check
          %p311 = pneg %p67
        $region54: #{tpu_custom_call.1} parent=51 // pred_check_branch
          %313 = sbr.rel (%p311) target = $region56
        $region55: #{tpu_custom_call.1} parent=51 // pred_region
          %314 = dma.done [#allocation3], 256
        $region56: #{tpu_custom_call.1} parent=51 // pred_fallthru
          _
        // Predicated region
        $region57: #{tpu_custom_call.1} parent=51 // pred_check
          %p315 = pneg %p88
        $region58: #{tpu_custom_call.1} parent=51 // pred_check_branch
          %317 = sbr.rel (%p315) target = $region60
        $region59: #{tpu_custom_call.1} parent=51 // pred_region
          %318 = dma.done [#allocation6], 128
        $region60: #{tpu_custom_call.1} parent=51 // pred_fallthru
          _
        // Predicated region
        $region61: #{tpu_custom_call.1} parent=51 // pred_check
          %p319 = pneg %p130
        $region62: #{tpu_custom_call.1} parent=51 // pred_check_branch
          %321 = sbr.rel (%p319) target = $region64
        $region63: #{tpu_custom_call.1} parent=51 // pred_region
          %322 = dma.done [#allocation6], 32
        $region64: #{tpu_custom_call.1} parent=51 // pred_fallthru
          _
        // Predicated region
        $region65: #{tpu_custom_call.1} parent=51 // pred_check
          %p323 = pneg %p151
        $region66: #{tpu_custom_call.1} parent=51 // pred_check_branch
          %325 = sbr.rel (%p323) target = $region68
        $region67: #{tpu_custom_call.1} parent=51 // pred_region
          %326 = dma.done [#allocation9], 1024
        $region68: #{tpu_custom_call.1} parent=51 // pred_fallthru
          _
        %p327 = scmp.lt.s32.totalorder %s25, 1
        %s328 = scalar_select %p327, %s25, 1
        %s329 = smul.addr %s328, 8
        %s330 = scalar_lea.vmem %s0, %s329
        %p331 = pneg %p46
        %p332 = pneg %p43
        %p333 = pneg %p67
        %p334 = pneg %p64
        %p335 = pneg %p88
        %p336 = pneg %p85
        %p337 = pneg %p109
        %p338 = pneg %p106
        %p339 = pneg %p130
        %p340 = pneg %p127
        %p341 = pneg %p151
        %p342 = pneg %p148
        %p343 = pneg %p172
        %p344 = pneg %p169
        %p345 = pneg %p193
        %p346 = pneg %p190
        %p347 = pneg %p219
        %p348 = pneg %p216
        %s349 = sand.u32 %s206, 1
        %s350 = scalar_lea.sflag [#allocation4], %s349
        %s351 = sand.u32 %s206, 1
        %s352 = smul.addr %s351, 8
        %s353 = scalar_lea.vmem [#allocation10], %s352
        %p354 = scmp.lt.s32.totalorder %s25, 1
        %s355 = scalar_select %p354, %s25, 1
        %s356 = smul.addr %s355, 8
        %s357 = scalar_lea.vmem %s0, %s356
        %v358 = vld [vmem:[%s357] sm:$0xff]
        %v359 = vlaneseq
        %v360 = vand.u32 %v359, 127
        %361 = vset.pattern.permute.xlu0 0
        %362 = vperm.xlu0 %361, %v358
        %v363 = vpop.permute.xlu0 %362
        %vm364 = vcmp.eq.s32.totalorder %v360, %v363
        %v365 = vsel %vm364, 1.0, 0.0
        %v366 = vld [vmem:[#allocation2] sm:$0xff]
        %v367 = vld [vmem:[#allocation2 + $0x8] sm:$0xff]
        %v368 = vld [vmem:[#allocation5] sm:$0xff]
        %vm369 = vcmask 130048
        %v371 = vsel %vm369, %v365, 0
        %373 = vmatprep.subr.mxu0 0.0
        %374 = vmatpush1.msra.mxu0 %v366
        %375 = vmatprep.subr.mxu0 0.0
        %376 = vmatpush1.msra.mxu0 %v367
        %377 = vmatprep.subr.mxu0 0.0
        %378 = vmatpush1.msra.mxu0 0.0
        %379 = vmatprep.subr.mxu0 0.0
        %380 = vmatpush1.msra.mxu0 0.0
        %381 = vmatprep.subr.mxu0 0.0
        %382 = vmatpush1.msra.mxu0 0.0
        %383 = vmatprep.subr.mxu0 0.0
        %384 = vmatpush1.msra.mxu0 0.0
        %385 = vmatprep.subr.mxu0 0.0
        %386 = vmatpush1.msra.mxu0 0.0
        %387 = vmatprep.subr.mxu0 0.0
        %388 = vmatpush1.msra.mxu0 0.0
        %389 = vmatprep.subr.mxu0 0.0
        %390 = vmatpush1.msra.mxu0 0.0
        %391 = vmatprep.subr.mxu0 0.0
        %392 = vmatpush1.msra.mxu0 0.0
        %393 = vmatprep.subr.mxu0 0.0
        %394 = vmatpush1.msra.mxu0 0.0
        %395 = vmatprep.subr.mxu0 0.0
        %396 = vmatpush1.msra.mxu0 0.0
        %397 = vmatprep.subr.mxu0 0.0
        %398 = vmatpush1.msra.mxu0 0.0
        %399 = vmatprep.subr.mxu0 0.0
        %400 = vmatpush1.msra.mxu0 0.0
        %401 = vmatprep.subr.mxu0 0.0
        %402 = vmatpush1.msra.mxu0 0.0
        %403 = vmatprep.subr.mxu0 0.0
        %404 = vmatpush1.msra.mxu0 0.0
        %405 = vmatprep.subr.mxu0 0.0
        %406 = vmatpush1.msra.mxu0 0.0
        %407 = vmatprep.subr.mxu0 0.0
        %408 = vmatpush1.msra.mxu0 0.0
        %409 = vmatprep.subr.mxu0 0.0
        %410 = vmatpush1.msra.mxu0 0.0
        %411 = vmatprep.subr.mxu0 0.0
        %412 = vmatpush1.msra.mxu0 0.0
        %413 = vmatprep.subr.mxu0 0.0
        %414 = vmatpush1.msra.mxu0 0.0
        %415 = vmatprep.subr.mxu0 0.0
        %416 = vmatpush1.msra.mxu0 0.0
        %417 = vmatprep.subr.mxu0 0.0
        %418 = vmatpush1.msra.mxu0 0.0
        %419 = vmatprep.subr.mxu0 0.0
        %420 = vmatpush1.msra.mxu0 0.0
        %421 = vmatprep.subr.mxu0 0.0
        %422 = vmatpush1.msra.mxu0 0.0
        %423 = vmatprep.subr.mxu0 0.0
        %424 = vmatpush1.msra.mxu0 0.0
        %425 = vmatprep.subr.mxu0 0.0
        %426 = vmatpush1.msra.mxu0 0.0
        %427 = vmatprep.subr.mxu0 0.0
        %428 = vmatpush1.msra.mxu0 0.0
        %429 = vmatprep.subr.mxu0 0.0
        %430 = vmatpush1.msra.mxu0 0.0
        %431 = vmatprep.subr.mxu0 0.0
        %432 = vmatpush1.msra.mxu0 0.0
        %433 = vmatprep.subr.mxu0 0.0
        %434 = vmatpush1.msra.mxu0 0.0
        %435 = vmatprep.subr.mxu0 0.0
        %436 = vmatpush1.msra.mxu0 0.0
        %437 = vmatprep.mubr.f32.mxu0 0.0
        %438 = vmatmul.mubr.f32.gmra.mrb[0].mxu0 %v371
        %v439 = vpop.f32.mrb[0].mxu0
        %v440 = vadd.f32 %v368, %v439
        %v441 = vpop.f32.mrb[0].mxu0
        %442 = vdwg.mxu0
        %v443 = vlaneseq
        %v444 = vshrl.u32 %v443, 7
        %vm445 = vcmp.le.s32.totalorder %v360, %v444
        %v446 = vsel %vm445, 0.0, -1e+30
        %v447 = vld [vmem:[%s3] sm:$0xff]
        %v448 = vld [vmem:[%s3 + $0x8] sm:$0xff]
        %v449 = vld [vmem:[%s3 + $0x10] sm:$0xff]
        %v450 = vld [vmem:[%s3 + $0x18] sm:$0xff]
        %v451 = vld [vmem:[#allocation7] sm:$0x1]
        %v452 = vld [vmem:[#allocation8] sm:$0xff]
        %v453 = vld [vmem:[#allocation8 + $0x8] sm:$0xff]
        %v454 = vld [vmem:[#allocation8 + $0x10] sm:$0xff]
        %v455 = vld [vmem:[#allocation8 + $0x18] sm:$0xff]
        %v457 = vlaneseq
        %v458 = vshrl.u32 %v457, 7
        %v459 = vsub.s32 0, %v458
        %v460 = vrot.slane %v451, %v459
        %vm462 = vcmask 261120
        %v464 = vsel %vm462, %v440, 0
        %466 = vmatprep.subr.mxu0 0.0
        %467 = vmatpush1.msra.mxu0 %v447
        %468 = vmatprep.subr.mxu0 0.0
        %469 = vmatpush1.msra.mxu0 %v448
        %470 = vmatprep.subr.mxu0 0.0
        %471 = vmatpush1.msra.mxu0 %v449
        %472 = vmatprep.subr.mxu0 0.0
        %473 = vmatpush1.msra.mxu0 %v450
        %474 = vmatprep.subr.mxu0 0.0
        %475 = vmatpush1.msra.mxu0 0.0
        %476 = vmatprep.subr.mxu0 0.0
        %477 = vmatpush1.msra.mxu0 0.0
        %478 = vmatprep.subr.mxu0 0.0
        %479 = vmatpush1.msra.mxu0 0.0
        %480 = vmatprep.subr.mxu0 0.0
        %481 = vmatpush1.msra.mxu0 0.0
        %482 = vmatprep.subr.mxu0 0.0
        %483 = vmatpush1.msra.mxu0 0.0
        %484 = vmatprep.subr.mxu0 0.0
        %485 = vmatpush1.msra.mxu0 0.0
        %486 = vmatprep.subr.mxu0 0.0
        %487 = vmatpush1.msra.mxu0 0.0
        %488 = vmatprep.subr.mxu0 0.0
        %489 = vmatpush1.msra.mxu0 0.0
        %490 = vmatprep.subr.mxu0 0.0
        %491 = vmatpush1.msra.mxu0 0.0
        %492 = vmatprep.subr.mxu0 0.0
        %493 = vmatpush1.msra.mxu0 0.0
        %494 = vmatprep.subr.mxu0 0.0
        %495 = vmatpush1.msra.mxu0 0.0
        %496 = vmatprep.subr.mxu0 0.0
        %497 = vmatpush1.msra.mxu0 0.0
        %498 = vmatprep.subr.mxu0 0.0
        %499 = vmatpush1.msra.mxu0 0.0
        %500 = vmatprep.subr.mxu0 0.0
        %501 = vmatpush1.msra.mxu0 0.0
        %502 = vmatprep.subr.mxu0 0.0
        %503 = vmatpush1.msra.mxu0 0.0
        %504 = vmatprep.subr.mxu0 0.0
        %505 = vmatpush1.msra.mxu0 0.0
        %506 = vmatprep.subr.mxu0 0.0
        %507 = vmatpush1.msra.mxu0 0.0
        %508 = vmatprep.subr.mxu0 0.0
        %509 = vmatpush1.msra.mxu0 0.0
        %510 = vmatprep.subr.mxu0 0.0
        %511 = vmatpush1.msra.mxu0 0.0
        %512 = vmatprep.subr.mxu0 0.0
        %513 = vmatpush1.msra.mxu0 0.0
        %514 = vmatprep.subr.mxu0 0.0
        %515 = vmatpush1.msra.mxu0 0.0
        %516 = vmatprep.subr.mxu0 0.0
        %517 = vmatpush1.msra.mxu0 0.0
        %518 = vmatprep.subr.mxu0 0.0
        %519 = vmatpush1.msra.mxu0 0.0
        %520 = vmatprep.subr.mxu0 0.0
        %521 = vmatpush1.msra.mxu0 0.0
        %522 = vmatprep.subr.mxu0 0.0
        %523 = vmatpush1.msra.mxu0 0.0
        %524 = vmatprep.subr.mxu0 0.0
        %525 = vmatpush1.msra.mxu0 0.0
        %526 = vmatprep.subr.mxu0 0.0
        %527 = vmatpush1.msra.mxu0 0.0
        %528 = vmatprep.subr.mxu0 0.0
        %529 = vmatpush1.msra.mxu0 0.0
        %530 = vmatprep.mubr.f32.mxu0 0.0
        %531 = vmatmul.mubr.f32.gmra.mrb[0].mxu0 %v464
        %v532 = vpop.f32.mrb[0].mxu0
        %v533 = vadd.f32 %v460, %v532
        %v534 = vpop.f32.mrb[0].mxu0
        %535 = vdwg.mxu0
        %v536 = vmul.f32 %v533, 0.35355338
        %538 = vrot.lane.b32.xlu0 %v533, 96
        %v539 = vpop.permute.xlu0 %538
        %vm540 = vcmask 64512
        %v542 = vsel %vm540, %v536, 0
        %v544 = vsel %vm540, %v539, 0
        %546 = vmatprep.subr.mxu0 0.0
        %547 = vmatpush1.xpose.msra.mxu0 %v544
        %548 = vmatprep.subr.mxu0 0.0
        %549 = vmatpush1.xpose.msra.mxu0 0.0
        %550 = vmatprep.subr.mxu0 0.0
        %551 = vmatpush1.xpose.msra.mxu0 0.0
        %552 = vmatprep.subr.mxu0 0.0
        %553 = vmatpush1.xpose.msra.mxu0 0.0
        %554 = vmatprep.subr.mxu0 0.0
        %555 = vmatpush1.xpose.msra.mxu0 0.0
        %556 = vmatprep.subr.mxu0 0.0
        %557 = vmatpush1.xpose.msra.mxu0 0.0
        %558 = vmatprep.subr.mxu0 0.0
        %559 = vmatpush1.xpose.msra.mxu0 0.0
        %560 = vmatprep.subr.mxu0 0.0
        %561 = vmatpush1.xpose.msra.mxu0 0.0
        %562 = vmatprep.subr.mxu0 0.0
        %563 = vmatpush1.xpose.msra.mxu0 0.0
        %564 = vmatprep.subr.mxu0 0.0
        %565 = vmatpush1.xpose.msra.mxu0 0.0
        %566 = vmatprep.subr.mxu0 0.0
        %567 = vmatpush1.xpose.msra.mxu0 0.0
        %568 = vmatprep.subr.mxu0 0.0
        %569 = vmatpush1.xpose.msra.mxu0 0.0
        %570 = vmatprep.subr.mxu0 0.0
        %571 = vmatpush1.xpose.msra.mxu0 0.0
        %572 = vmatprep.subr.mxu0 0.0
        %573 = vmatpush1.xpose.msra.mxu0 0.0
        %574 = vmatprep.subr.mxu0 0.0
        %575 = vmatpush1.xpose.msra.mxu0 0.0
        %576 = vmatprep.subr.mxu0 0.0
        %577 = vmatpush1.xpose.msra.mxu0 0.0
        %578 = vmatprep.subr.mxu0 0.0
        %579 = vmatpush1.xpose.msra.mxu0 0.0
        %580 = vmatprep.subr.mxu0 0.0
        %581 = vmatpush1.xpose.msra.mxu0 0.0
        %582 = vmatprep.subr.mxu0 0.0
        %583 = vmatpush1.xpose.msra.mxu0 0.0
        %584 = vmatprep.subr.mxu0 0.0
        %585 = vmatpush1.xpose.msra.mxu0 0.0
        %586 = vmatprep.subr.mxu0 0.0
        %587 = vmatpush1.xpose.msra.mxu0 0.0
        %588 = vmatprep.subr.mxu0 0.0
        %589 = vmatpush1.xpose.msra.mxu0 0.0
        %590 = vmatprep.subr.mxu0 0.0
        %591 = vmatpush1.xpose.msra.mxu0 0.0
        %592 = vmatprep.subr.mxu0 0.0
        %593 = vmatpush1.xpose.msra.mxu0 0.0
        %594 = vmatprep.subr.mxu0 0.0
        %595 = vmatpush1.xpose.msra.mxu0 0.0
        %596 = vmatprep.subr.mxu0 0.0
        %597 = vmatpush1.xpose.msra.mxu0 0.0
        %598 = vmatprep.subr.mxu0 0.0
        %599 = vmatpush1.xpose.msra.mxu0 0.0
        %600 = vmatprep.subr.mxu0 0.0
        %601 = vmatpush1.xpose.msra.mxu0 0.0
        %602 = vmatprep.subr.mxu0 0.0
        %603 = vmatpush1.xpose.msra.mxu0 0.0
        %604 = vmatprep.subr.mxu0 0.0
        %605 = vmatpush1.xpose.msra.mxu0 0.0
        %606 = vmatprep.subr.mxu0 0.0
        %607 = vmatpush1.xpose.msra.mxu0 0.0
        %608 = vmatprep.subr.mxu0 0.0
        %609 = vmatpush1.xpose.msra.mxu0 0.0
        %610 = vmatprep.mubr.f32.mxu0 0.0
        %611 = vmatmul.mubr.f32.gmra.mrb[0].mxu0 %v542
        %v612 = vpop.f32.mrb[0].mxu0
        %v613 = vadd.f32 %v446, %v612
        %v614 = vpop.f32.mrb[0].mxu0
        %615 = vdwg.mxu0
        %v616 = vsel %vm540, %v613, -inf
        %617 = vmax.xlane.f32.xlu0 %v616
        %v618 = vpop.xlane.xlu0 %617
        %v619 = vsub.f32 %v613, %v618
        %v620 = vmul.f32 %v619, 1.442695
        %v621 = vpow.pop %v620
        %v622 = vsel %vm540, %v621, 0.0
        %623 = vadd.xlane.f32.xlu0 %v622
        %v624 = vpop.xlane.xlu0 %623
        %625 = vrot.lane.b32.xlu0 %v533, 64
        %v626 = vpop.permute.xlu0 %625
        %v629 = vsel %vm540, %v621, 0
        %631 = vmatprep.subr.mxu0 0.0
        %632 = vmatpush1.msra.mxu0 %v626
        %633 = vmatprep.subr.mxu0 0.0
        %634 = vmatpush1.msra.mxu0 0.0
        %635 = vmatprep.subr.mxu0 0.0
        %636 = vmatpush1.msra.mxu0 0.0
        %637 = vmatprep.subr.mxu0 0.0
        %638 = vmatpush1.msra.mxu0 0.0
        %639 = vmatprep.subr.mxu0 0.0
        %640 = vmatpush1.msra.mxu0 0.0
        %641 = vmatprep.subr.mxu0 0.0
        %642 = vmatpush1.msra.mxu0 0.0
        %643 = vmatprep.subr.mxu0 0.0
        %644 = vmatpush1.msra.mxu0 0.0
        %645 = vmatprep.subr.mxu0 0.0
        %646 = vmatpush1.msra.mxu0 0.0
        %647 = vmatprep.subr.mxu0 0.0
        %648 = vmatpush1.msra.mxu0 0.0
        %649 = vmatprep.subr.mxu0 0.0
        %650 = vmatpush1.msra.mxu0 0.0
        %651 = vmatprep.subr.mxu0 0.0
        %652 = vmatpush1.msra.mxu0 0.0
        %653 = vmatprep.subr.mxu0 0.0
        %654 = vmatpush1.msra.mxu0 0.0
        %655 = vmatprep.subr.mxu0 0.0
        %656 = vmatpush1.msra.mxu0 0.0
        %657 = vmatprep.subr.mxu0 0.0
        %658 = vmatpush1.msra.mxu0 0.0
        %659 = vmatprep.subr.mxu0 0.0
        %660 = vmatpush1.msra.mxu0 0.0
        %661 = vmatprep.subr.mxu0 0.0
        %662 = vmatpush1.msra.mxu0 0.0
        %663 = vmatprep.subr.mxu0 0.0
        %664 = vmatpush1.msra.mxu0 0.0
        %665 = vmatprep.subr.mxu0 0.0
        %666 = vmatpush1.msra.mxu0 0.0
        %667 = vmatprep.subr.mxu0 0.0
        %668 = vmatpush1.msra.mxu0 0.0
        %669 = vmatprep.subr.mxu0 0.0
        %670 = vmatpush1.msra.mxu0 0.0
        %671 = vmatprep.subr.mxu0 0.0
        %672 = vmatpush1.msra.mxu0 0.0
        %673 = vmatprep.subr.mxu0 0.0
        %674 = vmatpush1.msra.mxu0 0.0
        %675 = vmatprep.subr.mxu0 0.0
        %676 = vmatpush1.msra.mxu0 0.0
        %677 = vmatprep.subr.mxu0 0.0
        %678 = vmatpush1.msra.mxu0 0.0
        %679 = vmatprep.subr.mxu0 0.0
        %680 = vmatpush1.msra.mxu0 0.0
        %681 = vmatprep.subr.mxu0 0.0
        %682 = vmatpush1.msra.mxu0 0.0
        %683 = vmatprep.subr.mxu0 0.0
        %684 = vmatpush1.msra.mxu0 0.0
        %685 = vmatprep.subr.mxu0 0.0
        %686 = vmatpush1.msra.mxu0 0.0
        %687 = vmatprep.subr.mxu0 0.0
        %688 = vmatpush1.msra.mxu0 0.0
        %689 = vmatprep.subr.mxu0 0.0
        %690 = vmatpush1.msra.mxu0 0.0
        %691 = vmatprep.subr.mxu0 0.0
        %692 = vmatpush1.msra.mxu0 0.0
        %693 = vmatprep.subr.mxu0 0.0
        %694 = vmatpush1.msra.mxu0 0.0
        %695 = vmatprep.mubr.f32.mxu0 0.0
        %696 = vmatmul.mubr.f32.gmra.mrb[0].mxu0 %v629
        %v697 = vpop.f32.mrb[0].mxu0
        %v698 = vadd.f32 0.0, %v697
        %v699 = vpop.f32.mrb[0].mxu0
        %700 = vdwg.mxu0
        %v701 = vrcp.pop %v624
        %v702 = vmul.f32 %v698, %v701
        %703 = vrot.lane.b32.xlu0 %v536, 120
        %v704 = vpop.permute.xlu0 %703
        %705 = vrot.lane.b32.xlu0 %v533, 88
        %v706 = vpop.permute.xlu0 %705
        %v707 = vsel %vm540, %v704, 0
        %v709 = vsel %vm540, %v706, 0
        %711 = vmatprep.subr.mxu0 0.0
        %712 = vmatpush1.xpose.msra.mxu0 %v709
        %713 = vmatprep.subr.mxu0 0.0
        %714 = vmatpush1.xpose.msra.mxu0 0.0
        %715 = vmatprep.subr.mxu0 0.0
        %716 = vmatpush1.xpose.msra.mxu0 0.0
        %717 = vmatprep.subr.mxu0 0.0
        %718 = vmatpush1.xpose.msra.mxu0 0.0
        %719 = vmatprep.subr.mxu0 0.0
        %720 = vmatpush1.xpose.msra.mxu0 0.0
        %721 = vmatprep.subr.mxu0 0.0
        %722 = vmatpush1.xpose.msra.mxu0 0.0
        %723 = vmatprep.subr.mxu0 0.0
        %724 = vmatpush1.xpose.msra.mxu0 0.0
        %725 = vmatprep.subr.mxu0 0.0
        %726 = vmatpush1.xpose.msra.mxu0 0.0
        %727 = vmatprep.subr.mxu0 0.0
        %728 = vmatpush1.xpose.msra.mxu0 0.0
        %729 = vmatprep.subr.mxu0 0.0
        %730 = vmatpush1.xpose.msra.mxu0 0.0
        %731 = vmatprep.subr.mxu0 0.0
        %732 = vmatpush1.xpose.msra.mxu0 0.0
        %733 = vmatprep.subr.mxu0 0.0
        %734 = vmatpush1.xpose.msra.mxu0 0.0
        %735 = vmatprep.subr.mxu0 0.0
        %736 = vmatpush1.xpose.msra.mxu0 0.0
        %737 = vmatprep.subr.mxu0 0.0
        %738 = vmatpush1.xpose.msra.mxu0 0.0
        %739 = vmatprep.subr.mxu0 0.0
        %740 = vmatpush1.xpose.msra.mxu0 0.0
        %741 = vmatprep.subr.mxu0 0.0
        %742 = vmatpush1.xpose.msra.mxu0 0.0
        %743 = vmatprep.subr.mxu0 0.0
        %744 = vmatpush1.xpose.msra.mxu0 0.0
        %745 = vmatprep.subr.mxu0 0.0
        %746 = vmatpush1.xpose.msra.mxu0 0.0
        %747 = vmatprep.subr.mxu0 0.0
        %748 = vmatpush1.xpose.msra.mxu0 0.0
        %749 = vmatprep.subr.mxu0 0.0
        %750 = vmatpush1.xpose.msra.mxu0 0.0
        %751 = vmatprep.subr.mxu0 0.0
        %752 = vmatpush1.xpose.msra.mxu0 0.0
        %753 = vmatprep.subr.mxu0 0.0
        %754 = vmatpush1.xpose.msra.mxu0 0.0
        %755 = vmatprep.subr.mxu0 0.0
        %756 = vmatpush1.xpose.msra.mxu0 0.0
        %757 = vmatprep.subr.mxu0 0.0
        %758 = vmatpush1.xpose.msra.mxu0 0.0
        %759 = vmatprep.subr.mxu0 0.0
        %760 = vmatpush1.xpose.msra.mxu0 0.0
        %761 = vmatprep.subr.mxu0 0.0
        %762 = vmatpush1.xpose.msra.mxu0 0.0
        %763 = vmatprep.subr.mxu0 0.0
        %764 = vmatpush1.xpose.msra.mxu0 0.0
        %765 = vmatprep.subr.mxu0 0.0
        %766 = vmatpush1.xpose.msra.mxu0 0.0
        %767 = vmatprep.subr.mxu0 0.0
        %768 = vmatpush1.xpose.msra.mxu0 0.0
        %769 = vmatprep.subr.mxu0 0.0
        %770 = vmatpush1.xpose.msra.mxu0 0.0
        %771 = vmatprep.subr.mxu0 0.0
        %772 = vmatpush1.xpose.msra.mxu0 0.0
        %773 = vmatprep.subr.mxu0 0.0
        %774 = vmatpush1.xpose.msra.mxu0 0.0
        %775 = vmatprep.mubr.f32.mxu0 0.0
        %776 = vmatmul.mubr.f32.gmra.mrb[0].mxu0 %v707
        %v777 = vpop.f32.mrb[0].mxu0
        %v778 = vadd.f32 %v446, %v777
        %v779 = vpop.f32.mrb[0].mxu0
        %780 = vdwg.mxu0
        %v781 = vsel %vm540, %v778, -inf
        %782 = vmax.xlane.f32.xlu0 %v781
        %v783 = vpop.xlane.xlu0 %782
        %v784 = vsub.f32 %v778, %v783
        %v785 = vmul.f32 %v784, 1.442695
        %v786 = vpow.pop %v785
        %v787 = vsel %vm540, %v786, 0.0
        %788 = vadd.xlane.f32.xlu0 %v787
        %v789 = vpop.xlane.xlu0 %788
        %790 = vrot.lane.b32.xlu0 %v533, 56
        %v791 = vpop.permute.xlu0 %790
        %v794 = vsel %vm540, %v786, 0
        %796 = vmatprep.subr.mxu0 0.0
        %797 = vmatpush1.msra.mxu0 %v791
        %798 = vmatprep.subr.mxu0 0.0
        %799 = vmatpush1.msra.mxu0 0.0
        %800 = vmatprep.subr.mxu0 0.0
        %801 = vmatpush1.msra.mxu0 0.0
        %802 = vmatprep.subr.mxu0 0.0
        %803 = vmatpush1.msra.mxu0 0.0
        %804 = vmatprep.subr.mxu0 0.0
        %805 = vmatpush1.msra.mxu0 0.0
        %806 = vmatprep.subr.mxu0 0.0
        %807 = vmatpush1.msra.mxu0 0.0
        %808 = vmatprep.subr.mxu0 0.0
        %809 = vmatpush1.msra.mxu0 0.0
        %810 = vmatprep.subr.mxu0 0.0
        %811 = vmatpush1.msra.mxu0 0.0
        %812 = vmatprep.subr.mxu0 0.0
        %813 = vmatpush1.msra.mxu0 0.0
        %814 = vmatprep.subr.mxu0 0.0
        %815 = vmatpush1.msra.mxu0 0.0
        %816 = vmatprep.subr.mxu0 0.0
        %817 = vmatpush1.msra.mxu0 0.0
        %818 = vmatprep.subr.mxu0 0.0
        %819 = vmatpush1.msra.mxu0 0.0
        %820 = vmatprep.subr.mxu0 0.0
        %821 = vmatpush1.msra.mxu0 0.0
        %822 = vmatprep.subr.mxu0 0.0
        %823 = vmatpush1.msra.mxu0 0.0
        %824 = vmatprep.subr.mxu0 0.0
        %825 = vmatpush1.msra.mxu0 0.0
        %826 = vmatprep.subr.mxu0 0.0
        %827 = vmatpush1.msra.mxu0 0.0
        %828 = vmatprep.subr.mxu0 0.0
        %829 = vmatpush1.msra.mxu0 0.0
        %830 = vmatprep.subr.mxu0 0.0
        %831 = vmatpush1.msra.mxu0 0.0
        %832 = vmatprep.subr.mxu0 0.0
        %833 = vmatpush1.msra.mxu0 0.0
        %834 = vmatprep.subr.mxu0 0.0
        %835 = vmatpush1.msra.mxu0 0.0
        %836 = vmatprep.subr.mxu0 0.0
        %837 = vmatpush1.msra.mxu0 0.0
        %838 = vmatprep.subr.mxu0 0.0
        %839 = vmatpush1.msra.mxu0 0.0
        %840 = vmatprep.subr.mxu0 0.0
        %841 = vmatpush1.msra.mxu0 0.0
        %842 = vmatprep.subr.mxu0 0.0
        %843 = vmatpush1.msra.mxu0 0.0
        %844 = vmatprep.subr.mxu0 0.0
        %845 = vmatpush1.msra.mxu0 0.0
        %846 = vmatprep.subr.mxu0 0.0
        %847 = vmatpush1.msra.mxu0 0.0
        %848 = vmatprep.subr.mxu0 0.0
        %849 = vmatpush1.msra.mxu0 0.0
        %850 = vmatprep.subr.mxu0 0.0
        %851 = vmatpush1.msra.mxu0 0.0
        %852 = vmatprep.subr.mxu0 0.0
        %853 = vmatpush1.msra.mxu0 0.0
        %854 = vmatprep.subr.mxu0 0.0
        %855 = vmatpush1.msra.mxu0 0.0
        %856 = vmatprep.subr.mxu0 0.0
        %857 = vmatpush1.msra.mxu0 0.0
        %858 = vmatprep.subr.mxu0 0.0
        %859 = vmatpush1.msra.mxu0 0.0
        %860 = vmatprep.mubr.f32.mxu0 0.0
        %861 = vmatmul.mubr.f32.gmra.mrb[0].mxu0 %v794
        %v862 = vpop.f32.mrb[0].mxu0
        %v863 = vadd.f32 0.0, %v862
        %v864 = vpop.f32.mrb[0].mxu0
        %865 = vdwg.mxu0
        %v866 = vrcp.pop %v789
        %v867 = vmul.f32 %v863, %v866
        %v869 = vsel %vm540, %v867, 0
        %871 = vmatprep.subr.mxu0 0.0
        %872 = vmatpush1.msra.mxu0 %v453
        %873 = vmatprep.subr.mxu0 0.0
        %874 = vmatpush1.msra.mxu0 0.0
        %875 = vmatprep.subr.mxu0 0.0
        %876 = vmatpush1.msra.mxu0 0.0
        %877 = vmatprep.subr.mxu0 0.0
        %878 = vmatpush1.msra.mxu0 0.0
        %879 = vmatprep.subr.mxu0 0.0
        %880 = vmatpush1.msra.mxu0 0.0
        %881 = vmatprep.subr.mxu0 0.0
        %882 = vmatpush1.msra.mxu0 0.0
        %883 = vmatprep.subr.mxu0 0.0
        %884 = vmatpush1.msra.mxu0 0.0
        %885 = vmatprep.subr.mxu0 0.0
        %886 = vmatpush1.msra.mxu0 0.0
        %887 = vmatprep.subr.mxu0 0.0
        %888 = vmatpush1.msra.mxu0 0.0
        %889 = vmatprep.subr.mxu0 0.0
        %890 = vmatpush1.msra.mxu0 0.0
        %891 = vmatprep.subr.mxu0 0.0
        %892 = vmatpush1.msra.mxu0 0.0
        %893 = vmatprep.subr.mxu0 0.0
        %894 = vmatpush1.msra.mxu0 0.0
        %895 = vmatprep.subr.mxu0 0.0
        %896 = vmatpush1.msra.mxu0 0.0
        %897 = vmatprep.subr.mxu0 0.0
        %898 = vmatpush1.msra.mxu0 0.0
        %899 = vmatprep.subr.mxu0 0.0
        %900 = vmatpush1.msra.mxu0 0.0
        %901 = vmatprep.subr.mxu0 0.0
        %902 = vmatpush1.msra.mxu0 0.0
        %903 = vmatprep.subr.mxu0 0.0
        %904 = vmatpush1.msra.mxu0 0.0
        %905 = vmatprep.subr.mxu0 0.0
        %906 = vmatpush1.msra.mxu0 0.0
        %907 = vmatprep.subr.mxu0 0.0
        %908 = vmatpush1.msra.mxu0 0.0
        %909 = vmatprep.subr.mxu0 0.0
        %910 = vmatpush1.msra.mxu0 0.0
        %911 = vmatprep.subr.mxu0 0.0
        %912 = vmatpush1.msra.mxu0 0.0
        %913 = vmatprep.subr.mxu0 0.0
        %914 = vmatpush1.msra.mxu0 0.0
        %915 = vmatprep.subr.mxu0 0.0
        %916 = vmatpush1.msra.mxu0 0.0
        %917 = vmatprep.subr.mxu0 0.0
        %918 = vmatpush1.msra.mxu0 0.0
        %919 = vmatprep.subr.mxu0 0.0
        %920 = vmatpush1.msra.mxu0 0.0
        %921 = vmatprep.subr.mxu0 0.0
        %922 = vmatpush1.msra.mxu0 0.0
        %923 = vmatprep.subr.mxu0 0.0
        %924 = vmatpush1.msra.mxu0 0.0
        %925 = vmatprep.subr.mxu0 0.0
        %926 = vmatpush1.msra.mxu0 0.0
        %927 = vmatprep.subr.mxu0 0.0
        %928 = vmatpush1.msra.mxu0 0.0
        %929 = vmatprep.subr.mxu0 0.0
        %930 = vmatpush1.msra.mxu0 0.0
        %931 = vmatprep.subr.mxu0 0.0
        %932 = vmatpush1.msra.mxu0 0.0
        %933 = vmatprep.subr.mxu0 0.0
        %934 = vmatpush1.msra.mxu0 0.0
        %935 = vmatprep.mubr.f32.mxu0 0.0
        %936 = vmatmul.mubr.f32.gmra.mrb[0].mxu0 %v869
        %v937 = vpop.f32.mrb[0].mxu0
        %v938 = vadd.f32 0.0, %v937
        %v939 = vpop.f32.mrb[0].mxu0
        %940 = vdwg.mxu0
        %v942 = vsel %vm540, %v702, 0
        %944 = vmatprep.subr.mxu0 0.0
        %945 = vmatpush1.msra.mxu0 %v452
        %946 = vmatprep.subr.mxu0 0.0
        %947 = vmatpush1.msra.mxu0 0.0
        %948 = vmatprep.subr.mxu0 0.0
        %949 = vmatpush1.msra.mxu0 0.0
        %950 = vmatprep.subr.mxu0 0.0
        %951 = vmatpush1.msra.mxu0 0.0
        %952 = vmatprep.subr.mxu0 0.0
        %953 = vmatpush1.msra.mxu0 0.0
        %954 = vmatprep.subr.mxu0 0.0
        %955 = vmatpush1.msra.mxu0 0.0
        %956 = vmatprep.subr.mxu0 0.0
        %957 = vmatpush1.msra.mxu0 0.0
        %958 = vmatprep.subr.mxu0 0.0
        %959 = vmatpush1.msra.mxu0 0.0
        %960 = vmatprep.subr.mxu0 0.0
        %961 = vmatpush1.msra.mxu0 0.0
        %962 = vmatprep.subr.mxu0 0.0
        %963 = vmatpush1.msra.mxu0 0.0
        %964 = vmatprep.subr.mxu0 0.0
        %965 = vmatpush1.msra.mxu0 0.0
        %966 = vmatprep.subr.mxu0 0.0
        %967 = vmatpush1.msra.mxu0 0.0
        %968 = vmatprep.subr.mxu0 0.0
        %969 = vmatpush1.msra.mxu0 0.0
        %970 = vmatprep.subr.mxu0 0.0
        %971 = vmatpush1.msra.mxu0 0.0
        %972 = vmatprep.subr.mxu0 0.0
        %973 = vmatpush1.msra.mxu0 0.0
        %974 = vmatprep.subr.mxu0 0.0
        %975 = vmatpush1.msra.mxu0 0.0
        %976 = vmatprep.subr.mxu0 0.0
        %977 = vmatpush1.msra.mxu0 0.0
        %978 = vmatprep.subr.mxu0 0.0
        %979 = vmatpush1.msra.mxu0 0.0
        %980 = vmatprep.subr.mxu0 0.0
        %981 = vmatpush1.msra.mxu0 0.0
        %982 = vmatprep.subr.mxu0 0.0
        %983 = vmatpush1.msra.mxu0 0.0
        %984 = vmatprep.subr.mxu0 0.0
        %985 = vmatpush1.msra.mxu0 0.0
        %986 = vmatprep.subr.mxu0 0.0
        %987 = vmatpush1.msra.mxu0 0.0
        %988 = vmatprep.subr.mxu0 0.0
        %989 = vmatpush1.msra.mxu0 0.0
        %990 = vmatprep.subr.mxu0 0.0
        %991 = vmatpush1.msra.mxu0 0.0
        %992 = vmatprep.subr.mxu0 0.0
        %993 = vmatpush1.msra.mxu0 0.0
        %994 = vmatprep.subr.mxu0 0.0
        %995 = vmatpush1.msra.mxu0 0.0
        %996 = vmatprep.subr.mxu0 0.0
        %997 = vmatpush1.msra.mxu0 0.0
        %998 = vmatprep.subr.mxu0 0.0
        %999 = vmatpush1.msra.mxu0 0.0
        %1000 = vmatprep.subr.mxu0 0.0
        %1001 = vmatpush1.msra.mxu0 0.0
        %1002 = vmatprep.subr.mxu0 0.0
        %1003 = vmatpush1.msra.mxu0 0.0
        %1004 = vmatprep.subr.mxu0 0.0
        %1005 = vmatpush1.msra.mxu0 0.0
        %1006 = vmatprep.subr.mxu0 0.0
        %1007 = vmatpush1.msra.mxu0 0.0
        %1008 = vmatprep.mubr.f32.mxu0 0.0
        %1009 = vmatmul.mubr.f32.gmra.mrb[0].mxu0 %v942
        %v1010 = vpop.f32.mrb[0].mxu0
        %v1011 = vadd.f32 %v938, %v1010
        %v1012 = vpop.f32.mrb[0].mxu0
        %1013 = vdwg.mxu0
        %1014 = vrot.lane.b32.xlu0 %v536, 112
        %v1015 = vpop.permute.xlu0 %1014
        %1016 = vrot.lane.b32.xlu0 %v533, 80
        %v1017 = vpop.permute.xlu0 %1016
        %v1018 = vsel %vm540, %v1015, 0
        %v1020 = vsel %vm540, %v1017, 0
        %1022 = vmatprep.subr.mxu0 0.0
        %1023 = vmatpush1.xpose.msra.mxu0 %v1020
        %1024 = vmatprep.subr.mxu0 0.0
        %1025 = vmatpush1.xpose.msra.mxu0 0.0
        %1026 = vmatprep.subr.mxu0 0.0
        %1027 = vmatpush1.xpose.msra.mxu0 0.0
        %1028 = vmatprep.subr.mxu0 0.0
        %1029 = vmatpush1.xpose.msra.mxu0 0.0
        %1030 = vmatprep.subr.mxu0 0.0
        %1031 = vmatpush1.xpose.msra.mxu0 0.0
        %1032 = vmatprep.subr.mxu0 0.0
        %1033 = vmatpush1.xpose.msra.mxu0 0.0
        %1034 = vmatprep.subr.mxu0 0.0
        %1035 = vmatpush1.xpose.msra.mxu0 0.0
        %1036 = vmatprep.subr.mxu0 0.0
        %1037 = vmatpush1.xpose.msra.mxu0 0.0
        %1038 = vmatprep.subr.mxu0 0.0
        %1039 = vmatpush1.xpose.msra.mxu0 0.0
        %1040 = vmatprep.subr.mxu0 0.0
        %1041 = vmatpush1.xpose.msra.mxu0 0.0
        %1042 = vmatprep.subr.mxu0 0.0
        %1043 = vmatpush1.xpose.msra.mxu0 0.0
        %1044 = vmatprep.subr.mxu0 0.0
        %1045 = vmatpush1.xpose.msra.mxu0 0.0
        %1046 = vmatprep.subr.mxu0 0.0
        %1047 = vmatpush1.xpose.msra.mxu0 0.0
        %1048 = vmatprep.subr.mxu0 0.0
        %1049 = vmatpush1.xpose.msra.mxu0 0.0
        %1050 = vmatprep.subr.mxu0 0.0
        %1051 = vmatpush1.xpose.msra.mxu0 0.0
        %1052 = vmatprep.subr.mxu0 0.0
        %1053 = vmatpush1.xpose.msra.mxu0 0.0
        %1054 = vmatprep.subr.mxu0 0.0
        %1055 = vmatpush1.xpose.msra.mxu0 0.0
        %1056 = vmatprep.subr.mxu0 0.0
        %1057 = vmatpush1.xpose.msra.mxu0 0.0
        %1058 = vmatprep.subr.mxu0 0.0
        %1059 = vmatpush1.xpose.msra.mxu0 0.0
        %1060 = vmatprep.subr.mxu0 0.0
        %1061 = vmatpush1.xpose.msra.mxu0 0.0
        %1062 = vmatprep.subr.mxu0 0.0
        %1063 = vmatpush1.xpose.msra.mxu0 0.0
        %1064 = vmatprep.subr.mxu0 0.0
        %1065 = vmatpush1.xpose.msra.mxu0 0.0
        %1066 = vmatprep.subr.mxu0 0.0
        %1067 = vmatpush1.xpose.msra.mxu0 0.0
        %1068 = vmatprep.subr.mxu0 0.0
        %1069 = vmatpush1.xpose.msra.mxu0 0.0
        %1070 = vmatprep.subr.mxu0 0.0
        %1071 = vmatpush1.xpose.msra.mxu0 0.0
        %1072 = vmatprep.subr.mxu0 0.0
        %1073 = vmatpush1.xpose.msra.mxu0 0.0
        %1074 = vmatprep.subr.mxu0 0.0
        %1075 = vmatpush1.xpose.msra.mxu0 0.0
        %1076 = vmatprep.subr.mxu0 0.0
        %1077 = vmatpush1.xpose.msra.mxu0 0.0
        %1078 = vmatprep.subr.mxu0 0.0
        %1079 = vmatpush1.xpose.msra.mxu0 0.0
        %1080 = vmatprep.subr.mxu0 0.0
        %1081 = vmatpush1.xpose.msra.mxu0 0.0
        %1082 = vmatprep.subr.mxu0 0.0
        %1083 = vmatpush1.xpose.msra.mxu0 0.0
        %1084 = vmatprep.subr.mxu0 0.0
        %1085 = vmatpush1.xpose.msra.mxu0 0.0
        %1086 = vmatprep.mubr.f32.mxu0 0.0
        %1087 = vmatmul.mubr.f32.gmra.mrb[0].mxu0 %v1018
        %v1088 = vpop.f32.mrb[0].mxu0
        %v1089 = vadd.f32 %v446, %v1088
        %v1090 = vpop.f32.mrb[0].mxu0
        %1091 = vdwg.mxu0
        %v1092 = vsel %vm540, %v1089, -inf
        %1093 = vmax.xlane.f32.xlu0 %v1092
        %v1094 = vpop.xlane.xlu0 %1093
        %v1095 = vsub.f32 %v1089, %v1094
        %v1096 = vmul.f32 %v1095, 1.442695
        %v1097 = vpow.pop %v1096
        %v1098 = vsel %vm540, %v1097, 0.0
        %1099 = vadd.xlane.f32.xlu0 %v1098
        %v1100 = vpop.xlane.xlu0 %1099
        %1101 = vrot.lane.b32.xlu0 %v533, 48
        %v1102 = vpop.permute.xlu0 %1101
        %v1105 = vsel %vm540, %v1097, 0
        %1107 = vmatprep.subr.mxu0 0.0
        %1108 = vmatpush1.msra.mxu0 %v1102
        %1109 = vmatprep.subr.mxu0 0.0
        %1110 = vmatpush1.msra.mxu0 0.0
        %1111 = vmatprep.subr.mxu0 0.0
        %1112 = vmatpush1.msra.mxu0 0.0
        %1113 = vmatprep.subr.mxu0 0.0
        %1114 = vmatpush1.msra.mxu0 0.0
        %1115 = vmatprep.subr.mxu0 0.0
        %1116 = vmatpush1.msra.mxu0 0.0
        %1117 = vmatprep.subr.mxu0 0.0
        %1118 = vmatpush1.msra.mxu0 0.0
        %1119 = vmatprep.subr.mxu0 0.0
        %1120 = vmatpush1.msra.mxu0 0.0
        %1121 = vmatprep.subr.mxu0 0.0
        %1122 = vmatpush1.msra.mxu0 0.0
        %1123 = vmatprep.subr.mxu0 0.0
        %1124 = vmatpush1.msra.mxu0 0.0
        %1125 = vmatprep.subr.mxu0 0.0
        %1126 = vmatpush1.msra.mxu0 0.0
        %1127 = vmatprep.subr.mxu0 0.0
        %1128 = vmatpush1.msra.mxu0 0.0
        %1129 = vmatprep.subr.mxu0 0.0
        %1130 = vmatpush1.msra.mxu0 0.0
        %1131 = vmatprep.subr.mxu0 0.0
        %1132 = vmatpush1.msra.mxu0 0.0
        %1133 = vmatprep.subr.mxu0 0.0
        %1134 = vmatpush1.msra.mxu0 0.0
        %1135 = vmatprep.subr.mxu0 0.0
        %1136 = vmatpush1.msra.mxu0 0.0
        %1137 = vmatprep.subr.mxu0 0.0
        %1138 = vmatpush1.msra.mxu0 0.0
        %1139 = vmatprep.subr.mxu0 0.0
        %1140 = vmatpush1.msra.mxu0 0.0
        %1141 = vmatprep.subr.mxu0 0.0
        %1142 = vmatpush1.msra.mxu0 0.0
        %1143 = vmatprep.subr.mxu0 0.0
        %1144 = vmatpush1.msra.mxu0 0.0
        %1145 = vmatprep.subr.mxu0 0.0
        %1146 = vmatpush1.msra.mxu0 0.0
        %1147 = vmatprep.subr.mxu0 0.0
        %1148 = vmatpush1.msra.mxu0 0.0
        %1149 = vmatprep.subr.mxu0 0.0
        %1150 = vmatpush1.msra.mxu0 0.0
        %1151 = vmatprep.subr.mxu0 0.0
        %1152 = vmatpush1.msra.mxu0 0.0
        %1153 = vmatprep.subr.mxu0 0.0
        %1154 = vmatpush1.msra.mxu0 0.0
        %1155 = vmatprep.subr.mxu0 0.0
        %1156 = vmatpush1.msra.mxu0 0.0
        %1157 = vmatprep.subr.mxu0 0.0
        %1158 = vmatpush1.msra.mxu0 0.0
        %1159 = vmatprep.subr.mxu0 0.0
        %1160 = vmatpush1.msra.mxu0 0.0
        %1161 = vmatprep.subr.mxu0 0.0
        %1162 = vmatpush1.msra.mxu0 0.0
        %1163 = vmatprep.subr.mxu0 0.0
        %1164 = vmatpush1.msra.mxu0 0.0
        %1165 = vmatprep.subr.mxu0 0.0
        %1166 = vmatpush1.msra.mxu0 0.0
        %1167 = vmatprep.subr.mxu0 0.0
        %1168 = vmatpush1.msra.mxu0 0.0
        %1169 = vmatprep.subr.mxu0 0.0
        %1170 = vmatpush1.msra.mxu0 0.0
        %1171 = vmatprep.mubr.f32.mxu0 0.0
        %1172 = vmatmul.mubr.f32.gmra.mrb[0].mxu0 %v1105
        %v1173 = vpop.f32.mrb[0].mxu0
        %v1174 = vadd.f32 0.0, %v1173
        %v1175 = vpop.f32.mrb[0].mxu0
        %1176 = vdwg.mxu0
        %v1177 = vrcp.pop %v1100
        %v1178 = vmul.f32 %v1174, %v1177
        %v1180 = vsel %vm540, %v1178, 0
        %1182 = vmatprep.subr.mxu0 0.0
        %1183 = vmatpush1.msra.mxu0 %v454
        %1184 = vmatprep.subr.mxu0 0.0
        %1185 = vmatpush1.msra.mxu0 0.0
        %1186 = vmatprep.subr.mxu0 0.0
        %1187 = vmatpush1.msra.mxu0 0.0
        %1188 = vmatprep.subr.mxu0 0.0
        %1189 = vmatpush1.msra.mxu0 0.0
        %1190 = vmatprep.subr.mxu0 0.0
        %1191 = vmatpush1.msra.mxu0 0.0
        %1192 = vmatprep.subr.mxu0 0.0
        %1193 = vmatpush1.msra.mxu0 0.0
        %1194 = vmatprep.subr.mxu0 0.0
        %1195 = vmatpush1.msra.mxu0 0.0
        %1196 = vmatprep.subr.mxu0 0.0
        %1197 = vmatpush1.msra.mxu0 0.0
        %1198 = vmatprep.subr.mxu0 0.0
        %1199 = vmatpush1.msra.mxu0 0.0
        %1200 = vmatprep.subr.mxu0 0.0
        %1201 = vmatpush1.msra.mxu0 0.0
        %1202 = vmatprep.subr.mxu0 0.0
        %1203 = vmatpush1.msra.mxu0 0.0
        %1204 = vmatprep.subr.mxu0 0.0
        %1205 = vmatpush1.msra.mxu0 0.0
        %1206 = vmatprep.subr.mxu0 0.0
        %1207 = vmatpush1.msra.mxu0 0.0
        %1208 = vmatprep.subr.mxu0 0.0
        %1209 = vmatpush1.msra.mxu0 0.0
        %1210 = vmatprep.subr.mxu0 0.0
        %1211 = vmatpush1.msra.mxu0 0.0
        %1212 = vmatprep.subr.mxu0 0.0
        %1213 = vmatpush1.msra.mxu0 0.0
        %1214 = vmatprep.subr.mxu0 0.0
        %1215 = vmatpush1.msra.mxu0 0.0
        %1216 = vmatprep.subr.mxu0 0.0
        %1217 = vmatpush1.msra.mxu0 0.0
        %1218 = vmatprep.subr.mxu0 0.0
        %1219 = vmatpush1.msra.mxu0 0.0
        %1220 = vmatprep.subr.mxu0 0.0
        %1221 = vmatpush1.msra.mxu0 0.0
        %1222 = vmatprep.subr.mxu0 0.0
        %1223 = vmatpush1.msra.mxu0 0.0
        %1224 = vmatprep.subr.mxu0 0.0
        %1225 = vmatpush1.msra.mxu0 0.0
        %1226 = vmatprep.subr.mxu0 0.0
        %1227 = vmatpush1.msra.mxu0 0.0
        %1228 = vmatprep.subr.mxu0 0.0
        %1229 = vmatpush1.msra.mxu0 0.0
        %1230 = vmatprep.subr.mxu0 0.0
        %1231 = vmatpush1.msra.mxu0 0.0
        %1232 = vmatprep.subr.mxu0 0.0
        %1233 = vmatpush1.msra.mxu0 0.0
        %1234 = vmatprep.subr.mxu0 0.0
        %1235 = vmatpush1.msra.mxu0 0.0
        %1236 = vmatprep.subr.mxu0 0.0
        %1237 = vmatpush1.msra.mxu0 0.0
        %1238 = vmatprep.subr.mxu0 0.0
        %1239 = vmatpush1.msra.mxu0 0.0
        %1240 = vmatprep.subr.mxu0 0.0
        %1241 = vmatpush1.msra.mxu0 0.0
        %1242 = vmatprep.subr.mxu0 0.0
        %1243 = vmatpush1.msra.mxu0 0.0
        %1244 = vmatprep.subr.mxu0 0.0
        %1245 = vmatpush1.msra.mxu0 0.0
        %1246 = vmatprep.mubr.f32.mxu0 0.0
        %1247 = vmatmul.mubr.f32.gmra.mrb[0].mxu0 %v1180
        %v1248 = vpop.f32.mrb[0].mxu0
        %v1249 = vadd.f32 0.0, %v1248
        %v1250 = vpop.f32.mrb[0].mxu0
        %1251 = vdwg.mxu0
        %v1252 = vadd.f32 %v1011, %v1249
        %1253 = vrot.lane.b32.xlu0 %v536, 104
        %v1254 = vpop.permute.xlu0 %1253
        %1255 = vrot.lane.b32.xlu0 %v533, 72
        %v1256 = vpop.permute.xlu0 %1255
        %v1257 = vsel %vm540, %v1254, 0
        %v1259 = vsel %vm540, %v1256, 0
        %1261 = vmatprep.subr.mxu0 0.0
        %1262 = vmatpush1.xpose.msra.mxu0 %v1259
        %1263 = vmatprep.subr.mxu0 0.0
        %1264 = vmatpush1.xpose.msra.mxu0 0.0
        %1265 = vmatprep.subr.mxu0 0.0
        %1266 = vmatpush1.xpose.msra.mxu0 0.0
        %1267 = vmatprep.subr.mxu0 0.0
        %1268 = vmatpush1.xpose.msra.mxu0 0.0
        %1269 = vmatprep.subr.mxu0 0.0
        %1270 = vmatpush1.xpose.msra.mxu0 0.0
        %1271 = vmatprep.subr.mxu0 0.0
        %1272 = vmatpush1.xpose.msra.mxu0 0.0
        %1273 = vmatprep.subr.mxu0 0.0
        %1274 = vmatpush1.xpose.msra.mxu0 0.0
        %1275 = vmatprep.subr.mxu0 0.0
        %1276 = vmatpush1.xpose.msra.mxu0 0.0
        %1277 = vmatprep.subr.mxu0 0.0
        %1278 = vmatpush1.xpose.msra.mxu0 0.0
        %1279 = vmatprep.subr.mxu0 0.0
        %1280 = vmatpush1.xpose.msra.mxu0 0.0
        %1281 = vmatprep.subr.mxu0 0.0
        %1282 = vmatpush1.xpose.msra.mxu0 0.0
        %1283 = vmatprep.subr.mxu0 0.0
        %1284 = vmatpush1.xpose.msra.mxu0 0.0
        %1285 = vmatprep.subr.mxu0 0.0
        %1286 = vmatpush1.xpose.msra.mxu0 0.0
        %1287 = vmatprep.subr.mxu0 0.0
        %1288 = vmatpush1.xpose.msra.mxu0 0.0
        %1289 = vmatprep.subr.mxu0 0.0
        %1290 = vmatpush1.xpose.msra.mxu0 0.0
        %1291 = vmatprep.subr.mxu0 0.0
        %1292 = vmatpush1.xpose.msra.mxu0 0.0
        %1293 = vmatprep.subr.mxu0 0.0
        %1294 = vmatpush1.xpose.msra.mxu0 0.0
        %1295 = vmatprep.subr.mxu0 0.0
        %1296 = vmatpush1.xpose.msra.mxu0 0.0
        %1297 = vmatprep.subr.mxu0 0.0
        %1298 = vmatpush1.xpose.msra.mxu0 0.0
        %1299 = vmatprep.subr.mxu0 0.0
        %1300 = vmatpush1.xpose.msra.mxu0 0.0
        %1301 = vmatprep.subr.mxu0 0.0
        %1302 = vmatpush1.xpose.msra.mxu0 0.0
        %1303 = vmatprep.subr.mxu0 0.0
        %1304 = vmatpush1.xpose.msra.mxu0 0.0
        %1305 = vmatprep.subr.mxu0 0.0
        %1306 = vmatpush1.xpose.msra.mxu0 0.0
        %1307 = vmatprep.subr.mxu0 0.0
        %1308 = vmatpush1.xpose.msra.mxu0 0.0
        %1309 = vmatprep.subr.mxu0 0.0
        %1310 = vmatpush1.xpose.msra.mxu0 0.0
        %1311 = vmatprep.subr.mxu0 0.0
        %1312 = vmatpush1.xpose.msra.mxu0 0.0
        %1313 = vmatprep.subr.mxu0 0.0
        %1314 = vmatpush1.xpose.msra.mxu0 0.0
        %1315 = vmatprep.subr.mxu0 0.0
        %1316 = vmatpush1.xpose.msra.mxu0 0.0
        %1317 = vmatprep.subr.mxu0 0.0
        %1318 = vmatpush1.xpose.msra.mxu0 0.0
        %1319 = vmatprep.subr.mxu0 0.0
        %1320 = vmatpush1.xpose.msra.mxu0 0.0
        %1321 = vmatprep.subr.mxu0 0.0
        %1322 = vmatpush1.xpose.msra.mxu0 0.0
        %1323 = vmatprep.subr.mxu0 0.0
        %1324 = vmatpush1.xpose.msra.mxu0 0.0
        %1325 = vmatprep.mubr.f32.mxu0 0.0
        %1326 = vmatmul.mubr.f32.gmra.mrb[0].mxu0 %v1257
        %v1327 = vpop.f32.mrb[0].mxu0
        %v1328 = vadd.f32 %v446, %v1327
        %v1329 = vpop.f32.mrb[0].mxu0
        %1330 = vdwg.mxu0
        %v1331 = vsel %vm540, %v1328, -inf
        %1332 = vmax.xlane.f32.xlu0 %v1331
        %v1333 = vpop.xlane.xlu0 %1332
        %v1334 = vsub.f32 %v1328, %v1333
        %v1335 = vmul.f32 %v1334, 1.442695
        %v1336 = vpow.pop %v1335
        %v1337 = vsel %vm540, %v1336, 0.0
        %1338 = vadd.xlane.f32.xlu0 %v1337
        %v1339 = vpop.xlane.xlu0 %1338
        %1340 = vrot.lane.b32.xlu0 %v533, 40
        %v1341 = vpop.permute.xlu0 %1340
        %v1344 = vsel %vm540, %v1336, 0
        %1346 = vmatprep.subr.mxu0 0.0
        %1347 = vmatpush1.msra.mxu0 %v1341
        %1348 = vmatprep.subr.mxu0 0.0
        %1349 = vmatpush1.msra.mxu0 0.0
        %1350 = vmatprep.subr.mxu0 0.0
        %1351 = vmatpush1.msra.mxu0 0.0
        %1352 = vmatprep.subr.mxu0 0.0
        %1353 = vmatpush1.msra.mxu0 0.0
        %1354 = vmatprep.subr.mxu0 0.0
        %1355 = vmatpush1.msra.mxu0 0.0
        %1356 = vmatprep.subr.mxu0 0.0
        %1357 = vmatpush1.msra.mxu0 0.0
        %1358 = vmatprep.subr.mxu0 0.0
        %1359 = vmatpush1.msra.mxu0 0.0
        %1360 = vmatprep.subr.mxu0 0.0
        %1361 = vmatpush1.msra.mxu0 0.0
        %1362 = vmatprep.subr.mxu0 0.0
        %1363 = vmatpush1.msra.mxu0 0.0
        %1364 = vmatprep.subr.mxu0 0.0
        %1365 = vmatpush1.msra.mxu0 0.0
        %1366 = vmatprep.subr.mxu0 0.0
        %1367 = vmatpush1.msra.mxu0 0.0
        %1368 = vmatprep.subr.mxu0 0.0
        %1369 = vmatpush1.msra.mxu0 0.0
        %1370 = vmatprep.subr.mxu0 0.0
        %1371 = vmatpush1.msra.mxu0 0.0
        %1372 = vmatprep.subr.mxu0 0.0
        %1373 = vmatpush1.msra.mxu0 0.0
        %1374 = vmatprep.subr.mxu0 0.0
        %1375 = vmatpush1.msra.mxu0 0.0
        %1376 = vmatprep.subr.mxu0 0.0
        %1377 = vmatpush1.msra.mxu0 0.0
        %1378 = vmatprep.subr.mxu0 0.0
        %1379 = vmatpush1.msra.mxu0 0.0
        %1380 = vmatprep.subr.mxu0 0.0
        %1381 = vmatpush1.msra.mxu0 0.0
        %1382 = vmatprep.subr.mxu0 0.0
        %1383 = vmatpush1.msra.mxu0 0.0
        %1384 = vmatprep.subr.mxu0 0.0
        %1385 = vmatpush1.msra.mxu0 0.0
        %1386 = vmatprep.subr.mxu0 0.0
        %1387 = vmatpush1.msra.mxu0 0.0
        %1388 = vmatprep.subr.mxu0 0.0
        %1389 = vmatpush1.msra.mxu0 0.0
        %1390 = vmatprep.subr.mxu0 0.0
        %1391 = vmatpush1.msra.mxu0 0.0
        %1392 = vmatprep.subr.mxu0 0.0
        %1393 = vmatpush1.msra.mxu0 0.0
        %1394 = vmatprep.subr.mxu0 0.0
        %1395 = vmatpush1.msra.mxu0 0.0
        %1396 = vmatprep.subr.mxu0 0.0
        %1397 = vmatpush1.msra.mxu0 0.0
        %1398 = vmatprep.subr.mxu0 0.0
        %1399 = vmatpush1.msra.mxu0 0.0
        %1400 = vmatprep.subr.mxu0 0.0
        %1401 = vmatpush1.msra.mxu0 0.0
        %1402 = vmatprep.subr.mxu0 0.0
        %1403 = vmatpush1.msra.mxu0 0.0
        %1404 = vmatprep.subr.mxu0 0.0
        %1405 = vmatpush1.msra.mxu0 0.0
        %1406 = vmatprep.subr.mxu0 0.0
        %1407 = vmatpush1.msra.mxu0 0.0
        %1408 = vmatprep.subr.mxu0 0.0
        %1409 = vmatpush1.msra.mxu0 0.0
        %1410 = vmatprep.mubr.f32.mxu0 0.0
        %1411 = vmatmul.mubr.f32.gmra.mrb[0].mxu0 %v1344
        %v1412 = vpop.f32.mrb[0].mxu0
        %v1413 = vadd.f32 0.0, %v1412
        %v1414 = vpop.f32.mrb[0].mxu0
        %1415 = vdwg.mxu0
        %v1416 = vrcp.pop %v1339
        %v1417 = vmul.f32 %v1413, %v1416
        %v1419 = vsel %vm540, %v1417, 0
        %1421 = vmatprep.subr.mxu0 0.0
        %1422 = vmatpush1.msra.mxu0 %v455
        %1423 = vmatprep.subr.mxu0 0.0
        %1424 = vmatpush1.msra.mxu0 0.0
        %1425 = vmatprep.subr.mxu0 0.0
        %1426 = vmatpush1.msra.mxu0 0.0
        %1427 = vmatprep.subr.mxu0 0.0
        %1428 = vmatpush1.msra.mxu0 0.0
        %1429 = vmatprep.subr.mxu0 0.0
        %1430 = vmatpush1.msra.mxu0 0.0
        %1431 = vmatprep.subr.mxu0 0.0
        %1432 = vmatpush1.msra.mxu0 0.0
        %1433 = vmatprep.subr.mxu0 0.0
        %1434 = vmatpush1.msra.mxu0 0.0
        %1435 = vmatprep.subr.mxu0 0.0
        %1436 = vmatpush1.msra.mxu0 0.0
        %1437 = vmatprep.subr.mxu0 0.0
        %1438 = vmatpush1.msra.mxu0 0.0
        %1439 = vmatprep.subr.mxu0 0.0
        %1440 = vmatpush1.msra.mxu0 0.0
        %1441 = vmatprep.subr.mxu0 0.0
        %1442 = vmatpush1.msra.mxu0 0.0
        %1443 = vmatprep.subr.mxu0 0.0
        %1444 = vmatpush1.msra.mxu0 0.0
        %1445 = vmatprep.subr.mxu0 0.0
        %1446 = vmatpush1.msra.mxu0 0.0
        %1447 = vmatprep.subr.mxu0 0.0
        %1448 = vmatpush1.msra.mxu0 0.0
        %1449 = vmatprep.subr.mxu0 0.0
        %1450 = vmatpush1.msra.mxu0 0.0
        %1451 = vmatprep.subr.mxu0 0.0
        %1452 = vmatpush1.msra.mxu0 0.0
        %1453 = vmatprep.subr.mxu0 0.0
        %1454 = vmatpush1.msra.mxu0 0.0
        %1455 = vmatprep.subr.mxu0 0.0
        %1456 = vmatpush1.msra.mxu0 0.0
        %1457 = vmatprep.subr.mxu0 0.0
        %1458 = vmatpush1.msra.mxu0 0.0
        %1459 = vmatprep.subr.mxu0 0.0
        %1460 = vmatpush1.msra.mxu0 0.0
        %1461 = vmatprep.subr.mxu0 0.0
        %1462 = vmatpush1.msra.mxu0 0.0
        %1463 = vmatprep.subr.mxu0 0.0
        %1464 = vmatpush1.msra.mxu0 0.0
        %1465 = vmatprep.subr.mxu0 0.0
        %1466 = vmatpush1.msra.mxu0 0.0
        %1467 = vmatprep.subr.mxu0 0.0
        %1468 = vmatpush1.msra.mxu0 0.0
        %1469 = vmatprep.subr.mxu0 0.0
        %1470 = vmatpush1.msra.mxu0 0.0
        %1471 = vmatprep.subr.mxu0 0.0
        %1472 = vmatpush1.msra.mxu0 0.0
        %1473 = vmatprep.subr.mxu0 0.0
        %1474 = vmatpush1.msra.mxu0 0.0
        %1475 = vmatprep.subr.mxu0 0.0
        %1476 = vmatpush1.msra.mxu0 0.0
        %1477 = vmatprep.subr.mxu0 0.0
        %1478 = vmatpush1.msra.mxu0 0.0
        %1479 = vmatprep.subr.mxu0 0.0
        %1480 = vmatpush1.msra.mxu0 0.0
        %1481 = vmatprep.subr.mxu0 0.0
        %1482 = vmatpush1.msra.mxu0 0.0
        %1483 = vmatprep.subr.mxu0 0.0
        %1484 = vmatpush1.msra.mxu0 0.0
        %1485 = vmatprep.mubr.f32.mxu0 0.0
        %1486 = vmatmul.mubr.f32.gmra.mrb[0].mxu0 %v1419
        %v1487 = vpop.f32.mrb[0].mxu0
        %v1488 = vadd.f32 0.0, %v1487
        %v1489 = vpop.f32.mrb[0].mxu0
        %1490 = vdwg.mxu0
        %v1491 = vadd.f32 %v1252, %v1488
        %v1492 = vadd.f32 %v440, %v1491
        %v1493 = vld [vmem:[%s6] sm:$0x1]
        %v1495 = vlaneseq
        %v1496 = vshrl.u32 %v1495, 7
        %v1497 = vsub.s32 0, %v1496
        %v1498 = vrot.slane %v1493, %v1497
        %v1500 = vadd.f32 %v1492, %v1498
        %s1501 = scalar_lea.vmem %s3, 32
        %v1502 = vld [vmem:[%s1501] sm:$0xff]
        %v1503 = vld [vmem:[%s1501 + $0x8] sm:$0xff]
        %v1504 = vld [vmem:[%s1501 + $0x10] sm:$0xff]
        %v1505 = vld [vmem:[%s1501 + $0x18] sm:$0xff]
        %s1506 = scalar_lea.vmem [#allocation7], 1
        %v1507 = vld [vmem:[%s1506] sm:$0x1]
        %s1508 = scalar_lea.vmem [#allocation8], 32
        %v1509 = vld [vmem:[%s1508] sm:$0xff]
        %v1510 = vld [vmem:[%s1508 + $0x8] sm:$0xff]
        %v1511 = vld [vmem:[%s1508 + $0x10] sm:$0xff]
        %v1512 = vld [vmem:[%s1508 + $0x18] sm:$0xff]
        %v1514 = vlaneseq
        %v1515 = vshrl.u32 %v1514, 7
        %v1516 = vsub.s32 0, %v1515
        %v1517 = vrot.slane %v1507, %v1516
        %v1520 = vsel %vm462, %v1500, 0
        %1522 = vmatprep.subr.mxu0 0.0
        %1523 = vmatpush1.msra.mxu0 %v1502
        %1524 = vmatprep.subr.mxu0 0.0
        %1525 = vmatpush1.msra.mxu0 %v1503
        %1526 = vmatprep.subr.mxu0 0.0
        %1527 = vmatpush1.msra.mxu0 %v1504
        %1528 = vmatprep.subr.mxu0 0.0
        %1529 = vmatpush1.msra.mxu0 %v1505
        %1530 = vmatprep.subr.mxu0 0.0
        %1531 = vmatpush1.msra.mxu0 0.0
        %1532 = vmatprep.subr.mxu0 0.0
        %1533 = vmatpush1.msra.mxu0 0.0
        %1534 = vmatprep.subr.mxu0 0.0
        %1535 = vmatpush1.msra.mxu0 0.0
        %1536 = vmatprep.subr.mxu0 0.0
        %1537 = vmatpush1.msra.mxu0 0.0
        %1538 = vmatprep.subr.mxu0 0.0
        %1539 = vmatpush1.msra.mxu0 0.0
        %1540 = vmatprep.subr.mxu0 0.0
        %1541 = vmatpush1.msra.mxu0 0.0
        %1542 = vmatprep.subr.mxu0 0.0
        %1543 = vmatpush1.msra.mxu0 0.0
        %1544 = vmatprep.subr.mxu0 0.0
        %1545 = vmatpush1.msra.mxu0 0.0
        %1546 = vmatprep.subr.mxu0 0.0
        %1547 = vmatpush1.msra.mxu0 0.0
        %1548 = vmatprep.subr.mxu0 0.0
        %1549 = vmatpush1.msra.mxu0 0.0
        %1550 = vmatprep.subr.mxu0 0.0
        %1551 = vmatpush1.msra.mxu0 0.0
        %1552 = vmatprep.subr.mxu0 0.0
        %1553 = vmatpush1.msra.mxu0 0.0
        %1554 = vmatprep.subr.mxu0 0.0
        %1555 = vmatpush1.msra.mxu0 0.0
        %1556 = vmatprep.subr.mxu0 0.0
        %1557 = vmatpush1.msra.mxu0 0.0
        %1558 = vmatprep.subr.mxu0 0.0
        %1559 = vmatpush1.msra.mxu0 0.0
        %1560 = vmatprep.subr.mxu0 0.0
        %1561 = vmatpush1.msra.mxu0 0.0
        %1562 = vmatprep.subr.mxu0 0.0
        %1563 = vmatpush1.msra.mxu0 0.0
        %1564 = vmatprep.subr.mxu0 0.0
        %1565 = vmatpush1.msra.mxu0 0.0
        %1566 = vmatprep.subr.mxu0 0.0
        %1567 = vmatpush1.msra.mxu0 0.0
        %1568 = vmatprep.subr.mxu0 0.0
        %1569 = vmatpush1.msra.mxu0 0.0
        %1570 = vmatprep.subr.mxu0 0.0
        %1571 = vmatpush1.msra.mxu0 0.0
        %1572 = vmatprep.subr.mxu0 0.0
        %1573 = vmatpush1.msra.mxu0 0.0
        %1574 = vmatprep.subr.mxu0 0.0
        %1575 = vmatpush1.msra.mxu0 0.0
        %1576 = vmatprep.subr.mxu0 0.0
        %1577 = vmatpush1.msra.mxu0 0.0
        %1578 = vmatprep.subr.mxu0 0.0
        %1579 = vmatpush1.msra.mxu0 0.0
        %1580 = vmatprep.subr.mxu0 0.0
        %1581 = vmatpush1.msra.mxu0 0.0
        %1582 = vmatprep.subr.mxu0 0.0
        %1583 = vmatpush1.msra.mxu0 0.0
        %1584 = vmatprep.subr.mxu0 0.0
        %1585 = vmatpush1.msra.mxu0 0.0
        %1586 = vmatprep.mubr.f32.mxu0 0.0
        %1587 = vmatmul.mubr.f32.gmra.mrb[0].mxu0 %v1520
        %v1588 = vpop.f32.mrb[0].mxu0
        %v1589 = vadd.f32 %v1517, %v1588
        %v1590 = vpop.f32.mrb[0].mxu0
        %1591 = vdwg.mxu0
        %v1592 = vmul.f32 %v1589, 0.35355338
        %1594 = vrot.lane.b32.xlu0 %v1589, 96
        %v1595 = vpop.permute.xlu0 %1594
        %v1597 = vsel %vm540, %v1592, 0
        %v1599 = vsel %vm540, %v1595, 0
        %1601 = vmatprep.subr.mxu0 0.0
        %1602 = vmatpush1.xpose.msra.mxu0 %v1599
        %1603 = vmatprep.subr.mxu0 0.0
        %1604 = vmatpush1.xpose.msra.mxu0 0.0
        %1605 = vmatprep.subr.mxu0 0.0
        %1606 = vmatpush1.xpose.msra.mxu0 0.0
        %1607 = vmatprep.subr.mxu0 0.0
        %1608 = vmatpush1.xpose.msra.mxu0 0.0
        %1609 = vmatprep.subr.mxu0 0.0
        %1610 = vmatpush1.xpose.msra.mxu0 0.0
        %1611 = vmatprep.subr.mxu0 0.0
        %1612 = vmatpush1.xpose.msra.mxu0 0.0
        %1613 = vmatprep.subr.mxu0 0.0
        %1614 = vmatpush1.xpose.msra.mxu0 0.0
        %1615 = vmatprep.subr.mxu0 0.0
        %1616 = vmatpush1.xpose.msra.mxu0 0.0
        %1617 = vmatprep.subr.mxu0 0.0
        %1618 = vmatpush1.xpose.msra.mxu0 0.0
        %1619 = vmatprep.subr.mxu0 0.0
        %1620 = vmatpush1.xpose.msra.mxu0 0.0
        %1621 = vmatprep.subr.mxu0 0.0
        %1622 = vmatpush1.xpose.msra.mxu0 0.0
        %1623 = vmatprep.subr.mxu0 0.0
        %1624 = vmatpush1.xpose.msra.mxu0 0.0
        %1625 = vmatprep.subr.mxu0 0.0
        %1626 = vmatpush1.xpose.msra.mxu0 0.0
        %1627 = vmatprep.subr.mxu0 0.0
        %1628 = vmatpush1.xpose.msra.mxu0 0.0
        %1629 = vmatprep.subr.mxu0 0.0
        %1630 = vmatpush1.xpose.msra.mxu0 0.0
        %1631 = vmatprep.subr.mxu0 0.0
        %1632 = vmatpush1.xpose.msra.mxu0 0.0
        %1633 = vmatprep.subr.mxu0 0.0
        %1634 = vmatpush1.xpose.msra.mxu0 0.0
        %1635 = vmatprep.subr.mxu0 0.0
        %1636 = vmatpush1.xpose.msra.mxu0 0.0
        %1637 = vmatprep.subr.mxu0 0.0
        %1638 = vmatpush1.xpose.msra.mxu0 0.0
        %1639 = vmatprep.subr.mxu0 0.0
        %1640 = vmatpush1.xpose.msra.mxu0 0.0
        %1641 = vmatprep.subr.mxu0 0.0
        %1642 = vmatpush1.xpose.msra.mxu0 0.0
        %1643 = vmatprep.subr.mxu0 0.0
        %1644 = vmatpush1.xpose.msra.mxu0 0.0
        %1645 = vmatprep.subr.mxu0 0.0
        %1646 = vmatpush1.xpose.msra.mxu0 0.0
        %1647 = vmatprep.subr.mxu0 0.0
        %1648 = vmatpush1.xpose.msra.mxu0 0.0
        %1649 = vmatprep.subr.mxu0 0.0
        %1650 = vmatpush1.xpose.msra.mxu0 0.0
        %1651 = vmatprep.subr.mxu0 0.0
        %1652 = vmatpush1.xpose.msra.mxu0 0.0
        %1653 = vmatprep.subr.mxu0 0.0
        %1654 = vmatpush1.xpose.msra.mxu0 0.0
        %1655 = vmatprep.subr.mxu0 0.0
        %1656 = vmatpush1.xpose.msra.mxu0 0.0
        %1657 = vmatprep.subr.mxu0 0.0
        %1658 = vmatpush1.xpose.msra.mxu0 0.0
        %1659 = vmatprep.subr.mxu0 0.0
        %1660 = vmatpush1.xpose.msra.mxu0 0.0
        %1661 = vmatprep.subr.mxu0 0.0
        %1662 = vmatpush1.xpose.msra.mxu0 0.0
        %1663 = vmatprep.subr.mxu0 0.0
        %1664 = vmatpush1.xpose.msra.mxu0 0.0
        %1665 = vmatprep.mubr.f32.mxu0 0.0
        %1666 = vmatmul.mubr.f32.gmra.mrb[0].mxu0 %v1597
        %v1667 = vpop.f32.mrb[0].mxu0
        %v1668 = vadd.f32 %v446, %v1667
        %v1669 = vpop.f32.mrb[0].mxu0
        %1670 = vdwg.mxu0
        %v1671 = vsel %vm540, %v1668, -inf
        %1672 = vmax.xlane.f32.xlu0 %v1671
        %v1673 = vpop.xlane.xlu0 %1672
        %v1674 = vsub.f32 %v1668, %v1673
        %v1675 = vmul.f32 %v1674, 1.442695
        %v1676 = vpow.pop %v1675
        %v1677 = vsel %vm540, %v1676, 0.0
        %1678 = vadd.xlane.f32.xlu0 %v1677
        %v1679 = vpop.xlane.xlu0 %1678
        %1680 = vrot.lane.b32.xlu0 %v1589, 64
        %v1681 = vpop.permute.xlu0 %1680
        %v1684 = vsel %vm540, %v1676, 0
        %1686 = vmatprep.subr.mxu0 0.0
        %1687 = vmatpush1.msra.mxu0 %v1681
        %1688 = vmatprep.subr.mxu0 0.0
        %1689 = vmatpush1.msra.mxu0 0.0
        %1690 = vmatprep.subr.mxu0 0.0
        %1691 = vmatpush1.msra.mxu0 0.0
        %1692 = vmatprep.subr.mxu0 0.0
        %1693 = vmatpush1.msra.mxu0 0.0
        %1694 = vmatprep.subr.mxu0 0.0
        %1695 = vmatpush1.msra.mxu0 0.0
        %1696 = vmatprep.subr.mxu0 0.0
        %1697 = vmatpush1.msra.mxu0 0.0
        %1698 = vmatprep.subr.mxu0 0.0
        %1699 = vmatpush1.msra.mxu0 0.0
        %1700 = vmatprep.subr.mxu0 0.0
        %1701 = vmatpush1.msra.mxu0 0.0
        %1702 = vmatprep.subr.mxu0 0.0
        %1703 = vmatpush1.msra.mxu0 0.0
        %1704 = vmatprep.subr.mxu0 0.0
        %1705 = vmatpush1.msra.mxu0 0.0
        %1706 = vmatprep.subr.mxu0 0.0
        %1707 = vmatpush1.msra.mxu0 0.0
        %1708 = vmatprep.subr.mxu0 0.0
        %1709 = vmatpush1.msra.mxu0 0.0
        %1710 = vmatprep.subr.mxu0 0.0
        %1711 = vmatpush1.msra.mxu0 0.0
        %1712 = vmatprep.subr.mxu0 0.0
        %1713 = vmatpush1.msra.mxu0 0.0
        %1714 = vmatprep.subr.mxu0 0.0
        %1715 = vmatpush1.msra.mxu0 0.0
        %1716 = vmatprep.subr.mxu0 0.0
        %1717 = vmatpush1.msra.mxu0 0.0
        %1718 = vmatprep.subr.mxu0 0.0
        %1719 = vmatpush1.msra.mxu0 0.0
        %1720 = vmatprep.subr.mxu0 0.0
        %1721 = vmatpush1.msra.mxu0 0.0
        %1722 = vmatprep.subr.mxu0 0.0
        %1723 = vmatpush1.msra.mxu0 0.0
        %1724 = vmatprep.subr.mxu0 0.0
        %1725 = vmatpush1.msra.mxu0 0.0
        %1726 = vmatprep.subr.mxu0 0.0
        %1727 = vmatpush1.msra.mxu0 0.0
        %1728 = vmatprep.subr.mxu0 0.0
        %1729 = vmatpush1.msra.mxu0 0.0
        %1730 = vmatprep.subr.mxu0 0.0
        %1731 = vmatpush1.msra.mxu0 0.0
        %1732 = vmatprep.subr.mxu0 0.0
        %1733 = vmatpush1.msra.mxu0 0.0
        %1734 = vmatprep.subr.mxu0 0.0
        %1735 = vmatpush1.msra.mxu0 0.0
        %1736 = vmatprep.subr.mxu0 0.0
        %1737 = vmatpush1.msra.mxu0 0.0
        %1738 = vmatprep.subr.mxu0 0.0
        %1739 = vmatpush1.msra.mxu0 0.0
        %1740 = vmatprep.subr.mxu0 0.0
        %1741 = vmatpush1.msra.mxu0 0.0
        %1742 = vmatprep.subr.mxu0 0.0
        %1743 = vmatpush1.msra.mxu0 0.0
        %1744 = vmatprep.subr.mxu0 0.0
        %1745 = vmatpush1.msra.mxu0 0.0
        %1746 = vmatprep.subr.mxu0 0.0
        %1747 = vmatpush1.msra.mxu0 0.0
        %1748 = vmatprep.subr.mxu0 0.0
        %1749 = vmatpush1.msra.mxu0 0.0
        %1750 = vmatprep.mubr.f32.mxu0 0.0
        %1751 = vmatmul.mubr.f32.gmra.mrb[0].mxu0 %v1684
        %v1752 = vpop.f32.mrb[0].mxu0
        %v1753 = vadd.f32 0.0, %v1752
        %v1754 = vpop.f32.mrb[0].mxu0
        %1755 = vdwg.mxu0
        %v1756 = vrcp.pop %v1679
        %v1757 = vmul.f32 %v1753, %v1756
        %1758 = vrot.lane.b32.xlu0 %v1592, 120
        %v1759 = vpop.permute.xlu0 %1758
        %1760 = vrot.lane.b32.xlu0 %v1589, 88
        %v1761 = vpop.permute.xlu0 %1760
        %v1762 = vsel %vm540, %v1759, 0
        %v1764 = vsel %vm540, %v1761, 0
        %1766 = vmatprep.subr.mxu0 0.0
        %1767 = vmatpush1.xpose.msra.mxu0 %v1764
        %1768 = vmatprep.subr.mxu0 0.0
        %1769 = vmatpush1.xpose.msra.mxu0 0.0
        %1770 = vmatprep.subr.mxu0 0.0
        %1771 = vmatpush1.xpose.msra.mxu0 0.0
        %1772 = vmatprep.subr.mxu0 0.0
        %1773 = vmatpush1.xpose.msra.mxu0 0.0
        %1774 = vmatprep.subr.mxu0 0.0
        %1775 = vmatpush1.xpose.msra.mxu0 0.0
        %1776 = vmatprep.subr.mxu0 0.0
        %1777 = vmatpush1.xpose.msra.mxu0 0.0
        %1778 = vmatprep.subr.mxu0 0.0
        %1779 = vmatpush1.xpose.msra.mxu0 0.0
        %1780 = vmatprep.subr.mxu0 0.0
        %1781 = vmatpush1.xpose.msra.mxu0 0.0
        %1782 = vmatprep.subr.mxu0 0.0
        %1783 = vmatpush1.xpose.msra.mxu0 0.0
        %1784 = vmatprep.subr.mxu0 0.0
        %1785 = vmatpush1.xpose.msra.mxu0 0.0
        %1786 = vmatprep.subr.mxu0 0.0
        %1787 = vmatpush1.xpose.msra.mxu0 0.0
        %1788 = vmatprep.subr.mxu0 0.0
        %1789 = vmatpush1.xpose.msra.mxu0 0.0
        %1790 = vmatprep.subr.mxu0 0.0
        %1791 = vmatpush1.xpose.msra.mxu0 0.0
        %1792 = vmatprep.subr.mxu0 0.0
        %1793 = vmatpush1.xpose.msra.mxu0 0.0
        %1794 = vmatprep.subr.mxu0 0.0
        %1795 = vmatpush1.xpose.msra.mxu0 0.0
        %1796 = vmatprep.subr.mxu0 0.0
        %1797 = vmatpush1.xpose.msra.mxu0 0.0
        %1798 = vmatprep.subr.mxu0 0.0
        %1799 = vmatpush1.xpose.msra.mxu0 0.0
        %1800 = vmatprep.subr.mxu0 0.0
        %1801 = vmatpush1.xpose.msra.mxu0 0.0
        %1802 = vmatprep.subr.mxu0 0.0
        %1803 = vmatpush1.xpose.msra.mxu0 0.0
        %1804 = vmatprep.subr.mxu0 0.0
        %1805 = vmatpush1.xpose.msra.mxu0 0.0
        %1806 = vmatprep.subr.mxu0 0.0
        %1807 = vmatpush1.xpose.msra.mxu0 0.0
        %1808 = vmatprep.subr.mxu0 0.0
        %1809 = vmatpush1.xpose.msra.mxu0 0.0
        %1810 = vmatprep.subr.mxu0 0.0
        %1811 = vmatpush1.xpose.msra.mxu0 0.0
        %1812 = vmatprep.subr.mxu0 0.0
        %1813 = vmatpush1.xpose.msra.mxu0 0.0
        %1814 = vmatprep.subr.mxu0 0.0
        %1815 = vmatpush1.xpose.msra.mxu0 0.0
        %1816 = vmatprep.subr.mxu0 0.0
        %1817 = vmatpush1.xpose.msra.mxu0 0.0
        %1818 = vmatprep.subr.mxu0 0.0
        %1819 = vmatpush1.xpose.msra.mxu0 0.0
        %1820 = vmatprep.subr.mxu0 0.0
        %1821 = vmatpush1.xpose.msra.mxu0 0.0
        %1822 = vmatprep.subr.mxu0 0.0
        %1823 = vmatpush1.xpose.msra.mxu0 0.0
        %1824 = vmatprep.subr.mxu0 0.0
        %1825 = vmatpush1.xpose.msra.mxu0 0.0
        %1826 = vmatprep.subr.mxu0 0.0
        %1827 = vmatpush1.xpose.msra.mxu0 0.0
        %1828 = vmatprep.subr.mxu0 0.0
        %1829 = vmatpush1.xpose.msra.mxu0 0.0
        %1830 = vmatprep.mubr.f32.mxu0 0.0
        %1831 = vmatmul.mubr.f32.gmra.mrb[0].mxu0 %v1762
        %v1832 = vpop.f32.mrb[0].mxu0
        %v1833 = vadd.f32 %v446, %v1832
        %v1834 = vpop.f32.mrb[0].mxu0
        %1835 = vdwg.mxu0
        %v1836 = vsel %vm540, %v1833, -inf
        %1837 = vmax.xlane.f32.xlu0 %v1836
        %v1838 = vpop.xlane.xlu0 %1837
        %v1839 = vsub.f32 %v1833, %v1838
        %v1840 = vmul.f32 %v1839, 1.442695
        %v1841 = vpow.pop %v1840
        %v1842 = vsel %vm540, %v1841, 0.0
        %1843 = vadd.xlane.f32.xlu0 %v1842
        %v1844 = vpop.xlane.xlu0 %1843
        %1845 = vrot.lane.b32.xlu0 %v1589, 56
        %v1846 = vpop.permute.xlu0 %1845
        %v1849 = vsel %vm540, %v1841, 0
        %1851 = vmatprep.subr.mxu0 0.0
        %1852 = vmatpush1.msra.mxu0 %v1846
        %1853 = vmatprep.subr.mxu0 0.0
        %1854 = vmatpush1.msra.mxu0 0.0
        %1855 = vmatprep.subr.mxu0 0.0
        %1856 = vmatpush1.msra.mxu0 0.0
        %1857 = vmatprep.subr.mxu0 0.0
        %1858 = vmatpush1.msra.mxu0 0.0
        %1859 = vmatprep.subr.mxu0 0.0
        %1860 = vmatpush1.msra.mxu0 0.0
        %1861 = vmatprep.subr.mxu0 0.0
        %1862 = vmatpush1.msra.mxu0 0.0
        %1863 = vmatprep.subr.mxu0 0.0
        %1864 = vmatpush1.msra.mxu0 0.0
        %1865 = vmatprep.subr.mxu0 0.0
        %1866 = vmatpush1.msra.mxu0 0.0
        %1867 = vmatprep.subr.mxu0 0.0
        %1868 = vmatpush1.msra.mxu0 0.0
        %1869 = vmatprep.subr.mxu0 0.0
        %1870 = vmatpush1.msra.mxu0 0.0
        %1871 = vmatprep.subr.mxu0 0.0
        %1872 = vmatpush1.msra.mxu0 0.0
        %1873 = vmatprep.subr.mxu0 0.0
        %1874 = vmatpush1.msra.mxu0 0.0
        %1875 = vmatprep.subr.mxu0 0.0
        %1876 = vmatpush1.msra.mxu0 0.0
        %1877 = vmatprep.subr.mxu0 0.0
        %1878 = vmatpush1.msra.mxu0 0.0
        %1879 = vmatprep.subr.mxu0 0.0
        %1880 = vmatpush1.msra.mxu0 0.0
        %1881 = vmatprep.subr.mxu0 0.0
        %1882 = vmatpush1.msra.mxu0 0.0
        %1883 = vmatprep.subr.mxu0 0.0
        %1884 = vmatpush1.msra.mxu0 0.0
        %1885 = vmatprep.subr.mxu0 0.0
        %1886 = vmatpush1.msra.mxu0 0.0
        %1887 = vmatprep.subr.mxu0 0.0
        %1888 = vmatpush1.msra.mxu0 0.0
        %1889 = vmatprep.subr.mxu0 0.0
        %1890 = vmatpush1.msra.mxu0 0.0
        %1891 = vmatprep.subr.mxu0 0.0
        %1892 = vmatpush1.msra.mxu0 0.0
        %1893 = vmatprep.subr.mxu0 0.0
        %1894 = vmatpush1.msra.mxu0 0.0
        %1895 = vmatprep.subr.mxu0 0.0
        %1896 = vmatpush1.msra.mxu0 0.0
        %1897 = vmatprep.subr.mxu0 0.0
        %1898 = vmatpush1.msra.mxu0 0.0
        %1899 = vmatprep.subr.mxu0 0.0
        %1900 = vmatpush1.msra.mxu0 0.0
        %1901 = vmatprep.subr.mxu0 0.0
        %1902 = vmatpush1.msra.mxu0 0.0
        %1903 = vmatprep.subr.mxu0 0.0
        %1904 = vmatpush1.msra.mxu0 0.0
        %1905 = vmatprep.subr.mxu0 0.0
        %1906 = vmatpush1.msra.mxu0 0.0
        %1907 = vmatprep.subr.mxu0 0.0
        %1908 = vmatpush1.msra.mxu0 0.0
        %1909 = vmatprep.subr.mxu0 0.0
        %1910 = vmatpush1.msra.mxu0 0.0
        %1911 = vmatprep.subr.mxu0 0.0
        %1912 = vmatpush1.msra.mxu0 0.0
        %1913 = vmatprep.subr.mxu0 0.0
        %1914 = vmatpush1.msra.mxu0 0.0
        %1915 = vmatprep.mubr.f32.mxu0 0.0
        %1916 = vmatmul.mubr.f32.gmra.mrb[0].mxu0 %v1849
        %v1917 = vpop.f32.mrb[0].mxu0
        %v1918 = vadd.f32 0.0, %v1917
        %v1919 = vpop.f32.mrb[0].mxu0
        %1920 = vdwg.mxu0
        %v1921 = vrcp.pop %v1844
        %v1922 = vmul.f32 %v1918, %v1921
        %v1924 = vsel %vm540, %v1922, 0
        %1926 = vmatprep.subr.mxu0 0.0
        %1927 = vmatpush1.msra.mxu0 %v1510
        %1928 = vmatprep.subr.mxu0 0.0
        %1929 = vmatpush1.msra.mxu0 0.0
        %1930 = vmatprep.subr.mxu0 0.0
        %1931 = vmatpush1.msra.mxu0 0.0
        %1932 = vmatprep.subr.mxu0 0.0
        %1933 = vmatpush1.msra.mxu0 0.0
        %1934 = vmatprep.subr.mxu0 0.0
        %1935 = vmatpush1.msra.mxu0 0.0
        %1936 = vmatprep.subr.mxu0 0.0
        %1937 = vmatpush1.msra.mxu0 0.0
        %1938 = vmatprep.subr.mxu0 0.0
        %1939 = vmatpush1.msra.mxu0 0.0
        %1940 = vmatprep.subr.mxu0 0.0
        %1941 = vmatpush1.msra.mxu0 0.0
        %1942 = vmatprep.subr.mxu0 0.0
        %1943 = vmatpush1.msra.mxu0 0.0
        %1944 = vmatprep.subr.mxu0 0.0
        %1945 = vmatpush1.msra.mxu0 0.0
        %1946 = vmatprep.subr.mxu0 0.0
        %1947 = vmatpush1.msra.mxu0 0.0
        %1948 = vmatprep.subr.mxu0 0.0
        %1949 = vmatpush1.msra.mxu0 0.0
        %1950 = vmatprep.subr.mxu0 0.0
        %1951 = vmatpush1.msra.mxu0 0.0
        %1952 = vmatprep.subr.mxu0 0.0
        %1953 = vmatpush1.msra.mxu0 0.0
        %1954 = vmatprep.subr.mxu0 0.0
        %1955 = vmatpush1.msra.mxu0 0.0
        %1956 = vmatprep.subr.mxu0 0.0
        %1957 = vmatpush1.msra.mxu0 0.0
        %1958 = vmatprep.subr.mxu0 0.0
        %1959 = vmatpush1.msra.mxu0 0.0
        %1960 = vmatprep.subr.mxu0 0.0
        %1961 = vmatpush1.msra.mxu0 0.0
        %1962 = vmatprep.subr.mxu0 0.0
        %1963 = vmatpush1.msra.mxu0 0.0
        %1964 = vmatprep.subr.mxu0 0.0
        %1965 = vmatpush1.msra.mxu0 0.0
        %1966 = vmatprep.subr.mxu0 0.0
        %1967 = vmatpush1.msra.mxu0 0.0
        %1968 = vmatprep.subr.mxu0 0.0
        %1969 = vmatpush1.msra.mxu0 0.0
        %1970 = vmatprep.subr.mxu0 0.0
        %1971 = vmatpush1.msra.mxu0 0.0
        %1972 = vmatprep.subr.mxu0 0.0
        %1973 = vmatpush1.msra.mxu0 0.0
        %1974 = vmatprep.subr.mxu0 0.0
        %1975 = vmatpush1.msra.mxu0 0.0
        %1976 = vmatprep.subr.mxu0 0.0
        %1977 = vmatpush1.msra.mxu0 0.0
        %1978 = vmatprep.subr.mxu0 0.0
        %1979 = vmatpush1.msra.mxu0 0.0
        %1980 = vmatprep.subr.mxu0 0.0
        %1981 = vmatpush1.msra.mxu0 0.0
        %1982 = vmatprep.subr.mxu0 0.0
        %1983 = vmatpush1.msra.mxu0 0.0
        %1984 = vmatprep.subr.mxu0 0.0
        %1985 = vmatpush1.msra.mxu0 0.0
        %1986 = vmatprep.subr.mxu0 0.0
        %1987 = vmatpush1.msra.mxu0 0.0
        %1988 = vmatprep.subr.mxu0 0.0
        %1989 = vmatpush1.msra.mxu0 0.0
        %1990 = vmatprep.mubr.f32.mxu0 0.0
        %1991 = vmatmul.mubr.f32.gmra.mrb[0].mxu0 %v1924
        %v1992 = vpop.f32.mrb[0].mxu0
        %v1993 = vadd.f32 0.0, %v1992
        %v1994 = vpop.f32.mrb[0].mxu0
        %1995 = vdwg.mxu0
        %v1997 = vsel %vm540, %v1757, 0
        %1999 = vmatprep.subr.mxu0 0.0
        %2000 = vmatpush1.msra.mxu0 %v1509
        %2001 = vmatprep.subr.mxu0 0.0
        %2002 = vmatpush1.msra.mxu0 0.0
        %2003 = vmatprep.subr.mxu0 0.0
        %2004 = vmatpush1.msra.mxu0 0.0
        %2005 = vmatprep.subr.mxu0 0.0
        %2006 = vmatpush1.msra.mxu0 0.0
        %2007 = vmatprep.subr.mxu0 0.0
        %2008 = vmatpush1.msra.mxu0 0.0
        %2009 = vmatprep.subr.mxu0 0.0
        %2010 = vmatpush1.msra.mxu0 0.0
        %2011 = vmatprep.subr.mxu0 0.0
        %2012 = vmatpush1.msra.mxu0 0.0
        %2013 = vmatprep.subr.mxu0 0.0
        %2014 = vmatpush1.msra.mxu0 0.0
        %2015 = vmatprep.subr.mxu0 0.0
        %2016 = vmatpush1.msra.mxu0 0.0
        %2017 = vmatprep.subr.mxu0 0.0
        %2018 = vmatpush1.msra.mxu0 0.0
        %2019 = vmatprep.subr.mxu0 0.0
        %2020 = vmatpush1.msra.mxu0 0.0
        %2021 = vmatprep.subr.mxu0 0.0
        %2022 = vmatpush1.msra.mxu0 0.0
        %2023 = vmatprep.subr.mxu0 0.0
        %2024 = vmatpush1.msra.mxu0 0.0
        %2025 = vmatprep.subr.mxu0 0.0
        %2026 = vmatpush1.msra.mxu0 0.0
        %2027 = vmatprep.subr.mxu0 0.0
        %2028 = vmatpush1.msra.mxu0 0.0
        %2029 = vmatprep.subr.mxu0 0.0
        %2030 = vmatpush1.msra.mxu0 0.0
        %2031 = vmatprep.subr.mxu0 0.0
        %2032 = vmatpush1.msra.mxu0 0.0
        %2033 = vmatprep.subr.mxu0 0.0
        %2034 = vmatpush1.msra.mxu0 0.0
        %2035 = vmatprep.subr.mxu0 0.0
        %2036 = vmatpush1.msra.mxu0 0.0
        %2037 = vmatprep.subr.mxu0 0.0
        %2038 = vmatpush1.msra.mxu0 0.0
        %2039 = vmatprep.subr.mxu0 0.0
        %2040 = vmatpush1.msra.mxu0 0.0
        %2041 = vmatprep.subr.mxu0 0.0
        %2042 = vmatpush1.msra.mxu0 0.0
        %2043 = vmatprep.subr.mxu0 0.0
        %2044 = vmatpush1.msra.mxu0 0.0
        %2045 = vmatprep.subr.mxu0 0.0
        %2046 = vmatpush1.msra.mxu0 0.0
        %2047 = vmatprep.subr.mxu0 0.0
        %2048 = vmatpush1.msra.mxu0 0.0
        %2049 = vmatprep.subr.mxu0 0.0
        %2050 = vmatpush1.msra.mxu0 0.0
        %2051 = vmatprep.subr.mxu0 0.0
        %2052 = vmatpush1.msra.mxu0 0.0
        %2053 = vmatprep.subr.mxu0 0.0
        %2054 = vmatpush1.msra.mxu0 0.0
        %2055 = vmatprep.subr.mxu0 0.0
        %2056 = vmatpush1.msra.mxu0 0.0
        %2057 = vmatprep.subr.mxu0 0.0
        %2058 = vmatpush1.msra.mxu0 0.0
        %2059 = vmatprep.subr.mxu0 0.0
        %2060 = vmatpush1.msra.mxu0 0.0
        %2061 = vmatprep.subr.mxu0 0.0
        %2062 = vmatpush1.msra.mxu0 0.0
        %2063 = vmatprep.mubr.f32.mxu0 0.0
        %2064 = vmatmul.mubr.f32.gmra.mrb[0].mxu0 %v1997
        %v2065 = vpop.f32.mrb[0].mxu0
        %v2066 = vadd.f32 %v1993, %v2065
        %v2067 = vpop.f32.mrb[0].mxu0
        %2068 = vdwg.mxu0
        %2069 = vrot.lane.b32.xlu0 %v1592, 112
        %v2070 = vpop.permute.xlu0 %2069
        %2071 = vrot.lane.b32.xlu0 %v1589, 80
        %v2072 = vpop.permute.xlu0 %2071
        %v2073 = vsel %vm540, %v2070, 0
        %v2075 = vsel %vm540, %v2072, 0
        %2077 = vmatprep.subr.mxu0 0.0
        %2078 = vmatpush1.xpose.msra.mxu0 %v2075
        %2079 = vmatprep.subr.mxu0 0.0
        %2080 = vmatpush1.xpose.msra.mxu0 0.0
        %2081 = vmatprep.subr.mxu0 0.0
        %2082 = vmatpush1.xpose.msra.mxu0 0.0
        %2083 = vmatprep.subr.mxu0 0.0
        %2084 = vmatpush1.xpose.msra.mxu0 0.0
        %2085 = vmatprep.subr.mxu0 0.0
        %2086 = vmatpush1.xpose.msra.mxu0 0.0
        %2087 = vmatprep.subr.mxu0 0.0
        %2088 = vmatpush1.xpose.msra.mxu0 0.0
        %2089 = vmatprep.subr.mxu0 0.0
        %2090 = vmatpush1.xpose.msra.mxu0 0.0
        %2091 = vmatprep.subr.mxu0 0.0
        %2092 = vmatpush1.xpose.msra.mxu0 0.0
        %2093 = vmatprep.subr.mxu0 0.0
        %2094 = vmatpush1.xpose.msra.mxu0 0.0
        %2095 = vmatprep.subr.mxu0 0.0
        %2096 = vmatpush1.xpose.msra.mxu0 0.0
        %2097 = vmatprep.subr.mxu0 0.0
        %2098 = vmatpush1.xpose.msra.mxu0 0.0
        %2099 = vmatprep.subr.mxu0 0.0
        %2100 = vmatpush1.xpose.msra.mxu0 0.0
        %2101 = vmatprep.subr.mxu0 0.0
        %2102 = vmatpush1.xpose.msra.mxu0 0.0
        %2103 = vmatprep.subr.mxu0 0.0
        %2104 = vmatpush1.xpose.msra.mxu0 0.0
        %2105 = vmatprep.subr.mxu0 0.0
        %2106 = vmatpush1.xpose.msra.mxu0 0.0
        %2107 = vmatprep.subr.mxu0 0.0
        %2108 = vmatpush1.xpose.msra.mxu0 0.0
        %2109 = vmatprep.subr.mxu0 0.0
        %2110 = vmatpush1.xpose.msra.mxu0 0.0
        %2111 = vmatprep.subr.mxu0 0.0
        %2112 = vmatpush1.xpose.msra.mxu0 0.0
        %2113 = vmatprep.subr.mxu0 0.0
        %2114 = vmatpush1.xpose.msra.mxu0 0.0
        %2115 = vmatprep.subr.mxu0 0.0
        %2116 = vmatpush1.xpose.msra.mxu0 0.0
        %2117 = vmatprep.subr.mxu0 0.0
        %2118 = vmatpush1.xpose.msra.mxu0 0.0
        %2119 = vmatprep.subr.mxu0 0.0
        %2120 = vmatpush1.xpose.msra.mxu0 0.0
        %2121 = vmatprep.subr.mxu0 0.0
        %2122 = vmatpush1.xpose.msra.mxu0 0.0
        %2123 = vmatprep.subr.mxu0 0.0
        %2124 = vmatpush1.xpose.msra.mxu0 0.0
        %2125 = vmatprep.subr.mxu0 0.0
        %2126 = vmatpush1.xpose.msra.mxu0 0.0
        %2127 = vmatprep.subr.mxu0 0.0
        %2128 = vmatpush1.xpose.msra.mxu0 0.0
        %2129 = vmatprep.subr.mxu0 0.0
        %2130 = vmatpush1.xpose.msra.mxu0 0.0
        %2131 = vmatprep.subr.mxu0 0.0
        %2132 = vmatpush1.xpose.msra.mxu0 0.0
        %2133 = vmatprep.subr.mxu0 0.0
        %2134 = vmatpush1.xpose.msra.mxu0 0.0
        %2135 = vmatprep.subr.mxu0 0.0
        %2136 = vmatpush1.xpose.msra.mxu0 0.0
        %2137 = vmatprep.subr.mxu0 0.0
        %2138 = vmatpush1.xpose.msra.mxu0 0.0
        %2139 = vmatprep.subr.mxu0 0.0
        %2140 = vmatpush1.xpose.msra.mxu0 0.0
        %2141 = vmatprep.mubr.f32.mxu0 0.0
        %2142 = vmatmul.mubr.f32.gmra.mrb[0].mxu0 %v2073
        %v2143 = vpop.f32.mrb[0].mxu0
        %v2144 = vadd.f32 %v446, %v2143
        %v2145 = vpop.f32.mrb[0].mxu0
        %2146 = vdwg.mxu0
        %v2147 = vsel %vm540, %v2144, -inf
        %2148 = vmax.xlane.f32.xlu0 %v2147
        %v2149 = vpop.xlane.xlu0 %2148
        %v2150 = vsub.f32 %v2144, %v2149
        %v2151 = vmul.f32 %v2150, 1.442695
        %v2152 = vpow.pop %v2151
        %v2153 = vsel %vm540, %v2152, 0.0
        %2154 = vadd.xlane.f32.xlu0 %v2153
        %v2155 = vpop.xlane.xlu0 %2154
        %2156 = vrot.lane.b32.xlu0 %v1589, 48
        %v2157 = vpop.permute.xlu0 %2156
        %v2160 = vsel %vm540, %v2152, 0
        %2162 = vmatprep.subr.mxu0 0.0
        %2163 = vmatpush1.msra.mxu0 %v2157
        %2164 = vmatprep.subr.mxu0 0.0
        %2165 = vmatpush1.msra.mxu0 0.0
        %2166 = vmatprep.subr.mxu0 0.0
        %2167 = vmatpush1.msra.mxu0 0.0
        %2168 = vmatprep.subr.mxu0 0.0
        %2169 = vmatpush1.msra.mxu0 0.0
        %2170 = vmatprep.subr.mxu0 0.0
        %2171 = vmatpush1.msra.mxu0 0.0
        %2172 = vmatprep.subr.mxu0 0.0
        %2173 = vmatpush1.msra.mxu0 0.0
        %2174 = vmatprep.subr.mxu0 0.0
        %2175 = vmatpush1.msra.mxu0 0.0
        %2176 = vmatprep.subr.mxu0 0.0
        %2177 = vmatpush1.msra.mxu0 0.0
        %2178 = vmatprep.subr.mxu0 0.0
        %2179 = vmatpush1.msra.mxu0 0.0
        %2180 = vmatprep.subr.mxu0 0.0
        %2181 = vmatpush1.msra.mxu0 0.0
        %2182 = vmatprep.subr.mxu0 0.0
        %2183 = vmatpush1.msra.mxu0 0.0
        %2184 = vmatprep.subr.mxu0 0.0
        %2185 = vmatpush1.msra.mxu0 0.0
        %2186 = vmatprep.subr.mxu0 0.0
        %2187 = vmatpush1.msra.mxu0 0.0
        %2188 = vmatprep.subr.mxu0 0.0
        %2189 = vmatpush1.msra.mxu0 0.0
        %2190 = vmatprep.subr.mxu0 0.0
        %2191 = vmatpush1.msra.mxu0 0.0
        %2192 = vmatprep.subr.mxu0 0.0
        %2193 = vmatpush1.msra.mxu0 0.0
        %2194 = vmatprep.subr.mxu0 0.0
        %2195 = vmatpush1.msra.mxu0 0.0
        %2196 = vmatprep.subr.mxu0 0.0
        %2197 = vmatpush1.msra.mxu0 0.0
        %2198 = vmatprep.subr.mxu0 0.0
        %2199 = vmatpush1.msra.mxu0 0.0
        %2200 = vmatprep.subr.mxu0 0.0
        %2201 = vmatpush1.msra.mxu0 0.0
        %2202 = vmatprep.subr.mxu0 0.0
        %2203 = vmatpush1.msra.mxu0 0.0
        %2204 = vmatprep.subr.mxu0 0.0
        %2205 = vmatpush1.msra.mxu0 0.0
        %2206 = vmatprep.subr.mxu0 0.0
        %2207 = vmatpush1.msra.mxu0 0.0
        %2208 = vmatprep.subr.mxu0 0.0
        %2209 = vmatpush1.msra.mxu0 0.0
        %2210 = vmatprep.subr.mxu0 0.0
        %2211 = vmatpush1.msra.mxu0 0.0
        %2212 = vmatprep.subr.mxu0 0.0
        %2213 = vmatpush1.msra.mxu0 0.0
        %2214 = vmatprep.subr.mxu0 0.0
        %2215 = vmatpush1.msra.mxu0 0.0
        %2216 = vmatprep.subr.mxu0 0.0
        %2217 = vmatpush1.msra.mxu0 0.0
        %2218 = vmatprep.subr.mxu0 0.0
        %2219 = vmatpush1.msra.mxu0 0.0
        %2220 = vmatprep.subr.mxu0 0.0
        %2221 = vmatpush1.msra.mxu0 0.0
        %2222 = vmatprep.subr.mxu0 0.0
        %2223 = vmatpush1.msra.mxu0 0.0
        %2224 = vmatprep.subr.mxu0 0.0
        %2225 = vmatpush1.msra.mxu0 0.0
        %2226 = vmatprep.mubr.f32.mxu0 0.0
        %2227 = vmatmul.mubr.f32.gmra.mrb[0].mxu0 %v2160
        %v2228 = vpop.f32.mrb[0].mxu0
        %v2229 = vadd.f32 0.0, %v2228
        %v2230 = vpop.f32.mrb[0].mxu0
        %2231 = vdwg.mxu0
        %v2232 = vrcp.pop %v2155
        %v2233 = vmul.f32 %v2229, %v2232
        %v2235 = vsel %vm540, %v2233, 0
        %2237 = vmatprep.subr.mxu0 0.0
        %2238 = vmatpush1.msra.mxu0 %v1511
        %2239 = vmatprep.subr.mxu0 0.0
        %2240 = vmatpush1.msra.mxu0 0.0
        %2241 = vmatprep.subr.mxu0 0.0
        %2242 = vmatpush1.msra.mxu0 0.0
        %2243 = vmatprep.subr.mxu0 0.0
        %2244 = vmatpush1.msra.mxu0 0.0
        %2245 = vmatprep.subr.mxu0 0.0
        %2246 = vmatpush1.msra.mxu0 0.0
        %2247 = vmatprep.subr.mxu0 0.0
        %2248 = vmatpush1.msra.mxu0 0.0
        %2249 = vmatprep.subr.mxu0 0.0
        %2250 = vmatpush1.msra.mxu0 0.0
        %2251 = vmatprep.subr.mxu0 0.0
        %2252 = vmatpush1.msra.mxu0 0.0
        %2253 = vmatprep.subr.mxu0 0.0
        %2254 = vmatpush1.msra.mxu0 0.0
        %2255 = vmatprep.subr.mxu0 0.0
        %2256 = vmatpush1.msra.mxu0 0.0
        %2257 = vmatprep.subr.mxu0 0.0
        %2258 = vmatpush1.msra.mxu0 0.0
        %2259 = vmatprep.subr.mxu0 0.0
        %2260 = vmatpush1.msra.mxu0 0.0
        %2261 = vmatprep.subr.mxu0 0.0
        %2262 = vmatpush1.msra.mxu0 0.0
        %2263 = vmatprep.subr.mxu0 0.0
        %2264 = vmatpush1.msra.mxu0 0.0
        %2265 = vmatprep.subr.mxu0 0.0
        %2266 = vmatpush1.msra.mxu0 0.0
        %2267 = vmatprep.subr.mxu0 0.0
        %2268 = vmatpush1.msra.mxu0 0.0
        %2269 = vmatprep.subr.mxu0 0.0
        %2270 = vmatpush1.msra.mxu0 0.0
        %2271 = vmatprep.subr.mxu0 0.0
        %2272 = vmatpush1.msra.mxu0 0.0
        %2273 = vmatprep.subr.mxu0 0.0
        %2274 = vmatpush1.msra.mxu0 0.0
        %2275 = vmatprep.subr.mxu0 0.0
        %2276 = vmatpush1.msra.mxu0 0.0
        %2277 = vmatprep.subr.mxu0 0.0
        %2278 = vmatpush1.msra.mxu0 0.0
        %2279 = vmatprep.subr.mxu0 0.0
        %2280 = vmatpush1.msra.mxu0 0.0
        %2281 = vmatprep.subr.mxu0 0.0
        %2282 = vmatpush1.msra.mxu0 0.0
        %2283 = vmatprep.subr.mxu0 0.0
        %2284 = vmatpush1.msra.mxu0 0.0
        %2285 = vmatprep.subr.mxu0 0.0
        %2286 = vmatpush1.msra.mxu0 0.0
        %2287 = vmatprep.subr.mxu0 0.0
        %2288 = vmatpush1.msra.mxu0 0.0
        %2289 = vmatprep.subr.mxu0 0.0
        %2290 = vmatpush1.msra.mxu0 0.0
        %2291 = vmatprep.subr.mxu0 0.0
        %2292 = vmatpush1.msra.mxu0 0.0
        %2293 = vmatprep.subr.mxu0 0.0
        %2294 = vmatpush1.msra.mxu0 0.0
        %2295 = vmatprep.subr.mxu0 0.0
        %2296 = vmatpush1.msra.mxu0 0.0
        %2297 = vmatprep.subr.mxu0 0.0
        %2298 = vmatpush1.msra.mxu0 0.0
        %2299 = vmatprep.subr.mxu0 0.0
        %2300 = vmatpush1.msra.mxu0 0.0
        %2301 = vmatprep.mubr.f32.mxu0 0.0
        %2302 = vmatmul.mubr.f32.gmra.mrb[0].mxu0 %v2235
        %v2303 = vpop.f32.mrb[0].mxu0
        %v2304 = vadd.f32 0.0, %v2303
        %v2305 = vpop.f32.mrb[0].mxu0
        %2306 = vdwg.mxu0
        %v2307 = vadd.f32 %v2066, %v2304
        %2308 = vrot.lane.b32.xlu0 %v1592, 104
        %v2309 = vpop.permute.xlu0 %2308
        %2310 = vrot.lane.b32.xlu0 %v1589, 72
        %v2311 = vpop.permute.xlu0 %2310
        %v2312 = vsel %vm540, %v2309, 0
        %v2314 = vsel %vm540, %v2311, 0
        %2316 = vmatprep.subr.mxu0 0.0
        %2317 = vmatpush1.xpose.msra.mxu0 %v2314
        %2318 = vmatprep.subr.mxu0 0.0
        %2319 = vmatpush1.xpose.msra.mxu0 0.0
        %2320 = vmatprep.subr.mxu0 0.0
        %2321 = vmatpush1.xpose.msra.mxu0 0.0
        %2322 = vmatprep.subr.mxu0 0.0
        %2323 = vmatpush1.xpose.msra.mxu0 0.0
        %2324 = vmatprep.subr.mxu0 0.0
        %2325 = vmatpush1.xpose.msra.mxu0 0.0
        %2326 = vmatprep.subr.mxu0 0.0
        %2327 = vmatpush1.xpose.msra.mxu0 0.0
        %2328 = vmatprep.subr.mxu0 0.0
        %2329 = vmatpush1.xpose.msra.mxu0 0.0
        %2330 = vmatprep.subr.mxu0 0.0
        %2331 = vmatpush1.xpose.msra.mxu0 0.0
        %2332 = vmatprep.subr.mxu0 0.0
        %2333 = vmatpush1.xpose.msra.mxu0 0.0
        %2334 = vmatprep.subr.mxu0 0.0
        %2335 = vmatpush1.xpose.msra.mxu0 0.0
        %2336 = vmatprep.subr.mxu0 0.0
        %2337 = vmatpush1.xpose.msra.mxu0 0.0
        %2338 = vmatprep.subr.mxu0 0.0
        %2339 = vmatpush1.xpose.msra.mxu0 0.0
        %2340 = vmatprep.subr.mxu0 0.0
        %2341 = vmatpush1.xpose.msra.mxu0 0.0
        %2342 = vmatprep.subr.mxu0 0.0
        %2343 = vmatpush1.xpose.msra.mxu0 0.0
        %2344 = vmatprep.subr.mxu0 0.0
        %2345 = vmatpush1.xpose.msra.mxu0 0.0
        %2346 = vmatprep.subr.mxu0 0.0
        %2347 = vmatpush1.xpose.msra.mxu0 0.0
        %2348 = vmatprep.subr.mxu0 0.0
        %2349 = vmatpush1.xpose.msra.mxu0 0.0
        %2350 = vmatprep.subr.mxu0 0.0
        %2351 = vmatpush1.xpose.msra.mxu0 0.0
        %2352 = vmatprep.subr.mxu0 0.0
        %2353 = vmatpush1.xpose.msra.mxu0 0.0
        %2354 = vmatprep.subr.mxu0 0.0
        %2355 = vmatpush1.xpose.msra.mxu0 0.0
        %2356 = vmatprep.subr.mxu0 0.0
        %2357 = vmatpush1.xpose.msra.mxu0 0.0
        %2358 = vmatprep.subr.mxu0 0.0
        %2359 = vmatpush1.xpose.msra.mxu0 0.0
        %2360 = vmatprep.subr.mxu0 0.0
        %2361 = vmatpush1.xpose.msra.mxu0 0.0
        %2362 = vmatprep.subr.mxu0 0.0
        %2363 = vmatpush1.xpose.msra.mxu0 0.0
        %2364 = vmatprep.subr.mxu0 0.0
        %2365 = vmatpush1.xpose.msra.mxu0 0.0
        %2366 = vmatprep.subr.mxu0 0.0
        %2367 = vmatpush1.xpose.msra.mxu0 0.0
        %2368 = vmatprep.subr.mxu0 0.0
        %2369 = vmatpush1.xpose.msra.mxu0 0.0
        %2370 = vmatprep.subr.mxu0 0.0
        %2371 = vmatpush1.xpose.msra.mxu0 0.0
        %2372 = vmatprep.subr.mxu0 0.0
        %2373 = vmatpush1.xpose.msra.mxu0 0.0
        %2374 = vmatprep.subr.mxu0 0.0
        %2375 = vmatpush1.xpose.msra.mxu0 0.0
        %2376 = vmatprep.subr.mxu0 0.0
        %2377 = vmatpush1.xpose.msra.mxu0 0.0
        %2378 = vmatprep.subr.mxu0 0.0
        %2379 = vmatpush1.xpose.msra.mxu0 0.0
        %2380 = vmatprep.mubr.f32.mxu0 0.0
        %2381 = vmatmul.mubr.f32.gmra.mrb[0].mxu0 %v2312
        %v2382 = vpop.f32.mrb[0].mxu0
        %v2383 = vadd.f32 %v446, %v2382
        %v2384 = vpop.f32.mrb[0].mxu0
        %2385 = vdwg.mxu0
        %v2386 = vsel %vm540, %v2383, -inf
        %2387 = vmax.xlane.f32.xlu0 %v2386
        %v2388 = vpop.xlane.xlu0 %2387
        %v2389 = vsub.f32 %v2383, %v2388
        %v2390 = vmul.f32 %v2389, 1.442695
        %v2391 = vpow.pop %v2390
        %v2392 = vsel %vm540, %v2391, 0.0
        %2393 = vadd.xlane.f32.xlu0 %v2392
        %v2394 = vpop.xlane.xlu0 %2393
        %2395 = vrot.lane.b32.xlu0 %v1589, 40
        %v2396 = vpop.permute.xlu0 %2395
        %v2399 = vsel %vm540, %v2391, 0
        %2401 = vmatprep.subr.mxu0 0.0
        %2402 = vmatpush1.msra.mxu0 %v2396
        %2403 = vmatprep.subr.mxu0 0.0
        %2404 = vmatpush1.msra.mxu0 0.0
        %2405 = vmatprep.subr.mxu0 0.0
        %2406 = vmatpush1.msra.mxu0 0.0
        %2407 = vmatprep.subr.mxu0 0.0
        %2408 = vmatpush1.msra.mxu0 0.0
        %2409 = vmatprep.subr.mxu0 0.0
        %2410 = vmatpush1.msra.mxu0 0.0
        %2411 = vmatprep.subr.mxu0 0.0
        %2412 = vmatpush1.msra.mxu0 0.0
        %2413 = vmatprep.subr.mxu0 0.0
        %2414 = vmatpush1.msra.mxu0 0.0
        %2415 = vmatprep.subr.mxu0 0.0
        %2416 = vmatpush1.msra.mxu0 0.0
        %2417 = vmatprep.subr.mxu0 0.0
        %2418 = vmatpush1.msra.mxu0 0.0
        %2419 = vmatprep.subr.mxu0 0.0
        %2420 = vmatpush1.msra.mxu0 0.0
        %2421 = vmatprep.subr.mxu0 0.0
        %2422 = vmatpush1.msra.mxu0 0.0
        %2423 = vmatprep.subr.mxu0 0.0
        %2424 = vmatpush1.msra.mxu0 0.0
        %2425 = vmatprep.subr.mxu0 0.0
        %2426 = vmatpush1.msra.mxu0 0.0
        %2427 = vmatprep.subr.mxu0 0.0
        %2428 = vmatpush1.msra.mxu0 0.0
        %2429 = vmatprep.subr.mxu0 0.0
        %2430 = vmatpush1.msra.mxu0 0.0
        %2431 = vmatprep.subr.mxu0 0.0
        %2432 = vmatpush1.msra.mxu0 0.0
        %2433 = vmatprep.subr.mxu0 0.0
        %2434 = vmatpush1.msra.mxu0 0.0
        %2435 = vmatprep.subr.mxu0 0.0
        %2436 = vmatpush1.msra.mxu0 0.0
        %2437 = vmatprep.subr.mxu0 0.0
        %2438 = vmatpush1.msra.mxu0 0.0
        %2439 = vmatprep.subr.mxu0 0.0
        %2440 = vmatpush1.msra.mxu0 0.0
        %2441 = vmatprep.subr.mxu0 0.0
        %2442 = vmatpush1.msra.mxu0 0.0
        %2443 = vmatprep.subr.mxu0 0.0
        %2444 = vmatpush1.msra.mxu0 0.0
        %2445 = vmatprep.subr.mxu0 0.0
        %2446 = vmatpush1.msra.mxu0 0.0
        %2447 = vmatprep.subr.mxu0 0.0
        %2448 = vmatpush1.msra.mxu0 0.0
        %2449 = vmatprep.subr.mxu0 0.0
        %2450 = vmatpush1.msra.mxu0 0.0
        %2451 = vmatprep.subr.mxu0 0.0
        %2452 = vmatpush1.msra.mxu0 0.0
        %2453 = vmatprep.subr.mxu0 0.0
        %2454 = vmatpush1.msra.mxu0 0.0
        %2455 = vmatprep.subr.mxu0 0.0
        %2456 = vmatpush1.msra.mxu0 0.0
        %2457 = vmatprep.subr.mxu0 0.0
        %2458 = vmatpush1.msra.mxu0 0.0
        %2459 = vmatprep.subr.mxu0 0.0
        %2460 = vmatpush1.msra.mxu0 0.0
        %2461 = vmatprep.subr.mxu0 0.0
        %2462 = vmatpush1.msra.mxu0 0.0
        %2463 = vmatprep.subr.mxu0 0.0
        %2464 = vmatpush1.msra.mxu0 0.0
        %2465 = vmatprep.mubr.f32.mxu0 0.0
        %2466 = vmatmul.mubr.f32.gmra.mrb[0].mxu0 %v2399
        %v2467 = vpop.f32.mrb[0].mxu0
        %v2468 = vadd.f32 0.0, %v2467
        %v2469 = vpop.f32.mrb[0].mxu0
        %2470 = vdwg.mxu0
        %v2471 = vrcp.pop %v2394
        %v2472 = vmul.f32 %v2468, %v2471
        %v2474 = vsel %vm540, %v2472, 0
        %2476 = vmatprep.subr.mxu0 0.0
        %2477 = vmatpush1.msra.mxu0 %v1512
        %2478 = vmatprep.subr.mxu0 0.0
        %2479 = vmatpush1.msra.mxu0 0.0
        %2480 = vmatprep.subr.mxu0 0.0
        %2481 = vmatpush1.msra.mxu0 0.0
        %2482 = vmatprep.subr.mxu0 0.0
        %2483 = vmatpush1.msra.mxu0 0.0
        %2484 = vmatprep.subr.mxu0 0.0
        %2485 = vmatpush1.msra.mxu0 0.0
        %2486 = vmatprep.subr.mxu0 0.0
        %2487 = vmatpush1.msra.mxu0 0.0
        %2488 = vmatprep.subr.mxu0 0.0
        %2489 = vmatpush1.msra.mxu0 0.0
        %2490 = vmatprep.subr.mxu0 0.0
        %2491 = vmatpush1.msra.mxu0 0.0
        %2492 = vmatprep.subr.mxu0 0.0
        %2493 = vmatpush1.msra.mxu0 0.0
        %2494 = vmatprep.subr.mxu0 0.0
        %2495 = vmatpush1.msra.mxu0 0.0
        %2496 = vmatprep.subr.mxu0 0.0
        %2497 = vmatpush1.msra.mxu0 0.0
        %2498 = vmatprep.subr.mxu0 0.0
        %2499 = vmatpush1.msra.mxu0 0.0
        %2500 = vmatprep.subr.mxu0 0.0
        %2501 = vmatpush1.msra.mxu0 0.0
        %2502 = vmatprep.subr.mxu0 0.0
        %2503 = vmatpush1.msra.mxu0 0.0
        %2504 = vmatprep.subr.mxu0 0.0
        %2505 = vmatpush1.msra.mxu0 0.0
        %2506 = vmatprep.subr.mxu0 0.0
        %2507 = vmatpush1.msra.mxu0 0.0
        %2508 = vmatprep.subr.mxu0 0.0
        %2509 = vmatpush1.msra.mxu0 0.0
        %2510 = vmatprep.subr.mxu0 0.0
        %2511 = vmatpush1.msra.mxu0 0.0
        %2512 = vmatprep.subr.mxu0 0.0
        %2513 = vmatpush1.msra.mxu0 0.0
        %2514 = vmatprep.subr.mxu0 0.0
        %2515 = vmatpush1.msra.mxu0 0.0
        %2516 = vmatprep.subr.mxu0 0.0
        %2517 = vmatpush1.msra.mxu0 0.0
        %2518 = vmatprep.subr.mxu0 0.0
        %2519 = vmatpush1.msra.mxu0 0.0
        %2520 = vmatprep.subr.mxu0 0.0
        %2521 = vmatpush1.msra.mxu0 0.0
        %2522 = vmatprep.subr.mxu0 0.0
        %2523 = vmatpush1.msra.mxu0 0.0
        %2524 = vmatprep.subr.mxu0 0.0
        %2525 = vmatpush1.msra.mxu0 0.0
        %2526 = vmatprep.subr.mxu0 0.0
        %2527 = vmatpush1.msra.mxu0 0.0
        %2528 = vmatprep.subr.mxu0 0.0
        %2529 = vmatpush1.msra.mxu0 0.0
        %2530 = vmatprep.subr.mxu0 0.0
        %2531 = vmatpush1.msra.mxu0 0.0
        %2532 = vmatprep.subr.mxu0 0.0
        %2533 = vmatpush1.msra.mxu0 0.0
        %2534 = vmatprep.subr.mxu0 0.0
        %2535 = vmatpush1.msra.mxu0 0.0
        %2536 = vmatprep.subr.mxu0 0.0
        %2537 = vmatpush1.msra.mxu0 0.0
        %2538 = vmatprep.subr.mxu0 0.0
        %2539 = vmatpush1.msra.mxu0 0.0
        %2540 = vmatprep.mubr.f32.mxu0 0.0
        %2541 = vmatmul.mubr.f32.gmra.mrb[0].mxu0 %v2474
        %v2542 = vpop.f32.mrb[0].mxu0
        %v2543 = vadd.f32 0.0, %v2542
        %v2544 = vpop.f32.mrb[0].mxu0
        %2545 = vdwg.mxu0
        %v2546 = vadd.f32 %v2307, %v2543
        %v2547 = vadd.f32 %v1500, %v2546
        %s2548 = scalar_lea.vmem %s6, 1
        %v2549 = vld [vmem:[%s2548] sm:$0x1]
        %v2551 = vlaneseq
        %v2552 = vshrl.u32 %v2551, 7
        %v2553 = vsub.s32 0, %v2552
        %v2554 = vrot.slane %v2549, %v2553
        %v2556 = vadd.f32 %v2547, %v2554
        %v2557 = vld [vmem:[%s7] sm:$0xff]
        %v2558 = vld [vmem:[%s7 + $0x8] sm:$0xff]
        %v2559 = vld [vmem:[%s7 + $0x10] sm:$0xff]
        %v2560 = vld [vmem:[%s7 + $0x18] sm:$0xff]
        %v2562 = vsel %vm462, %v2556, 0
        %2564 = vmatprep.subr.mxu0 0.0
        %2565 = vmatpush1.msra.mxu0 %v2557
        %2566 = vmatprep.subr.mxu0 0.0
        %2567 = vmatpush1.msra.mxu0 %v2558
        %2568 = vmatprep.subr.mxu0 0.0
        %2569 = vmatpush1.msra.mxu0 %v2559
        %2570 = vmatprep.subr.mxu0 0.0
        %2571 = vmatpush1.msra.mxu0 %v2560
        %2572 = vmatprep.subr.mxu0 0.0
        %2573 = vmatpush1.msra.mxu0 0.0
        %2574 = vmatprep.subr.mxu0 0.0
        %2575 = vmatpush1.msra.mxu0 0.0
        %2576 = vmatprep.subr.mxu0 0.0
        %2577 = vmatpush1.msra.mxu0 0.0
        %2578 = vmatprep.subr.mxu0 0.0
        %2579 = vmatpush1.msra.mxu0 0.0
        %2580 = vmatprep.subr.mxu0 0.0
        %2581 = vmatpush1.msra.mxu0 0.0
        %2582 = vmatprep.subr.mxu0 0.0
        %2583 = vmatpush1.msra.mxu0 0.0
        %2584 = vmatprep.subr.mxu0 0.0
        %2585 = vmatpush1.msra.mxu0 0.0
        %2586 = vmatprep.subr.mxu0 0.0
        %2587 = vmatpush1.msra.mxu0 0.0
        %2588 = vmatprep.subr.mxu0 0.0
        %2589 = vmatpush1.msra.mxu0 0.0
        %2590 = vmatprep.subr.mxu0 0.0
        %2591 = vmatpush1.msra.mxu0 0.0
        %2592 = vmatprep.subr.mxu0 0.0
        %2593 = vmatpush1.msra.mxu0 0.0
        %2594 = vmatprep.subr.mxu0 0.0
        %2595 = vmatpush1.msra.mxu0 0.0
        %2596 = vmatprep.subr.mxu0 0.0
        %2597 = vmatpush1.msra.mxu0 0.0
        %2598 = vmatprep.subr.mxu0 0.0
        %2599 = vmatpush1.msra.mxu0 0.0
        %2600 = vmatprep.subr.mxu0 0.0
        %2601 = vmatpush1.msra.mxu0 0.0
        %2602 = vmatprep.subr.mxu0 0.0
        %2603 = vmatpush1.msra.mxu0 0.0
        %2604 = vmatprep.subr.mxu0 0.0
        %2605 = vmatpush1.msra.mxu0 0.0
        %2606 = vmatprep.subr.mxu0 0.0
        %2607 = vmatpush1.msra.mxu0 0.0
        %2608 = vmatprep.subr.mxu0 0.0
        %2609 = vmatpush1.msra.mxu0 0.0
        %2610 = vmatprep.subr.mxu0 0.0
        %2611 = vmatpush1.msra.mxu0 0.0
        %2612 = vmatprep.subr.mxu0 0.0
        %2613 = vmatpush1.msra.mxu0 0.0
        %2614 = vmatprep.subr.mxu0 0.0
        %2615 = vmatpush1.msra.mxu0 0.0
        %2616 = vmatprep.subr.mxu0 0.0
        %2617 = vmatpush1.msra.mxu0 0.0
        %2618 = vmatprep.subr.mxu0 0.0
        %2619 = vmatpush1.msra.mxu0 0.0
        %2620 = vmatprep.subr.mxu0 0.0
        %2621 = vmatpush1.msra.mxu0 0.0
        %2622 = vmatprep.subr.mxu0 0.0
        %2623 = vmatpush1.msra.mxu0 0.0
        %2624 = vmatprep.subr.mxu0 0.0
        %2625 = vmatpush1.msra.mxu0 0.0
        %2626 = vmatprep.subr.mxu0 0.0
        %2627 = vmatpush1.msra.mxu0 0.0
        %2628 = vmatprep.mubr.f32.mxu0 0.0
        %2629 = vmatmul.mubr.f32.gmra.mrb[0].mxu0 %v2562
        %v2630 = vpop.f32.mrb[0].mxu0
        %v2631 = vadd.f32 0.0, %v2630
        %v2632 = vpop.f32.mrb[0].mxu0
        %2633 = vdwg.mxu0
        %2634 = vst.msk [vmem:[%s353] sm:$0xff] %vm369, %v2631
        %s2635 = sand.u32 %s206, 1
        %s2636 = scalar_lea.sflag [#allocation4], %s2635
        %s2637 = sand.u32 %s206, 1
        %s2638 = smul.addr %s2637, 8
        %s2639 = scalar_lea.vmem [#allocation10], %s2638
        // Predicated region
        $region69: #{tpu_custom_call.1} parent=51 // pred_check
          %p2640 = pneg %p216
        $region70: #{tpu_custom_call.1} parent=51 // pred_check_branch
          %2642 = sbr.rel (%p2640) target = $region72
        $region71: #{tpu_custom_call.1} parent=51 // pred_region
          %s2644 = ssub.s32 128, 128
          %2645 = vsyncadd %s2636, %s2644
          %s2646 = smul.addr %s25, 128
          %s2647 = scalar_lea.hbm %s8, %s2646
          %s2649 = sshll.u32 %s2639, 4
          %s2650 = int_to_ptr.vmem [resolvable:$true] %s2649
          %2652 = dma.vmem_to_hbm [thread:$0]  %s2650, 128, %s2647, %s2636
        $region72: #{tpu_custom_call.1} parent=51 // pred_fallthru
          _
      $region52: #{tpu_custom_call.1} parent=5 // pred_fallthru
        _
      %p2653 = scmp.le.s32.totalorder 2, %s20
      // Predicated region
      $region73: #{tpu_custom_call.1} parent=5 // pred_check
        %p2654 = pneg %p2653
      $region74: #{tpu_custom_call.1} parent=5 // pred_check_branch
        %2656 = sbr.rel (%p2654) target = $region76
      $region75: #{tpu_custom_call.1} parent=5 // pred_region
        %s2657 = ssub.s32 %s20, 2
        // Predicated region
        $region77: #{tpu_custom_call.1} parent=75 // pred_check
          %p2658 = pneg %p222
        $region78: #{tpu_custom_call.1} parent=75 // pred_check_branch
          %2660 = sbr.rel (%p2658) target = $region80
        $region79: #{tpu_custom_call.1} parent=75 // pred_region
          %s2661 = sand.u32 %s207, 1
          %s2662 = scalar_lea.sflag [#allocation4], %s2661
          %s2663 = sand.u32 %s207, 1
          %s2664 = smul.addr %s2663, 8
          %s2665 = scalar_lea.vmem [#allocation10], %s2664
          %2666 = dma.done %s2662, 128
        $region80: #{tpu_custom_call.1} parent=75 // pred_fallthru
          _
      $region76: #{tpu_custom_call.1} parent=5 // pred_fallthru
        _
    $region6: #{tpu_custom_call.1} parent=1 // loop_footer
      %s24 = sadd.s32 1, %s20
    $region7: #{tpu_custom_call.1} parent=1 // loop_footer_branch
      %19 = sbr.rel target = $region3
    $region8: #{tpu_custom_call.1} parent=1 // loop_exit
      _
    %2667 = vsyncpa [#allocation3], 1
    %s2668 = scalar_lea.sflag [#allocation3], 1
    %2669 = vsyncpa %s2668, 1
    %2670 = vsyncpa [#allocation6], 1
    %2671 = vsyncpa [#allocation9], 1
    %2672 = vsyncpa [#allocation4], 1
    %s2673 = scalar_lea.sflag [#allocation4], 1
    %2674 = vsyncpa %s2673, 1

</llo_original>
